<compile_context>
chip_gen: v6e
topology: v6e:2x2x1
jax: 0.10.0
libtpu: 0.0.40
codegen_flags: <defaults>
</compile_context>

<pallas_src>
import numpy as np
import jax
import jax.numpy as jnp
from jax import lax
from jax.experimental import pallas as pl
from jax.experimental.pallas import tpu as pltpu

NEG_SLOPE = 0.01  # nn.LeakyReLU() default negative_slope


# --------------------------------------------------------------------------
# Host-side (trace-time) constant builders
# --------------------------------------------------------------------------
def _edge_mask_np(h, w):
    """(2, h*w) f32 masks: row 0 kills wrap-around for ox=-1, row 1 for ox=+1."""
    p = h * w
    x = np.arange(p) % w
    m = np.ones((2, p), np.float32)
    m[0, x == 0] = 0.0
    m[1, x == w - 1] = 0.0
    return m


def _pool_sel_np(h, w):
    """(h*w, (h//2)*(w//2)) 0/1 matrix: output q gathers flat index 2*qy*w+2*qx."""
    ho, wo = h // 2, w // 2
    p, q = h * w, ho * wo
    sel = np.zeros((p, q), np.float32)
    qi = np.arange(q)
    src = 2 * (qi // wo) * w + 2 * (qi % wo)
    sel[src, qi] = 1.0
    return sel


# --------------------------------------------------------------------------
# Fused encoder kernel (one batch element per grid step)
# --------------------------------------------------------------------------
def _make_encoder_kernel(H, W):
    def conv3x3_lrelu(pad_ref, col_ref, x, w, b, mask, row_w):
        """3x3 'same' conv + bias + LeakyReLU on a flat (Cin, H*W) activation."""
        cin, p = x.shape
        halo = row_w + 1

        # flat zero-halo image: only the halos need zeroing, interior gets x.
        pad_ref[0:cin, 0:halo] = jnp.zeros((cin, halo), jnp.float32)
        pad_ref[0:cin, halo + p:halo + p + halo] = jnp.zeros((cin, halo), jnp.float32)
        pad_ref[0:cin, halo:halo + p] = x

        not_left = mask[0:1, :]    # 0 where x == 0       (for ox = -1)
        not_right = mask[1:2, :]   # 0 where x == W-1     (for ox = +1)

        # im2col: 9 shifted windows -> (9*Cin, P) in VMEM scratch.
        t = 0
        for oy in (-1, 0, 1):
            for ox in (-1, 0, 1):
                off = halo + oy * row_w + ox
                patch = pad_ref[0:cin, off:off + p]
                if ox == -1:
                    patch = patch * not_left
                elif ox == 1:
                    patch = patch * not_right
                col_ref[t * cin:(t + 1) * cin, 0:p] = patch
                t += 1

        col = col_ref[0:9 * cin, 0:p]                          # (9*Cin, P)
        acc = jnp.dot(w, col, preferred_element_type=jnp.float32) + b
        return jnp.maximum(acc, NEG_SLOPE * acc)               # LeakyReLU

    def maxpool2x2(pad_ref, x, sel, row_w):
        """2x2/stride-2 maxpool on a flat (C, H*W) activation -> (C, Ho*Wo)."""
        c, p = x.shape
        pad_ref[0:c, 0:p] = x
        pad_ref[0:c, p:p + row_w + 2] = jnp.zeros((c, row_w + 2), jnp.float32)
        right = pad_ref[0:c, 1:1 + p]
        down = pad_ref[0:c, row_w:row_w + p]
        diag = pad_ref[0:c, row_w + 1:row_w + 1 + p]
        rm = jnp.maximum(jnp.maximum(x, right), jnp.maximum(down, diag))
        # exact gather of the (even-row, even-col) positions via MXU.
        return jnp.dot(rm, sel, preferred_element_type=jnp.float32)

    def kernel(x_ref, w1, b1, w2, b2, w3, b3, w4, b4, w5, b5, w6, b6,
               m1, m2, m3, s1, s2,
               o1_ref, o2_ref, o3_ref, pad_ref, col_ref):
        a = x_ref[0].astype(jnp.float32)                       # (Cin, H*W)

        a = conv3x3_lrelu(pad_ref, col_ref, a, w1[...], b1[...], m1[...], W)
        a = conv3x3_lrelu(pad_ref, col_ref, a, w2[...], b2[...], m1[...], W)
        o1_ref[0] = a.astype(o1_ref.dtype)

        a = maxpool2x2(pad_ref, a, s1[...], W)
        a = conv3x3_lrelu(pad_ref, col_ref, a, w3[...], b3[...], m2[...], W // 2)
        a = conv3x3_lrelu(pad_ref, col_ref, a, w4[...], b4[...], m2[...], W // 2)
        o2_ref[0] = a.astype(o2_ref.dtype)

        a = maxpool2x2(pad_ref, a, s2[...], W // 2)
        a = conv3x3_lrelu(pad_ref, col_ref, a, w5[...], b5[...], m3[...], W // 4)
        a = conv3x3_lrelu(pad_ref, col_ref, a, w6[...], b6[...], m3[...], W // 4)
        o3_ref[0] = a.astype(o3_ref.dtype)

    return kernel


# --------------------------------------------------------------------------
# Host-side wrapper
# --------------------------------------------------------------------------
def _prep_conv_params(w_hwio, b):
    # HWIO (3,3,Cin,Cout) -> (Cout, 9*Cin) with tap-major / cin-minor ordering.
    kh, kw, cin, cout = w_hwio.shape
    w_mat = jnp.transpose(w_hwio, (3, 0, 1, 2)).reshape(cout, kh * kw * cin)
    return w_mat.astype(jnp.float32), b.reshape(cout, 1).astype(jnp.float32)


@jax.jit
def encoder_ms_forward(params, x_nchw):
    N, cin, H, W = x_nchw.shape
    assert H % 4 == 0 and W % 4 == 0, "two 2x2 maxpools need H, W divisible by 4"

    w1, b1 = _prep_conv_params(*params["conv_4x_1"])
    w2, b2 = _prep_conv_params(*params["conv_4x_2"])
    w3, b3 = _prep_conv_params(*params["conv_2x_1"])
    w4, b4 = _prep_conv_params(*params["conv_2x_2"])
    w5, b5 = _prep_conv_params(*params["conv_1x_1"])
    w6, b6 = _prep_conv_params(*params["conv_1x_2"])

    mid = w1.shape[0]
    c1, c2, c3 = mid, 2 * mid, 4 * mid
    P1 = H * W
    P2 = (H // 2) * (W // 2)
    P3 = (H // 4) * (W // 4)

    # Trace-time constants (baked into the program, no in-kernel index math).
    m1 = jnp.asarray(_edge_mask_np(H, W))
    m2 = jnp.asarray(_edge_mask_np(H // 2, W // 2))
    m3 = jnp.asarray(_edge_mask_np(H // 4, W // 4))
    s1 = jnp.asarray(_pool_sel_np(H, W))
    s2 = jnp.asarray(_pool_sel_np(H // 2, W // 2))

    # NCHW -> (N, C, H*W) is a free reshape (no transpose).
    x_flat = x_nchw.reshape(N, cin, P1).astype(jnp.float32)

    const2 = lambda shape: pl.BlockSpec(shape, lambda n: (0, 0))
    per_n = lambda shape: pl.BlockSpec(shape, lambda n: (n, 0, 0))

    max_cin = max(cin, c3)
    pad_cols = P1 + 2 * W + 2                 # flat image + zero halo

    out1, out2, out3 = pl.pallas_call(
        _make_encoder_kernel(H, W),
        out_shape=(
            jax.ShapeDtypeStruct((N, c1, P1), jnp.float32),
            jax.ShapeDtypeStruct((N, c2, P2), jnp.float32),
            jax.ShapeDtypeStruct((N, c3, P3), jnp.float32),
        ),
        grid=(N,),
        in_specs=[
            per_n((1, cin, P1)),
            const2(w1.shape), const2(b1.shape),
            const2(w2.shape), const2(b2.shape),
            const2(w3.shape), const2(b3.shape),
            const2(w4.shape), const2(b4.shape),
            const2(w5.shape), const2(b5.shape),
            const2(w6.shape), const2(b6.shape),
            const2(m1.shape), const2(m2.shape), const2(m3.shape),
            const2(s1.shape), const2(s2.shape),
        ],
        out_specs=(
            per_n((1, c1, P1)),
            per_n((1, c2, P2)),
            per_n((1, c3, P3)),
        ),
        scratch_shapes=[
            pltpu.VMEM((max_cin, pad_cols), jnp.float32),      # zero-halo image
            pltpu.VMEM((9 * max_cin, P1), jnp.float32),        # im2col matrix
        ],
        compiler_params=pltpu.CompilerParams(
            dimension_semantics=("parallel",)),
    )(x_flat, w1, b1, w2, b2, w3, b3, w4, b4, w5, b5, w6, b6,
      m1, m2, m3, s1, s2)

    # (N, C, H*W) -> NCHW: free reshapes.
    return (out1.reshape(N, c1, H, W),
            out2.reshape(N, c2, H // 2, W // 2),
            out3.reshape(N, c3, H // 4, W // 4))


# --------------------------------------------------------------------------
# Parameters (deterministic synthetic init, HWIO layout like lax.conv)
# --------------------------------------------------------------------------
def init_params(key, in_channels, mid_channels):
    def conv_init(k, cin, cout, ksize=3):
        kw, kb = jax.random.split(k)
        fan_in = cin * ksize * ksize
        w = jax.random.normal(kw, (ksize, ksize, cin, cout), jnp.float32) / jnp.sqrt(fan_in)
        b = jax.random.normal(kb, (cout,), jnp.float32) * 0.01
        return w, b

    keys = jax.random.split(key, 6)
    return {
        "conv_4x_1": conv_init(keys[0], in_channels, mid_channels),
        "conv_4x_2": conv_init(keys[1], mid_channels, mid_channels),
        "conv_2x_1": conv_init(keys[2], mid_channels, mid_channels * 2),
        "conv_2x_2": conv_init(keys[3], mid_channels * 2, mid_channels * 2),
        "conv_1x_1": conv_init(keys[4], mid_channels * 2, mid_channels * 4),
        "conv_1x_2": conv_init(keys[5], mid_channels * 4, mid_channels * 4),
        # down_4x / down_2x are declared in the PyTorch module but unused in forward().
    }


# --------------------------------------------------------------------------
# Pure-JAX reference (XLA conv) for validation
# --------------------------------------------------------------------------
def _ref_conv(x, w, b):
    y = lax.conv_general_dilated(x, w, (1, 1), "SAME",
                                 dimension_numbers=("NHWC", "HWIO", "NHWC"))
    y = y + b[None, None, None, :]
    return jnp.where(y >= 0, y, NEG_SLOPE * y)


def _ref_pool(x):
    N, H, W, C = x.shape
    return jnp.max(x.reshape(N, H // 2, 2, W // 2, 2, C), axis=(2, 4))


if __name__ == "__main__":
    key = jax.random.PRNGKey(0)
    kx, kp = jax.random.split(key)
    in_channels, mid_channels = 4, 8
    x = jax.random.normal(kx, (2, in_channels, 16, 16), jnp.float32)  # NCHW, like PyTorch
    params = init_params(kp, in_channels, mid_channels)

    out1, out2, out3 = jax.block_until_ready(encoder_ms_forward(params, x))
    assert out1.shape == (2, mid_channels, 16, 16)
    assert out2.shape == (2, mid_channels * 2, 8, 8)
    assert out3.shape == (2, mid_channels * 4, 4, 4)

    # Reference check against a plain-JAX implementation of the same forward.
    xh = jnp.transpose(x, (0, 2, 3, 1))
    r1 = _ref_conv(_ref_conv(xh, *params["conv_4x_1"]), *params["conv_4x_2"])
    r2 = _ref_conv(_ref_conv(_ref_pool(r1), *params["conv_2x_1"]), *params["conv_2x_2"])
    r3 = _ref_conv(_ref_conv(_ref_pool(r2), *params["conv_1x_1"]), *params["conv_1x_2"])
    tN = lambda t: jnp.transpose(t, (0, 3, 1, 2))
    for got, ref in ((out1, tN(r1)), (out2, tN(r2)), (out3, tN(r3))):
        err = float(jnp.max(jnp.abs(got - ref)))
        assert jnp.allclose(got, ref, atol=1e-2, rtol=1e-2), f"max abs err {err}"

    print("KERNEL_OK")
</pallas_src>

<mosaic_0001>
module attributes {stable_mosaic.version = 11 : i64} {
  func.func @kernel(%arg0: i32, %arg1: memref<1x4x256xf32, #tpu.memory_space<vmem>>, %arg2: memref<8x36xf32, #tpu.memory_space<vmem>>, %arg3: memref<8x1xf32, #tpu.memory_space<vmem>>, %arg4: memref<8x72xf32, #tpu.memory_space<vmem>>, %arg5: memref<8x1xf32, #tpu.memory_space<vmem>>, %arg6: memref<16x72xf32, #tpu.memory_space<vmem>>, %arg7: memref<16x1xf32, #tpu.memory_space<vmem>>, %arg8: memref<16x144xf32, #tpu.memory_space<vmem>>, %arg9: memref<16x1xf32, #tpu.memory_space<vmem>>, %arg10: memref<32x144xf32, #tpu.memory_space<vmem>>, %arg11: memref<32x1xf32, #tpu.memory_space<vmem>>, %arg12: memref<32x288xf32, #tpu.memory_space<vmem>>, %arg13: memref<32x1xf32, #tpu.memory_space<vmem>>, %arg14: memref<2x256xf32, #tpu.memory_space<vmem>>, %arg15: memref<2x64xf32, #tpu.memory_space<vmem>>, %arg16: memref<2x16xf32, #tpu.memory_space<vmem>>, %arg17: memref<256x64xf32, #tpu.memory_space<vmem>>, %arg18: memref<64x16xf32, #tpu.memory_space<vmem>>, %arg19: memref<1x8x256xf32, #tpu.memory_space<vmem>>, %arg20: memref<1x16x64xf32, #tpu.memory_space<vmem>>, %arg21: memref<1x32x16xf32, #tpu.memory_space<vmem>>, %arg22: memref<32x290xf32, #tpu.memory_space<vmem>>, %arg23: memref<288x256xf32, #tpu.memory_space<vmem>>) attributes {dimension_semantics = [#tpu.dimension_semantics<parallel>], iteration_bounds = array<i64: 2>, scalar_prefetch = 0 : i64, scratch_operands = 2 : i64, tpu.core_type = #tpu.core_type<tc>, window_params = [{transform_indices = @transform_0, window_bounds = array<i64: 1, 4, 256>}, {pipeline_mode = #tpu.pipeline_mode<synchronous>, transform_indices = @transform_1, window_bounds = array<i64: 8, 36>}, {pipeline_mode = #tpu.pipeline_mode<synchronous>, transform_indices = @transform_2, window_bounds = array<i64: 8, 1>}, {pipeline_mode = #tpu.pipeline_mode<synchronous>, transform_indices = @transform_3, window_bounds = array<i64: 8, 72>}, {pipeline_mode = #tpu.pipeline_mode<synchronous>, transform_indices = @transform_4, window_bounds = array<i64: 8, 1>}, {pipeline_mode = #tpu.pipeline_mode<synchronous>, transform_indices = @transform_5, window_bounds = array<i64: 16, 72>}, {pipeline_mode = #tpu.pipeline_mode<synchronous>, transform_indices = @transform_6, window_bounds = array<i64: 16, 1>}, {pipeline_mode = #tpu.pipeline_mode<synchronous>, transform_indices = @transform_7, window_bounds = array<i64: 16, 144>}, {pipeline_mode = #tpu.pipeline_mode<synchronous>, transform_indices = @transform_8, window_bounds = array<i64: 16, 1>}, {pipeline_mode = #tpu.pipeline_mode<synchronous>, transform_indices = @transform_9, window_bounds = array<i64: 32, 144>}, {pipeline_mode = #tpu.pipeline_mode<synchronous>, transform_indices = @transform_10, window_bounds = array<i64: 32, 1>}, {pipeline_mode = #tpu.pipeline_mode<synchronous>, transform_indices = @transform_11, window_bounds = array<i64: 32, 288>}, {pipeline_mode = #tpu.pipeline_mode<synchronous>, transform_indices = @transform_12, window_bounds = array<i64: 32, 1>}, {pipeline_mode = #tpu.pipeline_mode<synchronous>, transform_indices = @transform_13, window_bounds = array<i64: 2, 256>}, {pipeline_mode = #tpu.pipeline_mode<synchronous>, transform_indices = @transform_14, window_bounds = array<i64: 2, 64>}, {pipeline_mode = #tpu.pipeline_mode<synchronous>, transform_indices = @transform_15, window_bounds = array<i64: 2, 16>}, {pipeline_mode = #tpu.pipeline_mode<synchronous>, transform_indices = @transform_16, window_bounds = array<i64: 256, 64>}, {pipeline_mode = #tpu.pipeline_mode<synchronous>, transform_indices = @transform_17, window_bounds = array<i64: 64, 16>}, {transform_indices = @transform_18, window_bounds = array<i64: 1, 8, 256>}, {transform_indices = @transform_19, window_bounds = array<i64: 1, 16, 64>}, {transform_indices = @transform_20, window_bounds = array<i64: 1, 32, 16>}]} {
    %c0 = arith.constant 0 : index
    %c0_0 = arith.constant 0 : index
    %c0_1 = arith.constant 0 : index
    %0 = vector.load %arg1[%c0, %c0_0, %c0_1] : memref<1x4x256xf32, #tpu.memory_space<vmem>>, vector<1x4x256xf32>
    %1 = vector.shape_cast %0 : vector<1x4x256xf32> to vector<4x256xf32>
    %c0_2 = arith.constant 0 : index
    %c0_3 = arith.constant 0 : index
    %2 = vector.load %arg2[%c0_2, %c0_3] : memref<8x36xf32, #tpu.memory_space<vmem>>, vector<8x36xf32>
    %c0_4 = arith.constant 0 : index
    %c0_5 = arith.constant 0 : index
    %3 = vector.load %arg3[%c0_4, %c0_5] : memref<8x1xf32, #tpu.memory_space<vmem>>, vector<8x1xf32>
    %c0_6 = arith.constant 0 : index
    %c0_7 = arith.constant 0 : index
    %4 = vector.load %arg14[%c0_6, %c0_7] : memref<2x256xf32, #tpu.memory_space<vmem>>, vector<2x256xf32>
    %cst = arith.constant 0.000000e+00 : f32
    %5 = vector.broadcast %cst : f32 to vector<4x17xf32>
    %c0_8 = arith.constant 0 : index
    %c0_9 = arith.constant 0 : index
    %6 = vector.load %arg22[%c0_8, %c0_9] : memref<32x290xf32, #tpu.memory_space<vmem>>, vector<4x17xf32>
    tpu.vector_store %arg22[%c0_8, %c0_9], %5 {strides = array<i32>} : memref<32x290xf32, #tpu.memory_space<vmem>>, vector<4x17xf32>,
    %cst_10 = arith.constant 0.000000e+00 : f32
    %7 = vector.broadcast %cst_10 : f32 to vector<4x17xf32>
    %c0_11 = arith.constant 0 : index
    %c273 = arith.constant 273 : index
    %8 = vector.load %arg22[%c0_11, %c273] : memref<32x290xf32, #tpu.memory_space<vmem>>, vector<4x17xf32>
    tpu.vector_store %arg22[%c0_11, %c273], %7 {strides = array<i32>} : memref<32x290xf32, #tpu.memory_space<vmem>>, vector<4x17xf32>,
    %c0_12 = arith.constant 0 : index
    %c17 = arith.constant 17 : index
    %9 = vector.load %arg22[%c0_12, %c17] : memref<32x290xf32, #tpu.memory_space<vmem>>, vector<4x256xf32>
    tpu.vector_store %arg22[%c0_12, %c17], %1 {strides = array<i32>} : memref<32x290xf32, #tpu.memory_space<vmem>>, vector<4x256xf32>,
    %10 = vector.extract_strided_slice %4 {offsets = [0, 0], sizes = [1, 256], strides = [1, 1]} : vector<2x256xf32> to vector<1x256xf32>
    %11 = vector.extract_strided_slice %4 {offsets = [1, 0], sizes = [1, 256], strides = [1, 1]} : vector<2x256xf32> to vector<1x256xf32>
    %c0_13 = arith.constant 0 : index
    %c0_14 = arith.constant 0 : index
    %12 = vector.load %arg22[%c0_13, %c0_14] : memref<32x290xf32, #tpu.memory_space<vmem>>, vector<4x256xf32>
    %13 = vector.broadcast %10 : vector<1x256xf32> to vector<4x256xf32>
    %14 = arith.mulf %12, %13 : vector<4x256xf32>
    %c0_15 = arith.constant 0 : index
    %c0_16 = arith.constant 0 : index
    %15 = vector.load %arg23[%c0_15, %c0_16] : memref<288x256xf32, #tpu.memory_space<vmem>>, vector<4x256xf32>
    tpu.vector_store %arg23[%c0_15, %c0_16], %14 {strides = array<i32>} : memref<288x256xf32, #tpu.memory_space<vmem>>, vector<4x256xf32>,
    %c0_17 = arith.constant 0 : index
    %c1 = arith.constant 1 : index
    %16 = vector.load %arg22[%c0_17, %c1] : memref<32x290xf32, #tpu.memory_space<vmem>>, vector<4x256xf32>
    %c4 = arith.constant 4 : index
    %c0_18 = arith.constant 0 : index
    %17 = vector.load %arg23[%c4, %c0_18] : memref<288x256xf32, #tpu.memory_space<vmem>>, vector<4x256xf32>
    tpu.vector_store %arg23[%c4, %c0_18], %16 {strides = array<i32>} : memref<288x256xf32, #tpu.memory_space<vmem>>, vector<4x256xf32>,
    %c0_19 = arith.constant 0 : index
    %c2 = arith.constant 2 : index
    %18 = vector.load %arg22[%c0_19, %c2] : memref<32x290xf32, #tpu.memory_space<vmem>>, vector<4x256xf32>
    %19 = vector.broadcast %11 : vector<1x256xf32> to vector<4x256xf32>
    %20 = arith.mulf %18, %19 : vector<4x256xf32>
    %c8 = arith.constant 8 : index
    %c0_20 = arith.constant 0 : index
    %21 = vector.load %arg23[%c8, %c0_20] : memref<288x256xf32, #tpu.memory_space<vmem>>, vector<4x256xf32>
    tpu.vector_store %arg23[%c8, %c0_20], %20 {strides = array<i32>} : memref<288x256xf32, #tpu.memory_space<vmem>>, vector<4x256xf32>,
    %c0_21 = arith.constant 0 : index
    %c16 = arith.constant 16 : index
    %22 = vector.load %arg22[%c0_21, %c16] : memref<32x290xf32, #tpu.memory_space<vmem>>, vector<4x256xf32>
    %23 = vector.broadcast %10 : vector<1x256xf32> to vector<4x256xf32>
    %24 = arith.mulf %22, %23 : vector<4x256xf32>
    %c12 = arith.constant 12 : index
    %c0_22 = arith.constant 0 : index
    %25 = vector.load %arg23[%c12, %c0_22] : memref<288x256xf32, #tpu.memory_space<vmem>>, vector<4x256xf32>
    tpu.vector_store %arg23[%c12, %c0_22], %24 {strides = array<i32>} : memref<288x256xf32, #tpu.memory_space<vmem>>, vector<4x256xf32>,
    %c0_23 = arith.constant 0 : index
    %c17_24 = arith.constant 17 : index
    %26 = vector.load %arg22[%c0_23, %c17_24] : memref<32x290xf32, #tpu.memory_space<vmem>>, vector<4x256xf32>
    %c16_25 = arith.constant 16 : index
    %c0_26 = arith.constant 0 : index
    %27 = vector.load %arg23[%c16_25, %c0_26] : memref<288x256xf32, #tpu.memory_space<vmem>>, vector<4x256xf32>
    tpu.vector_store %arg23[%c16_25, %c0_26], %26 {strides = array<i32>} : memref<288x256xf32, #tpu.memory_space<vmem>>, vector<4x256xf32>,
    %c0_27 = arith.constant 0 : index
    %c18 = arith.constant 18 : index
    %28 = vector.load %arg22[%c0_27, %c18] : memref<32x290xf32, #tpu.memory_space<vmem>>, vector<4x256xf32>
    %29 = vector.broadcast %11 : vector<1x256xf32> to vector<4x256xf32>
    %30 = arith.mulf %28, %29 : vector<4x256xf32>
    %c20 = arith.constant 20 : index
    %c0_28 = arith.constant 0 : index
    %31 = vector.load %arg23[%c20, %c0_28] : memref<288x256xf32, #tpu.memory_space<vmem>>, vector<4x256xf32>
    tpu.vector_store %arg23[%c20, %c0_28], %30 {strides = array<i32>} : memref<288x256xf32, #tpu.memory_space<vmem>>, vector<4x256xf32>,
    %c0_29 = arith.constant 0 : index
    %c32 = arith.constant 32 : index
    %32 = vector.load %arg22[%c0_29, %c32] : memref<32x290xf32, #tpu.memory_space<vmem>>, vector<4x256xf32>
    %33 = vector.broadcast %10 : vector<1x256xf32> to vector<4x256xf32>
    %34 = arith.mulf %32, %33 : vector<4x256xf32>
    %c24 = arith.constant 24 : index
    %c0_30 = arith.constant 0 : index
    %35 = vector.load %arg23[%c24, %c0_30] : memref<288x256xf32, #tpu.memory_space<vmem>>, vector<4x256xf32>
    tpu.vector_store %arg23[%c24, %c0_30], %34 {strides = array<i32>} : memref<288x256xf32, #tpu.memory_space<vmem>>, vector<4x256xf32>,
    %c0_31 = arith.constant 0 : index
    %c33 = arith.constant 33 : index
    %36 = vector.load %arg22[%c0_31, %c33] : memref<32x290xf32, #tpu.memory_space<vmem>>, vector<4x256xf32>
    %c28 = arith.constant 28 : index
    %c0_32 = arith.constant 0 : index
    %37 = vector.load %arg23[%c28, %c0_32] : memref<288x256xf32, #tpu.memory_space<vmem>>, vector<4x256xf32>
    tpu.vector_store %arg23[%c28, %c0_32], %36 {strides = array<i32>} : memref<288x256xf32, #tpu.memory_space<vmem>>, vector<4x256xf32>,
    %c0_33 = arith.constant 0 : index
    %c34 = arith.constant 34 : index
    %38 = vector.load %arg22[%c0_33, %c34] : memref<32x290xf32, #tpu.memory_space<vmem>>, vector<4x256xf32>
    %39 = vector.broadcast %11 : vector<1x256xf32> to vector<4x256xf32>
    %40 = arith.mulf %38, %39 : vector<4x256xf32>
    %c32_34 = arith.constant 32 : index
    %c0_35 = arith.constant 0 : index
    %41 = vector.load %arg23[%c32_34, %c0_35] : memref<288x256xf32, #tpu.memory_space<vmem>>, vector<4x256xf32>
    tpu.vector_store %arg23[%c32_34, %c0_35], %40 {strides = array<i32>} : memref<288x256xf32, #tpu.memory_space<vmem>>, vector<4x256xf32>,
    %c0_36 = arith.constant 0 : index
    %c0_37 = arith.constant 0 : index
    %42 = vector.load %arg23[%c0_36, %c0_37] : memref<288x256xf32, #tpu.memory_space<vmem>>, vector<36x256xf32>
    %cst_38 = arith.constant dense<0.000000e+00> : vector<8x256xf32>
    %43 = tpu.matmul %2, %42, %cst_38 {dimension_numbers = #tpu.dot_dimension_numbers<[1], [0], [0], [1], [0, 0, 1, 1], [], []>} : vector<8x36xf32>, vector<36x256xf32>, vector<8x256xf32> -> vector<8x256xf32>
    %44 = vector.broadcast %3 : vector<8x1xf32> to vector<8x256xf32>
    %45 = arith.addf %43, %44 : vector<8x256xf32>
    %cst_39 = arith.constant 0.00999999977 : f32
    %46 = vector.broadcast %cst_39 : f32 to vector<8x256xf32>
    %47 = arith.mulf %46, %45 : vector<8x256xf32>
    %48 = arith.maximumf %45, %47 : vector<8x256xf32>
    %c0_40 = arith.constant 0 : index
    %c0_41 = arith.constant 0 : index
    %49 = vector.load %arg4[%c0_40, %c0_41] : memref<8x72xf32, #tpu.memory_space<vmem>>, vector<8x72xf32>
    %c0_42 = arith.constant 0 : index
    %c0_43 = arith.constant 0 : index
    %50 = vector.load %arg5[%c0_42, %c0_43] : memref<8x1xf32, #tpu.memory_space<vmem>>, vector<8x1xf32>
    %c0_44 = arith.constant 0 : index
    %c0_45 = arith.constant 0 : index
    %51 = vector.load %arg14[%c0_44, %c0_45] : memref<2x256xf32, #tpu.memory_space<vmem>>, vector<2x256xf32>
    %cst_46 = arith.constant 0.000000e+00 : f32
    %52 = vector.broadcast %cst_46 : f32 to vector<8x17xf32>
    %c0_47 = arith.constant 0 : index
    %c0_48 = arith.constant 0 : index
    %53 = vector.load %arg22[%c0_47, %c0_48] : memref<32x290xf32, #tpu.memory_space<vmem>>, vector<8x17xf32>
    tpu.vector_store %arg22[%c0_47, %c0_48], %52 {strides = array<i32>} : memref<32x290xf32, #tpu.memory_space<vmem>>, vector<8x17xf32>,
    %cst_49 = arith.constant 0.000000e+00 : f32
    %54 = vector.broadcast %cst_49 : f32 to vector<8x17xf32>
    %c0_50 = arith.constant 0 : index
    %c273_51 = arith.constant 273 : index
    %55 = vector.load %arg22[%c0_50, %c273_51] : memref<32x290xf32, #tpu.memory_space<vmem>>, vector<8x17xf32>
    tpu.vector_store %arg22[%c0_50, %c273_51], %54 {strides = array<i32>} : memref<32x290xf32, #tpu.memory_space<vmem>>, vector<8x17xf32>,
    %c0_52 = arith.constant 0 : index
    %c17_53 = arith.constant 17 : index
    %56 = vector.load %arg22[%c0_52, %c17_53] : memref<32x290xf32, #tpu.memory_space<vmem>>, vector<8x256xf32>
    tpu.vector_store %arg22[%c0_52, %c17_53], %48 {strides = array<i32>} : memref<32x290xf32, #tpu.memory_space<vmem>>, vector<8x256xf32>,
    %57 = vector.extract_strided_slice %51 {offsets = [0, 0], sizes = [1, 256], strides = [1, 1]} : vector<2x256xf32> to vector<1x256xf32>
    %58 = vector.extract_strided_slice %51 {offsets = [1, 0], sizes = [1, 256], strides = [1, 1]} : vector<2x256xf32> to vector<1x256xf32>
    %c0_54 = arith.constant 0 : index
    %c0_55 = arith.constant 0 : index
    %59 = vector.load %arg22[%c0_54, %c0_55] : memref<32x290xf32, #tpu.memory_space<vmem>>, vector<8x256xf32>
    %60 = vector.broadcast %57 : vector<1x256xf32> to vector<8x256xf32>
    %61 = arith.mulf %59, %60 : vector<8x256xf32>
    %c0_56 = arith.constant 0 : index
    %c0_57 = arith.constant 0 : index
    %62 = vector.load %arg23[%c0_56, %c0_57] : memref<288x256xf32, #tpu.memory_space<vmem>>, vector<8x256xf32>
    tpu.vector_store %arg23[%c0_56, %c0_57], %61 {strides = array<i32>} : memref<288x256xf32, #tpu.memory_space<vmem>>, vector<8x256xf32>,
    %c0_58 = arith.constant 0 : index
    %c1_59 = arith.constant 1 : index
    %63 = vector.load %arg22[%c0_58, %c1_59] : memref<32x290xf32, #tpu.memory_space<vmem>>, vector<8x256xf32>
    %c8_60 = arith.constant 8 : index
    %c0_61 = arith.constant 0 : index
    %64 = vector.load %arg23[%c8_60, %c0_61] : memref<288x256xf32, #tpu.memory_space<vmem>>, vector<8x256xf32>
    tpu.vector_store %arg23[%c8_60, %c0_61], %63 {strides = array<i32>} : memref<288x256xf32, #tpu.memory_space<vmem>>, vector<8x256xf32>,
    %c0_62 = arith.constant 0 : index
    %c2_63 = arith.constant 2 : index
    %65 = vector.load %arg22[%c0_62, %c2_63] : memref<32x290xf32, #tpu.memory_space<vmem>>, vector<8x256xf32>
    %66 = vector.broadcast %58 : vector<1x256xf32> to vector<8x256xf32>
    %67 = arith.mulf %65, %66 : vector<8x256xf32>
    %c16_64 = arith.constant 16 : index
    %c0_65 = arith.constant 0 : index
    %68 = vector.load %arg23[%c16_64, %c0_65] : memref<288x256xf32, #tpu.memory_space<vmem>>, vector<8x256xf32>
    tpu.vector_store %arg23[%c16_64, %c0_65], %67 {strides = array<i32>} : memref<288x256xf32, #tpu.memory_space<vmem>>, vector<8x256xf32>,
    %c0_66 = arith.constant 0 : index
    %c16_67 = arith.constant 16 : index
    %69 = vector.load %arg22[%c0_66, %c16_67] : memref<32x290xf32, #tpu.memory_space<vmem>>, vector<8x256xf32>
    %70 = vector.broadcast %57 : vector<1x256xf32> to vector<8x256xf32>
    %71 = arith.mulf %69, %70 : vector<8x256xf32>
    %c24_68 = arith.constant 24 : index
    %c0_69 = arith.constant 0 : index
    %72 = vector.load %arg23[%c24_68, %c0_69] : memref<288x256xf32, #tpu.memory_space<vmem>>, vector<8x256xf32>
    tpu.vector_store %arg23[%c24_68, %c0_69], %71 {strides = array<i32>} : memref<288x256xf32, #tpu.memory_space<vmem>>, vector<8x256xf32>,
    %c0_70 = arith.constant 0 : index
    %c17_71 = arith.constant 17 : index
    %73 = vector.load %arg22[%c0_70, %c17_71] : memref<32x290xf32, #tpu.memory_space<vmem>>, vector<8x256xf32>
    %c32_72 = arith.constant 32 : index
    %c0_73 = arith.constant 0 : index
    %74 = vector.load %arg23[%c32_72, %c0_73] : memref<288x256xf32, #tpu.memory_space<vmem>>, vector<8x256xf32>
    tpu.vector_store %arg23[%c32_72, %c0_73], %73 {strides = array<i32>} : memref<288x256xf32, #tpu.memory_space<vmem>>, vector<8x256xf32>,
    %c0_74 = arith.constant 0 : index
    %c18_75 = arith.constant 18 : index
    %75 = vector.load %arg22[%c0_74, %c18_75] : memref<32x290xf32, #tpu.memory_space<vmem>>, vector<8x256xf32>
    %76 = vector.broadcast %58 : vector<1x256xf32> to vector<8x256xf32>
    %77 = arith.mulf %75, %76 : vector<8x256xf32>
    %c40 = arith.constant 40 : index
    %c0_76 = arith.constant 0 : index
    %78 = vector.load %arg23[%c40, %c0_76] : memref<288x256xf32, #tpu.memory_space<vmem>>, vector<8x256xf32>
    tpu.vector_store %arg23[%c40, %c0_76], %77 {strides = array<i32>} : memref<288x256xf32, #tpu.memory_space<vmem>>, vector<8x256xf32>,
    %c0_77 = arith.constant 0 : index
    %c32_78 = arith.constant 32 : index
    %79 = vector.load %arg22[%c0_77, %c32_78] : memref<32x290xf32, #tpu.memory_space<vmem>>, vector<8x256xf32>
    %80 = vector.broadcast %57 : vector<1x256xf32> to vector<8x256xf32>
    %81 = arith.mulf %79, %80 : vector<8x256xf32>
    %c48 = arith.constant 48 : index
    %c0_79 = arith.constant 0 : index
    %82 = vector.load %arg23[%c48, %c0_79] : memref<288x256xf32, #tpu.memory_space<vmem>>, vector<8x256xf32>
    tpu.vector_store %arg23[%c48, %c0_79], %81 {strides = array<i32>} : memref<288x256xf32, #tpu.memory_space<vmem>>, vector<8x256xf32>,
    %c0_80 = arith.constant 0 : index
    %c33_81 = arith.constant 33 : index
    %83 = vector.load %arg22[%c0_80, %c33_81] : memref<32x290xf32, #tpu.memory_space<vmem>>, vector<8x256xf32>
    %c56 = arith.constant 56 : index
    %c0_82 = arith.constant 0 : index
    %84 = vector.load %arg23[%c56, %c0_82] : memref<288x256xf32, #tpu.memory_space<vmem>>, vector<8x256xf32>
    tpu.vector_store %arg23[%c56, %c0_82], %83 {strides = array<i32>} : memref<288x256xf32, #tpu.memory_space<vmem>>, vector<8x256xf32>,
    %c0_83 = arith.constant 0 : index
    %c34_84 = arith.constant 34 : index
    %85 = vector.load %arg22[%c0_83, %c34_84] : memref<32x290xf32, #tpu.memory_space<vmem>>, vector<8x256xf32>
    %86 = vector.broadcast %58 : vector<1x256xf32> to vector<8x256xf32>
    %87 = arith.mulf %85, %86 : vector<8x256xf32>
    %c64 = arith.constant 64 : index
    %c0_85 = arith.constant 0 : index
    %88 = vector.load %arg23[%c64, %c0_85] : memref<288x256xf32, #tpu.memory_space<vmem>>, vector<8x256xf32>
    tpu.vector_store %arg23[%c64, %c0_85], %87 {strides = array<i32>} : memref<288x256xf32, #tpu.memory_space<vmem>>, vector<8x256xf32>,
    %c0_86 = arith.constant 0 : index
    %c0_87 = arith.constant 0 : index
    %89 = vector.load %arg23[%c0_86, %c0_87] : memref<288x256xf32, #tpu.memory_space<vmem>>, vector<72x256xf32>
    %cst_88 = arith.constant dense<0.000000e+00> : vector<8x256xf32>
    %90 = tpu.matmul %49, %89, %cst_88 {dimension_numbers = #tpu.dot_dimension_numbers<[1], [0], [0], [1], [0, 0, 1, 1], [], []>} : vector<8x72xf32>, vector<72x256xf32>, vector<8x256xf32> -> vector<8x256xf32>
    %91 = vector.broadcast %50 : vector<8x1xf32> to vector<8x256xf32>
    %92 = arith.addf %90, %91 : vector<8x256xf32>
    %cst_89 = arith.constant 0.00999999977 : f32
    %93 = vector.broadcast %cst_89 : f32 to vector<8x256xf32>
    %94 = arith.mulf %93, %92 : vector<8x256xf32>
    %95 = arith.maximumf %92, %94 : vector<8x256xf32>
    %c0_90 = arith.constant 0 : index
    %c0_91 = arith.constant 0 : index
    %c0_92 = arith.constant 0 : index
    %96 = vector.load %arg19[%c0_90, %c0_91, %c0_92] : memref<1x8x256xf32, #tpu.memory_space<vmem>>, vector<1x8x256xf32>
    %97 = vector.shape_cast %96 : vector<1x8x256xf32> to vector<8x256xf32>
    %98 = vector.shape_cast %95 : vector<8x256xf32> to vector<1x8x256xf32>
    tpu.vector_store %arg19[%c0_90, %c0_91, %c0_92], %98 {strides = array<i32>} : memref<1x8x256xf32, #tpu.memory_space<vmem>>, vector<1x8x256xf32>,
    %c0_93 = arith.constant 0 : index
    %c0_94 = arith.constant 0 : index
    %99 = vector.load %arg17[%c0_93, %c0_94] : memref<256x64xf32, #tpu.memory_space<vmem>>, vector<256x64xf32>
    %c0_95 = arith.constant 0 : index
    %c0_96 = arith.constant 0 : index
    %100 = vector.load %arg22[%c0_95, %c0_96] : memref<32x290xf32, #tpu.memory_space<vmem>>, vector<8x256xf32>
    tpu.vector_store %arg22[%c0_95, %c0_96], %95 {strides = array<i32>} : memref<32x290xf32, #tpu.memory_space<vmem>>, vector<8x256xf32>,
    %cst_97 = arith.constant 0.000000e+00 : f32
    %101 = vector.broadcast %cst_97 : f32 to vector<8x18xf32>
    %c0_98 = arith.constant 0 : index
    %c256 = arith.constant 256 : index
    %102 = vector.load %arg22[%c0_98, %c256] : memref<32x290xf32, #tpu.memory_space<vmem>>, vector<8x18xf32>
    tpu.vector_store %arg22[%c0_98, %c256], %101 {strides = array<i32>} : memref<32x290xf32, #tpu.memory_space<vmem>>, vector<8x18xf32>,
    %c0_99 = arith.constant 0 : index
    %c1_100 = arith.constant 1 : index
    %103 = vector.load %arg22[%c0_99, %c1_100] : memref<32x290xf32, #tpu.memory_space<vmem>>, vector<8x256xf32>
    %c0_101 = arith.constant 0 : index
    %c16_102 = arith.constant 16 : index
    %104 = vector.load %arg22[%c0_101, %c16_102] : memref<32x290xf32, #tpu.memory_space<vmem>>, vector<8x256xf32>
    %c0_103 = arith.constant 0 : index
    %c17_104 = arith.constant 17 : index
    %105 = vector.load %arg22[%c0_103, %c17_104] : memref<32x290xf32, #tpu.memory_space<vmem>>, vector<8x256xf32>
    %106 = arith.maximumf %95, %103 : vector<8x256xf32>
    %107 = arith.maximumf %104, %105 : vector<8x256xf32>
    %108 = arith.maximumf %106, %107 : vector<8x256xf32>
    %cst_105 = arith.constant dense<0.000000e+00> : vector<8x64xf32>
    %109 = tpu.matmul %108, %99, %cst_105 {dimension_numbers = #tpu.dot_dimension_numbers<[1], [0], [0], [1], [0, 0, 1, 1], [], []>} : vector<8x256xf32>, vector<256x64xf32>, vector<8x64xf32> -> vector<8x64xf32>
    %c0_106 = arith.constant 0 : index
    %c0_107 = arith.constant 0 : index
    %110 = vector.load %arg6[%c0_106, %c0_107] : memref<16x72xf32, #tpu.memory_space<vmem>>, vector<16x72xf32>
    %c0_108 = arith.constant 0 : index
    %c0_109 = arith.constant 0 : index
    %111 = vector.load %arg7[%c0_108, %c0_109] : memref<16x1xf32, #tpu.memory_space<vmem>>, vector<16x1xf32>
    %c0_110 = arith.constant 0 : index
    %c0_111 = arith.constant 0 : index
    %112 = vector.load %arg15[%c0_110, %c0_111] : memref<2x64xf32, #tpu.memory_space<vmem>>, vector<2x64xf32>
    %cst_112 = arith.constant 0.000000e+00 : f32
    %113 = vector.broadcast %cst_112 : f32 to vector<8x9xf32>
    %c0_113 = arith.constant 0 : index
    %c0_114 = arith.constant 0 : index
    %114 = vector.load %arg22[%c0_113, %c0_114] : memref<32x290xf32, #tpu.memory_space<vmem>>, vector<8x9xf32>
    tpu.vector_store %arg22[%c0_113, %c0_114], %113 {strides = array<i32>} : memref<32x290xf32, #tpu.memory_space<vmem>>, vector<8x9xf32>,
    %cst_115 = arith.constant 0.000000e+00 : f32
    %115 = vector.broadcast %cst_115 : f32 to vector<8x9xf32>
    %c0_116 = arith.constant 0 : index
    %c73 = arith.constant 73 : index
    %116 = vector.load %arg22[%c0_116, %c73] : memref<32x290xf32, #tpu.memory_space<vmem>>, vector<8x9xf32>
    tpu.vector_store %arg22[%c0_116, %c73], %115 {strides = array<i32>} : memref<32x290xf32, #tpu.memory_space<vmem>>, vector<8x9xf32>,
    %c0_117 = arith.constant 0 : index
    %c9 = arith.constant 9 : index
    %117 = vector.load %arg22[%c0_117, %c9] : memref<32x290xf32, #tpu.memory_space<vmem>>, vector<8x64xf32>
    tpu.vector_store %arg22[%c0_117, %c9], %109 {strides = array<i32>} : memref<32x290xf32, #tpu.memory_space<vmem>>, vector<8x64xf32>,
    %118 = vector.extract_strided_slice %112 {offsets = [0, 0], sizes = [1, 64], strides = [1, 1]} : vector<2x64xf32> to vector<1x64xf32>
    %119 = vector.extract_strided_slice %112 {offsets = [1, 0], sizes = [1, 64], strides = [1, 1]} : vector<2x64xf32> to vector<1x64xf32>
    %c0_118 = arith.constant 0 : index
    %c0_119 = arith.constant 0 : index
    %120 = vector.load %arg22[%c0_118, %c0_119] : memref<32x290xf32, #tpu.memory_space<vmem>>, vector<8x64xf32>
    %121 = vector.broadcast %118 : vector<1x64xf32> to vector<8x64xf32>
    %122 = arith.mulf %120, %121 : vector<8x64xf32>
    %c0_120 = arith.constant 0 : index
    %c0_121 = arith.constant 0 : index
    %123 = vector.load %arg23[%c0_120, %c0_121] : memref<288x256xf32, #tpu.memory_space<vmem>>, vector<8x64xf32>
    tpu.vector_store %arg23[%c0_120, %c0_121], %122 {strides = array<i32>} : memref<288x256xf32, #tpu.memory_space<vmem>>, vector<8x64xf32>,
    %c0_122 = arith.constant 0 : index
    %c1_123 = arith.constant 1 : index
    %124 = vector.load %arg22[%c0_122, %c1_123] : memref<32x290xf32, #tpu.memory_space<vmem>>, vector<8x64xf32>
    %c8_124 = arith.constant 8 : index
    %c0_125 = arith.constant 0 : index
    %125 = vector.load %arg23[%c8_124, %c0_125] : memref<288x256xf32, #tpu.memory_space<vmem>>, vector<8x64xf32>
    tpu.vector_store %arg23[%c8_124, %c0_125], %124 {strides = array<i32>} : memref<288x256xf32, #tpu.memory_space<vmem>>, vector<8x64xf32>,
    %c0_126 = arith.constant 0 : index
    %c2_127 = arith.constant 2 : index
    %126 = vector.load %arg22[%c0_126, %c2_127] : memref<32x290xf32, #tpu.memory_space<vmem>>, vector<8x64xf32>
    %127 = vector.broadcast %119 : vector<1x64xf32> to vector<8x64xf32>
    %128 = arith.mulf %126, %127 : vector<8x64xf32>
    %c16_128 = arith.constant 16 : index
    %c0_129 = arith.constant 0 : index
    %129 = vector.load %arg23[%c16_128, %c0_129] : memref<288x256xf32, #tpu.memory_space<vmem>>, vector<8x64xf32>
    tpu.vector_store %arg23[%c16_128, %c0_129], %128 {strides = array<i32>} : memref<288x256xf32, #tpu.memory_space<vmem>>, vector<8x64xf32>,
    %c0_130 = arith.constant 0 : index
    %c8_131 = arith.constant 8 : index
    %130 = vector.load %arg22[%c0_130, %c8_131] : memref<32x290xf32, #tpu.memory_space<vmem>>, vector<8x64xf32>
    %131 = vector.broadcast %118 : vector<1x64xf32> to vector<8x64xf32>
    %132 = arith.mulf %130, %131 : vector<8x64xf32>
    %c24_132 = arith.constant 24 : index
    %c0_133 = arith.constant 0 : index
    %133 = vector.load %arg23[%c24_132, %c0_133] : memref<288x256xf32, #tpu.memory_space<vmem>>, vector<8x64xf32>
    tpu.vector_store %arg23[%c24_132, %c0_133], %132 {strides = array<i32>} : memref<288x256xf32, #tpu.memory_space<vmem>>, vector<8x64xf32>,
    %c0_134 = arith.constant 0 : index
    %c9_135 = arith.constant 9 : index
    %134 = vector.load %arg22[%c0_134, %c9_135] : memref<32x290xf32, #tpu.memory_space<vmem>>, vector<8x64xf32>
    %c32_136 = arith.constant 32 : index
    %c0_137 = arith.constant 0 : index
    %135 = vector.load %arg23[%c32_136, %c0_137] : memref<288x256xf32, #tpu.memory_space<vmem>>, vector<8x64xf32>
    tpu.vector_store %arg23[%c32_136, %c0_137], %134 {strides = array<i32>} : memref<288x256xf32, #tpu.memory_space<vmem>>, vector<8x64xf32>,
    %c0_138 = arith.constant 0 : index
    %c10 = arith.constant 10 : index
    %136 = vector.load %arg22[%c0_138, %c10] : memref<32x290xf32, #tpu.memory_space<vmem>>, vector<8x64xf32>
    %137 = vector.broadcast %119 : vector<1x64xf32> to vector<8x64xf32>
    %138 = arith.mulf %136, %137 : vector<8x64xf32>
    %c40_139 = arith.constant 40 : index
    %c0_140 = arith.constant 0 : index
    %139 = vector.load %arg23[%c40_139, %c0_140] : memref<288x256xf32, #tpu.memory_space<vmem>>, vector<8x64xf32>
    tpu.vector_store %arg23[%c40_139, %c0_140], %138 {strides = array<i32>} : memref<288x256xf32, #tpu.memory_space<vmem>>, vector<8x64xf32>,
    %c0_141 = arith.constant 0 : index
    %c16_142 = arith.constant 16 : index
    %140 = vector.load %arg22[%c0_141, %c16_142] : memref<32x290xf32, #tpu.memory_space<vmem>>, vector<8x64xf32>
    %141 = vector.broadcast %118 : vector<1x64xf32> to vector<8x64xf32>
    %142 = arith.mulf %140, %141 : vector<8x64xf32>
    %c48_143 = arith.constant 48 : index
    %c0_144 = arith.constant 0 : index
    %143 = vector.load %arg23[%c48_143, %c0_144] : memref<288x256xf32, #tpu.memory_space<vmem>>, vector<8x64xf32>
    tpu.vector_store %arg23[%c48_143, %c0_144], %142 {strides = array<i32>} : memref<288x256xf32, #tpu.memory_space<vmem>>, vector<8x64xf32>,
    %c0_145 = arith.constant 0 : index
    %c17_146 = arith.constant 17 : index
    %144 = vector.load %arg22[%c0_145, %c17_146] : memref<32x290xf32, #tpu.memory_space<vmem>>, vector<8x64xf32>
    %c56_147 = arith.constant 56 : index
    %c0_148 = arith.constant 0 : index
    %145 = vector.load %arg23[%c56_147, %c0_148] : memref<288x256xf32, #tpu.memory_space<vmem>>, vector<8x64xf32>
    tpu.vector_store %arg23[%c56_147, %c0_148], %144 {strides = array<i32>} : memref<288x256xf32, #tpu.memory_space<vmem>>, vector<8x64xf32>,
    %c0_149 = arith.constant 0 : index
    %c18_150 = arith.constant 18 : index
    %146 = vector.load %arg22[%c0_149, %c18_150] : memref<32x290xf32, #tpu.memory_space<vmem>>, vector<8x64xf32>
    %147 = vector.broadcast %119 : vector<1x64xf32> to vector<8x64xf32>
    %148 = arith.mulf %146, %147 : vector<8x64xf32>
    %c64_151 = arith.constant 64 : index
    %c0_152 = arith.constant 0 : index
    %149 = vector.load %arg23[%c64_151, %c0_152] : memref<288x256xf32, #tpu.memory_space<vmem>>, vector<8x64xf32>
    tpu.vector_store %arg23[%c64_151, %c0_152], %148 {strides = array<i32>} : memref<288x256xf32, #tpu.memory_space<vmem>>, vector<8x64xf32>,
    %c0_153 = arith.constant 0 : index
    %c0_154 = arith.constant 0 : index
    %150 = vector.load %arg23[%c0_153, %c0_154] : memref<288x256xf32, #tpu.memory_space<vmem>>, vector<72x64xf32>
    %cst_155 = arith.constant dense<0.000000e+00> : vector<16x64xf32>
    %151 = tpu.matmul %110, %150, %cst_155 {dimension_numbers = #tpu.dot_dimension_numbers<[1], [0], [0], [1], [0, 0, 1, 1], [], []>} : vector<16x72xf32>, vector<72x64xf32>, vector<16x64xf32> -> vector<16x64xf32>
    %152 = vector.broadcast %111 : vector<16x1xf32> to vector<16x64xf32>
    %153 = arith.addf %151, %152 : vector<16x64xf32>
    %cst_156 = arith.constant 0.00999999977 : f32
    %154 = vector.broadcast %cst_156 : f32 to vector<16x64xf32>
    %155 = arith.mulf %154, %153 : vector<16x64xf32>
    %156 = arith.maximumf %153, %155 : vector<16x64xf32>
    %c0_157 = arith.constant 0 : index
    %c0_158 = arith.constant 0 : index
    %157 = vector.load %arg8[%c0_157, %c0_158] : memref<16x144xf32, #tpu.memory_space<vmem>>, vector<16x144xf32>
    %c0_159 = arith.constant 0 : index
    %c0_160 = arith.constant 0 : index
    %158 = vector.load %arg9[%c0_159, %c0_160] : memref<16x1xf32, #tpu.memory_space<vmem>>, vector<16x1xf32>
    %c0_161 = arith.constant 0 : index
    %c0_162 = arith.constant 0 : index
    %159 = vector.load %arg15[%c0_161, %c0_162] : memref<2x64xf32, #tpu.memory_space<vmem>>, vector<2x64xf32>
    %cst_163 = arith.constant 0.000000e+00 : f32
    %160 = vector.broadcast %cst_163 : f32 to vector<16x9xf32>
    %c0_164 = arith.constant 0 : index
    %c0_165 = arith.constant 0 : index
    %161 = vector.load %arg22[%c0_164, %c0_165] : memref<32x290xf32, #tpu.memory_space<vmem>>, vector<16x9xf32>
    tpu.vector_store %arg22[%c0_164, %c0_165], %160 {strides = array<i32>} : memref<32x290xf32, #tpu.memory_space<vmem>>, vector<16x9xf32>,
    %cst_166 = arith.constant 0.000000e+00 : f32
    %162 = vector.broadcast %cst_166 : f32 to vector<16x9xf32>
    %c0_167 = arith.constant 0 : index
    %c73_168 = arith.constant 73 : index
    %163 = vector.load %arg22[%c0_167, %c73_168] : memref<32x290xf32, #tpu.memory_space<vmem>>, vector<16x9xf32>
    tpu.vector_store %arg22[%c0_167, %c73_168], %162 {strides = array<i32>} : memref<32x290xf32, #tpu.memory_space<vmem>>, vector<16x9xf32>,
    %c0_169 = arith.constant 0 : index
    %c9_170 = arith.constant 9 : index
    %164 = vector.load %arg22[%c0_169, %c9_170] : memref<32x290xf32, #tpu.memory_space<vmem>>, vector<16x64xf32>
    tpu.vector_store %arg22[%c0_169, %c9_170], %156 {strides = array<i32>} : memref<32x290xf32, #tpu.memory_space<vmem>>, vector<16x64xf32>,
    %165 = vector.extract_strided_slice %159 {offsets = [0, 0], sizes = [1, 64], strides = [1, 1]} : vector<2x64xf32> to vector<1x64xf32>
    %166 = vector.extract_strided_slice %159 {offsets = [1, 0], sizes = [1, 64], strides = [1, 1]} : vector<2x64xf32> to vector<1x64xf32>
    %c0_171 = arith.constant 0 : index
    %c0_172 = arith.constant 0 : index
    %167 = vector.load %arg22[%c0_171, %c0_172] : memref<32x290xf32, #tpu.memory_space<vmem>>, vector<16x64xf32>
    %168 = vector.broadcast %165 : vector<1x64xf32> to vector<16x64xf32>
    %169 = arith.mulf %167, %168 : vector<16x64xf32>
    %c0_173 = arith.constant 0 : index
    %c0_174 = arith.constant 0 : index
    %170 = vector.load %arg23[%c0_173, %c0_174] : memref<288x256xf32, #tpu.memory_space<vmem>>, vector<16x64xf32>
    tpu.vector_store %arg23[%c0_173, %c0_174], %169 {strides = array<i32>} : memref<288x256xf32, #tpu.memory_space<vmem>>, vector<16x64xf32>,
    %c0_175 = arith.constant 0 : index
    %c1_176 = arith.constant 1 : index
    %171 = vector.load %arg22[%c0_175, %c1_176] : memref<32x290xf32, #tpu.memory_space<vmem>>, vector<16x64xf32>
    %c16_177 = arith.constant 16 : index
    %c0_178 = arith.constant 0 : index
    %172 = vector.load %arg23[%c16_177, %c0_178] : memref<288x256xf32, #tpu.memory_space<vmem>>, vector<16x64xf32>
    tpu.vector_store %arg23[%c16_177, %c0_178], %171 {strides = array<i32>} : memref<288x256xf32, #tpu.memory_space<vmem>>, vector<16x64xf32>,
    %c0_179 = arith.constant 0 : index
    %c2_180 = arith.constant 2 : index
    %173 = vector.load %arg22[%c0_179, %c2_180] : memref<32x290xf32, #tpu.memory_space<vmem>>, vector<16x64xf32>
    %174 = vector.broadcast %166 : vector<1x64xf32> to vector<16x64xf32>
    %175 = arith.mulf %173, %174 : vector<16x64xf32>
    %c32_181 = arith.constant 32 : index
    %c0_182 = arith.constant 0 : index
    %176 = vector.load %arg23[%c32_181, %c0_182] : memref<288x256xf32, #tpu.memory_space<vmem>>, vector<16x64xf32>
    tpu.vector_store %arg23[%c32_181, %c0_182], %175 {strides = array<i32>} : memref<288x256xf32, #tpu.memory_space<vmem>>, vector<16x64xf32>,
    %c0_183 = arith.constant 0 : index
    %c8_184 = arith.constant 8 : index
    %177 = vector.load %arg22[%c0_183, %c8_184] : memref<32x290xf32, #tpu.memory_space<vmem>>, vector<16x64xf32>
    %178 = vector.broadcast %165 : vector<1x64xf32> to vector<16x64xf32>
    %179 = arith.mulf %177, %178 : vector<16x64xf32>
    %c48_185 = arith.constant 48 : index
    %c0_186 = arith.constant 0 : index
    %180 = vector.load %arg23[%c48_185, %c0_186] : memref<288x256xf32, #tpu.memory_space<vmem>>, vector<16x64xf32>
    tpu.vector_store %arg23[%c48_185, %c0_186], %179 {strides = array<i32>} : memref<288x256xf32, #tpu.memory_space<vmem>>, vector<16x64xf32>,
    %c0_187 = arith.constant 0 : index
    %c9_188 = arith.constant 9 : index
    %181 = vector.load %arg22[%c0_187, %c9_188] : memref<32x290xf32, #tpu.memory_space<vmem>>, vector<16x64xf32>
    %c64_189 = arith.constant 64 : index
    %c0_190 = arith.constant 0 : index
    %182 = vector.load %arg23[%c64_189, %c0_190] : memref<288x256xf32, #tpu.memory_space<vmem>>, vector<16x64xf32>
    tpu.vector_store %arg23[%c64_189, %c0_190], %181 {strides = array<i32>} : memref<288x256xf32, #tpu.memory_space<vmem>>, vector<16x64xf32>,
    %c0_191 = arith.constant 0 : index
    %c10_192 = arith.constant 10 : index
    %183 = vector.load %arg22[%c0_191, %c10_192] : memref<32x290xf32, #tpu.memory_space<vmem>>, vector<16x64xf32>
    %184 = vector.broadcast %166 : vector<1x64xf32> to vector<16x64xf32>
    %185 = arith.mulf %183, %184 : vector<16x64xf32>
    %c80 = arith.constant 80 : index
    %c0_193 = arith.constant 0 : index
    %186 = vector.load %arg23[%c80, %c0_193] : memref<288x256xf32, #tpu.memory_space<vmem>>, vector<16x64xf32>
    tpu.vector_store %arg23[%c80, %c0_193], %185 {strides = array<i32>} : memref<288x256xf32, #tpu.memory_space<vmem>>, vector<16x64xf32>,
    %c0_194 = arith.constant 0 : index
    %c16_195 = arith.constant 16 : index
    %187 = vector.load %arg22[%c0_194, %c16_195] : memref<32x290xf32, #tpu.memory_space<vmem>>, vector<16x64xf32>
    %188 = vector.broadcast %165 : vector<1x64xf32> to vector<16x64xf32>
    %189 = arith.mulf %187, %188 : vector<16x64xf32>
    %c96 = arith.constant 96 : index
    %c0_196 = arith.constant 0 : index
    %190 = vector.load %arg23[%c96, %c0_196] : memref<288x256xf32, #tpu.memory_space<vmem>>, vector<16x64xf32>
    tpu.vector_store %arg23[%c96, %c0_196], %189 {strides = array<i32>} : memref<288x256xf32, #tpu.memory_space<vmem>>, vector<16x64xf32>,
    %c0_197 = arith.constant 0 : index
    %c17_198 = arith.constant 17 : index
    %191 = vector.load %arg22[%c0_197, %c17_198] : memref<32x290xf32, #tpu.memory_space<vmem>>, vector<16x64xf32>
    %c112 = arith.constant 112 : index
    %c0_199 = arith.constant 0 : index
    %192 = vector.load %arg23[%c112, %c0_199] : memref<288x256xf32, #tpu.memory_space<vmem>>, vector<16x64xf32>
    tpu.vector_store %arg23[%c112, %c0_199], %191 {strides = array<i32>} : memref<288x256xf32, #tpu.memory_space<vmem>>, vector<16x64xf32>,
    %c0_200 = arith.constant 0 : index
    %c18_201 = arith.constant 18 : index
    %193 = vector.load %arg22[%c0_200, %c18_201] : memref<32x290xf32, #tpu.memory_space<vmem>>, vector<16x64xf32>
    %194 = vector.broadcast %166 : vector<1x64xf32> to vector<16x64xf32>
    %195 = arith.mulf %193, %194 : vector<16x64xf32>
    %c128 = arith.constant 128 : index
    %c0_202 = arith.constant 0 : index
    %196 = vector.load %arg23[%c128, %c0_202] : memref<288x256xf32, #tpu.memory_space<vmem>>, vector<16x64xf32>
    tpu.vector_store %arg23[%c128, %c0_202], %195 {strides = array<i32>} : memref<288x256xf32, #tpu.memory_space<vmem>>, vector<16x64xf32>,
    %c0_203 = arith.constant 0 : index
    %c0_204 = arith.constant 0 : index
    %197 = vector.load %arg23[%c0_203, %c0_204] : memref<288x256xf32, #tpu.memory_space<vmem>>, vector<144x64xf32>
    %cst_205 = arith.constant dense<0.000000e+00> : vector<16x64xf32>
    %198 = tpu.matmul %157, %197, %cst_205 {dimension_numbers = #tpu.dot_dimension_numbers<[1], [0], [0], [1], [0, 0, 1, 1], [], []>} : vector<16x144xf32>, vector<144x64xf32>, vector<16x64xf32> -> vector<16x64xf32>
    %199 = vector.broadcast %158 : vector<16x1xf32> to vector<16x64xf32>
    %200 = arith.addf %198, %199 : vector<16x64xf32>
    %cst_206 = arith.constant 0.00999999977 : f32
    %201 = vector.broadcast %cst_206 : f32 to vector<16x64xf32>
    %202 = arith.mulf %201, %200 : vector<16x64xf32>
    %203 = arith.maximumf %200, %202 : vector<16x64xf32>
    %c0_207 = arith.constant 0 : index
    %c0_208 = arith.constant 0 : index
    %c0_209 = arith.constant 0 : index
    %204 = vector.load %arg20[%c0_207, %c0_208, %c0_209] : memref<1x16x64xf32, #tpu.memory_space<vmem>>, vector<1x16x64xf32>
    %205 = vector.shape_cast %204 : vector<1x16x64xf32> to vector<16x64xf32>
    %206 = vector.shape_cast %203 : vector<16x64xf32> to vector<1x16x64xf32>
    tpu.vector_store %arg20[%c0_207, %c0_208, %c0_209], %206 {strides = array<i32>} : memref<1x16x64xf32, #tpu.memory_space<vmem>>, vector<1x16x64xf32>,
    %c0_210 = arith.constant 0 : index
    %c0_211 = arith.constant 0 : index
    %207 = vector.load %arg18[%c0_210, %c0_211] : memref<64x16xf32, #tpu.memory_space<vmem>>, vector<64x16xf32>
    %c0_212 = arith.constant 0 : index
    %c0_213 = arith.constant 0 : index
    %208 = vector.load %arg22[%c0_212, %c0_213] : memref<32x290xf32, #tpu.memory_space<vmem>>, vector<16x64xf32>
    tpu.vector_store %arg22[%c0_212, %c0_213], %203 {strides = array<i32>} : memref<32x290xf32, #tpu.memory_space<vmem>>, vector<16x64xf32>,
    %cst_214 = arith.constant 0.000000e+00 : f32
    %209 = vector.broadcast %cst_214 : f32 to vector<16x10xf32>
    %c0_215 = arith.constant 0 : index
    %c64_216 = arith.constant 64 : index
    %210 = vector.load %arg22[%c0_215, %c64_216] : memref<32x290xf32, #tpu.memory_space<vmem>>, vector<16x10xf32>
    tpu.vector_store %arg22[%c0_215, %c64_216], %209 {strides = array<i32>} : memref<32x290xf32, #tpu.memory_space<vmem>>, vector<16x10xf32>,
    %c0_217 = arith.constant 0 : index
    %c1_218 = arith.constant 1 : index
    %211 = vector.load %arg22[%c0_217, %c1_218] : memref<32x290xf32, #tpu.memory_space<vmem>>, vector<16x64xf32>
    %c0_219 = arith.constant 0 : index
    %c8_220 = arith.constant 8 : index
    %212 = vector.load %arg22[%c0_219, %c8_220] : memref<32x290xf32, #tpu.memory_space<vmem>>, vector<16x64xf32>
    %c0_221 = arith.constant 0 : index
    %c9_222 = arith.constant 9 : index
    %213 = vector.load %arg22[%c0_221, %c9_222] : memref<32x290xf32, #tpu.memory_space<vmem>>, vector<16x64xf32>
    %214 = arith.maximumf %203, %211 : vector<16x64xf32>
    %215 = arith.maximumf %212, %213 : vector<16x64xf32>
    %216 = arith.maximumf %214, %215 : vector<16x64xf32>
    %cst_223 = arith.constant dense<0.000000e+00> : vector<16x16xf32>
    %217 = tpu.matmul %216, %207, %cst_223 {dimension_numbers = #tpu.dot_dimension_numbers<[1], [0], [0], [1], [0, 0, 1, 1], [], []>} : vector<16x64xf32>, vector<64x16xf32>, vector<16x16xf32> -> vector<16x16xf32>
    %c0_224 = arith.constant 0 : index
    %c0_225 = arith.constant 0 : index
    %218 = vector.load %arg10[%c0_224, %c0_225] : memref<32x144xf32, #tpu.memory_space<vmem>>, vector<32x144xf32>
    %c0_226 = arith.constant 0 : index
    %c0_227 = arith.constant 0 : index
    %219 = vector.load %arg11[%c0_226, %c0_227] : memref<32x1xf32, #tpu.memory_space<vmem>>, vector<32x1xf32>
    %c0_228 = arith.constant 0 : index
    %c0_229 = arith.constant 0 : index
    %220 = vector.load %arg16[%c0_228, %c0_229] : memref<2x16xf32, #tpu.memory_space<vmem>>, vector<2x16xf32>
    %cst_230 = arith.constant 0.000000e+00 : f32
    %221 = vector.broadcast %cst_230 : f32 to vector<16x5xf32>
    %c0_231 = arith.constant 0 : index
    %c0_232 = arith.constant 0 : index
    %222 = vector.load %arg22[%c0_231, %c0_232] : memref<32x290xf32, #tpu.memory_space<vmem>>, vector<16x5xf32>
    tpu.vector_store %arg22[%c0_231, %c0_232], %221 {strides = array<i32>} : memref<32x290xf32, #tpu.memory_space<vmem>>, vector<16x5xf32>,
    %cst_233 = arith.constant 0.000000e+00 : f32
    %223 = vector.broadcast %cst_233 : f32 to vector<16x5xf32>
    %c0_234 = arith.constant 0 : index
    %c21 = arith.constant 21 : index
    %224 = vector.load %arg22[%c0_234, %c21] : memref<32x290xf32, #tpu.memory_space<vmem>>, vector<16x5xf32>
    tpu.vector_store %arg22[%c0_234, %c21], %223 {strides = array<i32>} : memref<32x290xf32, #tpu.memory_space<vmem>>, vector<16x5xf32>,
    %c0_235 = arith.constant 0 : index
    %c5 = arith.constant 5 : index
    %225 = vector.load %arg22[%c0_235, %c5] : memref<32x290xf32, #tpu.memory_space<vmem>>, vector<16x16xf32>
    tpu.vector_store %arg22[%c0_235, %c5], %217 {strides = array<i32>} : memref<32x290xf32, #tpu.memory_space<vmem>>, vector<16x16xf32>,
    %226 = vector.extract_strided_slice %220 {offsets = [0, 0], sizes = [1, 16], strides = [1, 1]} : vector<2x16xf32> to vector<1x16xf32>
    %227 = vector.extract_strided_slice %220 {offsets = [1, 0], sizes = [1, 16], strides = [1, 1]} : vector<2x16xf32> to vector<1x16xf32>
    %c0_236 = arith.constant 0 : index
    %c0_237 = arith.constant 0 : index
    %228 = vector.load %arg22[%c0_236, %c0_237] : memref<32x290xf32, #tpu.memory_space<vmem>>, vector<16x16xf32>
    %229 = vector.broadcast %226 : vector<1x16xf32> to vector<16x16xf32>
    %230 = arith.mulf %228, %229 : vector<16x16xf32>
    %c0_238 = arith.constant 0 : index
    %c0_239 = arith.constant 0 : index
    %231 = vector.load %arg23[%c0_238, %c0_239] : memref<288x256xf32, #tpu.memory_space<vmem>>, vector<16x16xf32>
    tpu.vector_store %arg23[%c0_238, %c0_239], %230 {strides = array<i32>} : memref<288x256xf32, #tpu.memory_space<vmem>>, vector<16x16xf32>,
    %c0_240 = arith.constant 0 : index
    %c1_241 = arith.constant 1 : index
    %232 = vector.load %arg22[%c0_240, %c1_241] : memref<32x290xf32, #tpu.memory_space<vmem>>, vector<16x16xf32>
    %c16_242 = arith.constant 16 : index
    %c0_243 = arith.constant 0 : index
    %233 = vector.load %arg23[%c16_242, %c0_243] : memref<288x256xf32, #tpu.memory_space<vmem>>, vector<16x16xf32>
    tpu.vector_store %arg23[%c16_242, %c0_243], %232 {strides = array<i32>} : memref<288x256xf32, #tpu.memory_space<vmem>>, vector<16x16xf32>,
    %c0_244 = arith.constant 0 : index
    %c2_245 = arith.constant 2 : index
    %234 = vector.load %arg22[%c0_244, %c2_245] : memref<32x290xf32, #tpu.memory_space<vmem>>, vector<16x16xf32>
    %235 = vector.broadcast %227 : vector<1x16xf32> to vector<16x16xf32>
    %236 = arith.mulf %234, %235 : vector<16x16xf32>
    %c32_246 = arith.constant 32 : index
    %c0_247 = arith.constant 0 : index
    %237 = vector.load %arg23[%c32_246, %c0_247] : memref<288x256xf32, #tpu.memory_space<vmem>>, vector<16x16xf32>
    tpu.vector_store %arg23[%c32_246, %c0_247], %236 {strides = array<i32>} : memref<288x256xf32, #tpu.memory_space<vmem>>, vector<16x16xf32>,
    %c0_248 = arith.constant 0 : index
    %c4_249 = arith.constant 4 : index
    %238 = vector.load %arg22[%c0_248, %c4_249] : memref<32x290xf32, #tpu.memory_space<vmem>>, vector<16x16xf32>
    %239 = vector.broadcast %226 : vector<1x16xf32> to vector<16x16xf32>
    %240 = arith.mulf %238, %239 : vector<16x16xf32>
    %c48_250 = arith.constant 48 : index
    %c0_251 = arith.constant 0 : index
    %241 = vector.load %arg23[%c48_250, %c0_251] : memref<288x256xf32, #tpu.memory_space<vmem>>, vector<16x16xf32>
    tpu.vector_store %arg23[%c48_250, %c0_251], %240 {strides = array<i32>} : memref<288x256xf32, #tpu.memory_space<vmem>>, vector<16x16xf32>,
    %c0_252 = arith.constant 0 : index
    %c5_253 = arith.constant 5 : index
    %242 = vector.load %arg22[%c0_252, %c5_253] : memref<32x290xf32, #tpu.memory_space<vmem>>, vector<16x16xf32>
    %c64_254 = arith.constant 64 : index
    %c0_255 = arith.constant 0 : index
    %243 = vector.load %arg23[%c64_254, %c0_255] : memref<288x256xf32, #tpu.memory_space<vmem>>, vector<16x16xf32>
    tpu.vector_store %arg23[%c64_254, %c0_255], %242 {strides = array<i32>} : memref<288x256xf32, #tpu.memory_space<vmem>>, vector<16x16xf32>,
    %c0_256 = arith.constant 0 : index
    %c6 = arith.constant 6 : index
    %244 = vector.load %arg22[%c0_256, %c6] : memref<32x290xf32, #tpu.memory_space<vmem>>, vector<16x16xf32>
    %245 = vector.broadcast %227 : vector<1x16xf32> to vector<16x16xf32>
    %246 = arith.mulf %244, %245 : vector<16x16xf32>
    %c80_257 = arith.constant 80 : index
    %c0_258 = arith.constant 0 : index
    %247 = vector.load %arg23[%c80_257, %c0_258] : memref<288x256xf32, #tpu.memory_space<vmem>>, vector<16x16xf32>
    tpu.vector_store %arg23[%c80_257, %c0_258], %246 {strides = array<i32>} : memref<288x256xf32, #tpu.memory_space<vmem>>, vector<16x16xf32>,
    %c0_259 = arith.constant 0 : index
    %c8_260 = arith.constant 8 : index
    %248 = vector.load %arg22[%c0_259, %c8_260] : memref<32x290xf32, #tpu.memory_space<vmem>>, vector<16x16xf32>
    %249 = vector.broadcast %226 : vector<1x16xf32> to vector<16x16xf32>
    %250 = arith.mulf %248, %249 : vector<16x16xf32>
    %c96_261 = arith.constant 96 : index
    %c0_262 = arith.constant 0 : index
    %251 = vector.load %arg23[%c96_261, %c0_262] : memref<288x256xf32, #tpu.memory_space<vmem>>, vector<16x16xf32>
    tpu.vector_store %arg23[%c96_261, %c0_262], %250 {strides = array<i32>} : memref<288x256xf32, #tpu.memory_space<vmem>>, vector<16x16xf32>,
    %c0_263 = arith.constant 0 : index
    %c9_264 = arith.constant 9 : index
    %252 = vector.load %arg22[%c0_263, %c9_264] : memref<32x290xf32, #tpu.memory_space<vmem>>, vector<16x16xf32>
    %c112_265 = arith.constant 112 : index
    %c0_266 = arith.constant 0 : index
    %253 = vector.load %arg23[%c112_265, %c0_266] : memref<288x256xf32, #tpu.memory_space<vmem>>, vector<16x16xf32>
    tpu.vector_store %arg23[%c112_265, %c0_266], %252 {strides = array<i32>} : memref<288x256xf32, #tpu.memory_space<vmem>>, vector<16x16xf32>,
    %c0_267 = arith.constant 0 : index
    %c10_268 = arith.constant 10 : index
    %254 = vector.load %arg22[%c0_267, %c10_268] : memref<32x290xf32, #tpu.memory_space<vmem>>, vector<16x16xf32>
    %255 = vector.broadcast %227 : vector<1x16xf32> to vector<16x16xf32>
    %256 = arith.mulf %254, %255 : vector<16x16xf32>
    %c128_269 = arith.constant 128 : index
    %c0_270 = arith.constant 0 : index
    %257 = vector.load %arg23[%c128_269, %c0_270] : memref<288x256xf32, #tpu.memory_space<vmem>>, vector<16x16xf32>
    tpu.vector_store %arg23[%c128_269, %c0_270], %256 {strides = array<i32>} : memref<288x256xf32, #tpu.memory_space<vmem>>, vector<16x16xf32>,
    %c0_271 = arith.constant 0 : index
    %c0_272 = arith.constant 0 : index
    %258 = vector.load %arg23[%c0_271, %c0_272] : memref<288x256xf32, #tpu.memory_space<vmem>>, vector<144x16xf32>
    %cst_273 = arith.constant dense<0.000000e+00> : vector<32x16xf32>
    %259 = tpu.matmul %218, %258, %cst_273 {dimension_numbers = #tpu.dot_dimension_numbers<[1], [0], [0], [1], [0, 0, 1, 1], [], []>} : vector<32x144xf32>, vector<144x16xf32>, vector<32x16xf32> -> vector<32x16xf32>
    %260 = vector.broadcast %219 : vector<32x1xf32> to vector<32x16xf32>
    %261 = arith.addf %259, %260 : vector<32x16xf32>
    %cst_274 = arith.constant 0.00999999977 : f32
    %262 = vector.broadcast %cst_274 : f32 to vector<32x16xf32>
    %263 = arith.mulf %262, %261 : vector<32x16xf32>
    %264 = arith.maximumf %261, %263 : vector<32x16xf32>
    %c0_275 = arith.constant 0 : index
    %c0_276 = arith.constant 0 : index
    %265 = vector.load %arg12[%c0_275, %c0_276] : memref<32x288xf32, #tpu.memory_space<vmem>>, vector<32x288xf32>
    %c0_277 = arith.constant 0 : index
    %c0_278 = arith.constant 0 : index
    %266 = vector.load %arg13[%c0_277, %c0_278] : memref<32x1xf32, #tpu.memory_space<vmem>>, vector<32x1xf32>
    %c0_279 = arith.constant 0 : index
    %c0_280 = arith.constant 0 : index
    %267 = vector.load %arg16[%c0_279, %c0_280] : memref<2x16xf32, #tpu.memory_space<vmem>>, vector<2x16xf32>
    %cst_281 = arith.constant 0.000000e+00 : f32
    %268 = vector.broadcast %cst_281 : f32 to vector<32x5xf32>
    %c0_282 = arith.constant 0 : index
    %c0_283 = arith.constant 0 : index
    %269 = vector.load %arg22[%c0_282, %c0_283] : memref<32x290xf32, #tpu.memory_space<vmem>>, vector<32x5xf32>
    tpu.vector_store %arg22[%c0_282, %c0_283], %268 {strides = array<i32>} : memref<32x290xf32, #tpu.memory_space<vmem>>, vector<32x5xf32>,
    %cst_284 = arith.constant 0.000000e+00 : f32
    %270 = vector.broadcast %cst_284 : f32 to vector<32x5xf32>
    %c0_285 = arith.constant 0 : index
    %c21_286 = arith.constant 21 : index
    %271 = vector.load %arg22[%c0_285, %c21_286] : memref<32x290xf32, #tpu.memory_space<vmem>>, vector<32x5xf32>
    tpu.vector_store %arg22[%c0_285, %c21_286], %270 {strides = array<i32>} : memref<32x290xf32, #tpu.memory_space<vmem>>, vector<32x5xf32>,
    %c0_287 = arith.constant 0 : index
    %c5_288 = arith.constant 5 : index
    %272 = vector.load %arg22[%c0_287, %c5_288] : memref<32x290xf32, #tpu.memory_space<vmem>>, vector<32x16xf32>
    tpu.vector_store %arg22[%c0_287, %c5_288], %264 {strides = array<i32>} : memref<32x290xf32, #tpu.memory_space<vmem>>, vector<32x16xf32>,
    %273 = vector.extract_strided_slice %267 {offsets = [0, 0], sizes = [1, 16], strides = [1, 1]} : vector<2x16xf32> to vector<1x16xf32>
    %274 = vector.extract_strided_slice %267 {offsets = [1, 0], sizes = [1, 16], strides = [1, 1]} : vector<2x16xf32> to vector<1x16xf32>
    %c0_289 = arith.constant 0 : index
    %c0_290 = arith.constant 0 : index
    %275 = vector.load %arg22[%c0_289, %c0_290] : memref<32x290xf32, #tpu.memory_space<vmem>>, vector<32x16xf32>
    %276 = vector.broadcast %273 : vector<1x16xf32> to vector<32x16xf32>
    %277 = arith.mulf %275, %276 : vector<32x16xf32>
    %c0_291 = arith.constant 0 : index
    %c0_292 = arith.constant 0 : index
    %278 = vector.load %arg23[%c0_291, %c0_292] : memref<288x256xf32, #tpu.memory_space<vmem>>, vector<32x16xf32>
    tpu.vector_store %arg23[%c0_291, %c0_292], %277 {strides = array<i32>} : memref<288x256xf32, #tpu.memory_space<vmem>>, vector<32x16xf32>,
    %c0_293 = arith.constant 0 : index
    %c1_294 = arith.constant 1 : index
    %279 = vector.load %arg22[%c0_293, %c1_294] : memref<32x290xf32, #tpu.memory_space<vmem>>, vector<32x16xf32>
    %c32_295 = arith.constant 32 : index
    %c0_296 = arith.constant 0 : index
    %280 = vector.load %arg23[%c32_295, %c0_296] : memref<288x256xf32, #tpu.memory_space<vmem>>, vector<32x16xf32>
    tpu.vector_store %arg23[%c32_295, %c0_296], %279 {strides = array<i32>} : memref<288x256xf32, #tpu.memory_space<vmem>>, vector<32x16xf32>,
    %c0_297 = arith.constant 0 : index
    %c2_298 = arith.constant 2 : index
    %281 = vector.load %arg22[%c0_297, %c2_298] : memref<32x290xf32, #tpu.memory_space<vmem>>, vector<32x16xf32>
    %282 = vector.broadcast %274 : vector<1x16xf32> to vector<32x16xf32>
    %283 = arith.mulf %281, %282 : vector<32x16xf32>
    %c64_299 = arith.constant 64 : index
    %c0_300 = arith.constant 0 : index
    %284 = vector.load %arg23[%c64_299, %c0_300] : memref<288x256xf32, #tpu.memory_space<vmem>>, vector<32x16xf32>
    tpu.vector_store %arg23[%c64_299, %c0_300], %283 {strides = array<i32>} : memref<288x256xf32, #tpu.memory_space<vmem>>, vector<32x16xf32>,
    %c0_301 = arith.constant 0 : index
    %c4_302 = arith.constant 4 : index
    %285 = vector.load %arg22[%c0_301, %c4_302] : memref<32x290xf32, #tpu.memory_space<vmem>>, vector<32x16xf32>
    %286 = vector.broadcast %273 : vector<1x16xf32> to vector<32x16xf32>
    %287 = arith.mulf %285, %286 : vector<32x16xf32>
    %c96_303 = arith.constant 96 : index
    %c0_304 = arith.constant 0 : index
    %288 = vector.load %arg23[%c96_303, %c0_304] : memref<288x256xf32, #tpu.memory_space<vmem>>, vector<32x16xf32>
    tpu.vector_store %arg23[%c96_303, %c0_304], %287 {strides = array<i32>} : memref<288x256xf32, #tpu.memory_space<vmem>>, vector<32x16xf32>,
    %c0_305 = arith.constant 0 : index
    %c5_306 = arith.constant 5 : index
    %289 = vector.load %arg22[%c0_305, %c5_306] : memref<32x290xf32, #tpu.memory_space<vmem>>, vector<32x16xf32>
    %c128_307 = arith.constant 128 : index
    %c0_308 = arith.constant 0 : index
    %290 = vector.load %arg23[%c128_307, %c0_308] : memref<288x256xf32, #tpu.memory_space<vmem>>, vector<32x16xf32>
    tpu.vector_store %arg23[%c128_307, %c0_308], %289 {strides = array<i32>} : memref<288x256xf32, #tpu.memory_space<vmem>>, vector<32x16xf32>,
    %c0_309 = arith.constant 0 : index
    %c6_310 = arith.constant 6 : index
    %291 = vector.load %arg22[%c0_309, %c6_310] : memref<32x290xf32, #tpu.memory_space<vmem>>, vector<32x16xf32>
    %292 = vector.broadcast %274 : vector<1x16xf32> to vector<32x16xf32>
    %293 = arith.mulf %291, %292 : vector<32x16xf32>
    %c160 = arith.constant 160 : index
    %c0_311 = arith.constant 0 : index
    %294 = vector.load %arg23[%c160, %c0_311] : memref<288x256xf32, #tpu.memory_space<vmem>>, vector<32x16xf32>
    tpu.vector_store %arg23[%c160, %c0_311], %293 {strides = array<i32>} : memref<288x256xf32, #tpu.memory_space<vmem>>, vector<32x16xf32>,
    %c0_312 = arith.constant 0 : index
    %c8_313 = arith.constant 8 : index
    %295 = vector.load %arg22[%c0_312, %c8_313] : memref<32x290xf32, #tpu.memory_space<vmem>>, vector<32x16xf32>
    %296 = vector.broadcast %273 : vector<1x16xf32> to vector<32x16xf32>
    %297 = arith.mulf %295, %296 : vector<32x16xf32>
    %c192 = arith.constant 192 : index
    %c0_314 = arith.constant 0 : index
    %298 = vector.load %arg23[%c192, %c0_314] : memref<288x256xf32, #tpu.memory_space<vmem>>, vector<32x16xf32>
    tpu.vector_store %arg23[%c192, %c0_314], %297 {strides = array<i32>} : memref<288x256xf32, #tpu.memory_space<vmem>>, vector<32x16xf32>,
    %c0_315 = arith.constant 0 : index
    %c9_316 = arith.constant 9 : index
    %299 = vector.load %arg22[%c0_315, %c9_316] : memref<32x290xf32, #tpu.memory_space<vmem>>, vector<32x16xf32>
    %c224 = arith.constant 224 : index
    %c0_317 = arith.constant 0 : index
    %300 = vector.load %arg23[%c224, %c0_317] : memref<288x256xf32, #tpu.memory_space<vmem>>, vector<32x16xf32>
    tpu.vector_store %arg23[%c224, %c0_317], %299 {strides = array<i32>} : memref<288x256xf32, #tpu.memory_space<vmem>>, vector<32x16xf32>,
    %c0_318 = arith.constant 0 : index
    %c10_319 = arith.constant 10 : index
    %301 = vector.load %arg22[%c0_318, %c10_319] : memref<32x290xf32, #tpu.memory_space<vmem>>, vector<32x16xf32>
    %302 = vector.broadcast %274 : vector<1x16xf32> to vector<32x16xf32>
    %303 = arith.mulf %301, %302 : vector<32x16xf32>
    %c256_320 = arith.constant 256 : index
    %c0_321 = arith.constant 0 : index
    %304 = vector.load %arg23[%c256_320, %c0_321] : memref<288x256xf32, #tpu.memory_space<vmem>>, vector<32x16xf32>
    tpu.vector_store %arg23[%c256_320, %c0_321], %303 {strides = array<i32>} : memref<288x256xf32, #tpu.memory_space<vmem>>, vector<32x16xf32>,
    %c0_322 = arith.constant 0 : index
    %c0_323 = arith.constant 0 : index
    %305 = vector.load %arg23[%c0_322, %c0_323] : memref<288x256xf32, #tpu.memory_space<vmem>>, vector<288x16xf32>
    %cst_324 = arith.constant dense<0.000000e+00> : vector<32x16xf32>
    %306 = tpu.matmul %265, %305, %cst_324 {dimension_numbers = #tpu.dot_dimension_numbers<[1], [0], [0], [1], [0, 0, 1, 1], [], []>} : vector<32x288xf32>, vector<288x16xf32>, vector<32x16xf32> -> vector<32x16xf32>
    %307 = vector.broadcast %266 : vector<32x1xf32> to vector<32x16xf32>
    %308 = arith.addf %306, %307 : vector<32x16xf32>
    %cst_325 = arith.constant 0.00999999977 : f32
    %309 = vector.broadcast %cst_325 : f32 to vector<32x16xf32>
    %310 = arith.mulf %309, %308 : vector<32x16xf32>
    %311 = arith.maximumf %308, %310 : vector<32x16xf32>
    %c0_326 = arith.constant 0 : index
    %c0_327 = arith.constant 0 : index
    %c0_328 = arith.constant 0 : index
    %312 = vector.load %arg21[%c0_326, %c0_327, %c0_328] : memref<1x32x16xf32, #tpu.memory_space<vmem>>, vector<1x32x16xf32>
    %313 = vector.shape_cast %312 : vector<1x32x16xf32> to vector<32x16xf32>
    %314 = vector.shape_cast %311 : vector<32x16xf32> to vector<1x32x16xf32>
    tpu.vector_store %arg21[%c0_326, %c0_327, %c0_328], %314 {strides = array<i32>} : memref<1x32x16xf32, #tpu.memory_space<vmem>>, vector<1x32x16xf32>,
    return
  }
  func.func @transform_0(%arg0: i32) -> (i32, i32, i32) {
    %c0_i32 = arith.constant 0 : i32
    %c0_i32_0 = arith.constant 0 : i32
    %c0_i32_1 = arith.constant 0 : i32
    return %arg0, %c0_i32, %c0_i32_0 : i32, i32, i32
  }
  func.func @transform_1(%arg0: i32) -> (i32, i32) {
    %c0_i32 = arith.constant 0 : i32
    %c0_i32_0 = arith.constant 0 : i32
    %c0_i32_1 = arith.constant 0 : i32
    return %c0_i32, %c0_i32_0 : i32, i32
  }
  func.func @transform_2(%arg0: i32) -> (i32, i32) {
    %c0_i32 = arith.constant 0 : i32
    %c0_i32_0 = arith.constant 0 : i32
    %c0_i32_1 = arith.constant 0 : i32
    return %c0_i32, %c0_i32_0 : i32, i32
  }
  func.func @transform_3(%arg0: i32) -> (i32, i32) {
    %c0_i32 = arith.constant 0 : i32
    %c0_i32_0 = arith.constant 0 : i32
    %c0_i32_1 = arith.constant 0 : i32
    return %c0_i32, %c0_i32_0 : i32, i32
  }
  func.func @transform_4(%arg0: i32) -> (i32, i32) {
    %c0_i32 = arith.constant 0 : i32
    %c0_i32_0 = arith.constant 0 : i32
    %c0_i32_1 = arith.constant 0 : i32
    return %c0_i32, %c0_i32_0 : i32, i32
  }
  func.func @transform_5(%arg0: i32) -> (i32, i32) {
    %c0_i32 = arith.constant 0 : i32
    %c0_i32_0 = arith.constant 0 : i32
    %c0_i32_1 = arith.constant 0 : i32
    return %c0_i32, %c0_i32_0 : i32, i32
  }
  func.func @transform_6(%arg0: i32) -> (i32, i32) {
    %c0_i32 = arith.constant 0 : i32
    %c0_i32_0 = arith.constant 0 : i32
    %c0_i32_1 = arith.constant 0 : i32
    return %c0_i32, %c0_i32_0 : i32, i32
  }
  func.func @transform_7(%arg0: i32) -> (i32, i32) {
    %c0_i32 = arith.constant 0 : i32
    %c0_i32_0 = arith.constant 0 : i32
    %c0_i32_1 = arith.constant 0 : i32
    return %c0_i32, %c0_i32_0 : i32, i32
  }
  func.func @transform_8(%arg0: i32) -> (i32, i32) {
    %c0_i32 = arith.constant 0 : i32
    %c0_i32_0 = arith.constant 0 : i32
    %c0_i32_1 = arith.constant 0 : i32
    return %c0_i32, %c0_i32_0 : i32, i32
  }
  func.func @transform_9(%arg0: i32) -> (i32, i32) {
    %c0_i32 = arith.constant 0 : i32
    %c0_i32_0 = arith.constant 0 : i32
    %c0_i32_1 = arith.constant 0 : i32
    return %c0_i32, %c0_i32_0 : i32, i32
  }
  func.func @transform_10(%arg0: i32) -> (i32, i32) {
    %c0_i32 = arith.constant 0 : i32
    %c0_i32_0 = arith.constant 0 : i32
    %c0_i32_1 = arith.constant 0 : i32
    return %c0_i32, %c0_i32_0 : i32, i32
  }
  func.func @transform_11(%arg0: i32) -> (i32, i32) {
    %c0_i32 = arith.constant 0 : i32
    %c0_i32_0 = arith.constant 0 : i32
    %c0_i32_1 = arith.constant 0 : i32
    return %c0_i32, %c0_i32_0 : i32, i32
  }
  func.func @transform_12(%arg0: i32) -> (i32, i32) {
    %c0_i32 = arith.constant 0 : i32
    %c0_i32_0 = arith.constant 0 : i32
    %c0_i32_1 = arith.constant 0 : i32
    return %c0_i32, %c0_i32_0 : i32, i32
  }
  func.func @transform_13(%arg0: i32) -> (i32, i32) {
    %c0_i32 = arith.constant 0 : i32
    %c0_i32_0 = arith.constant 0 : i32
    %c0_i32_1 = arith.constant 0 : i32
    return %c0_i32, %c0_i32_0 : i32, i32
  }
  func.func @transform_14(%arg0: i32) -> (i32, i32) {
    %c0_i32 = arith.constant 0 : i32
    %c0_i32_0 = arith.constant 0 : i32
    %c0_i32_1 = arith.constant 0 : i32
    return %c0_i32, %c0_i32_0 : i32, i32
  }
  func.func @transform_15(%arg0: i32) -> (i32, i32) {
    %c0_i32 = arith.constant 0 : i32
    %c0_i32_0 = arith.constant 0 : i32
    %c0_i32_1 = arith.constant 0 : i32
    return %c0_i32, %c0_i32_0 : i32, i32
  }
  func.func @transform_16(%arg0: i32) -> (i32, i32) {
    %c0_i32 = arith.constant 0 : i32
    %c0_i32_0 = arith.constant 0 : i32
    %c0_i32_1 = arith.constant 0 : i32
    return %c0_i32, %c0_i32_0 : i32, i32
  }
  func.func @transform_17(%arg0: i32) -> (i32, i32) {
    %c0_i32 = arith.constant 0 : i32
    %c0_i32_0 = arith.constant 0 : i32
    %c0_i32_1 = arith.constant 0 : i32
    return %c0_i32, %c0_i32_0 : i32, i32
  }
  func.func @transform_18(%arg0: i32) -> (i32, i32, i32) {
    %c0_i32 = arith.constant 0 : i32
    %c0_i32_0 = arith.constant 0 : i32
    %c0_i32_1 = arith.constant 0 : i32
    return %arg0, %c0_i32, %c0_i32_0 : i32, i32, i32
  }
  func.func @transform_19(%arg0: i32) -> (i32, i32, i32) {
    %c0_i32 = arith.constant 0 : i32
    %c0_i32_0 = arith.constant 0 : i32
    %c0_i32_1 = arith.constant 0 : i32
    return %arg0, %c0_i32, %c0_i32_0 : i32, i32, i32
  }
  func.func @transform_20(%arg0: i32) -> (i32, i32, i32) {
    %c0_i32 = arith.constant 0 : i32
    %c0_i32_0 = arith.constant 0 : i32
    %c0_i32_1 = arith.constant 0 : i32
    return %arg0, %c0_i32, %c0_i32_0 : i32, i32, i32
  }
}

</mosaic_0001>

<llo_original>
// kernel: encoder_ms_forward.1
$region0: #{encoder_ms_forward.1}
  #allocation0 [shape = 'u32[]', space=smem, size = 0x4, offset = 0x4, fixed_abs, tag = 'smem constant byte address 0x4 - core index']
  #allocation1 [shape = 'u32[144,128]{1,0:T(1,128)}', space=vmem, size = 0x12000, scoped, tag = 'internal scratch']
  #allocation2 [shape = 'f32[32,290]{1,0:T(8,128)}', space=vmem, size = 0xc000, scoped, tag = 'scratch operand']
  #allocation3 [shape = 'f32[288,256]{1,0:T(8,128)}', space=vmem, size = 0x48000, scoped, tag = 'scratch operand']
  %s0 = inlined_call_operand.vmem [shape: f32[2,4,256], index: 0, kind: input, shape index: {}]
  %s1 = inlined_call_operand.vmem [shape: f32[8,36], index: 1, kind: input, shape index: {}]
  %s2 = inlined_call_operand.vmem [shape: f32[8,1], index: 2, kind: input, shape index: {}]
  %s3 = inlined_call_operand.vmem [shape: f32[8,72], index: 3, kind: input, shape index: {}]
  %s4 = inlined_call_operand.vmem [shape: f32[8,1], index: 4, kind: input, shape index: {}]
  %s5 = inlined_call_operand.vmem [shape: f32[16,72], index: 5, kind: input, shape index: {}]
  %s6 = inlined_call_operand.vmem [shape: f32[16,1], index: 6, kind: input, shape index: {}]
  %s7 = inlined_call_operand.vmem [shape: f32[16,144], index: 7, kind: input, shape index: {}]
  %s8 = inlined_call_operand.vmem [shape: f32[16,1], index: 8, kind: input, shape index: {}]
  %s9 = inlined_call_operand.vmem [shape: f32[32,144], index: 9, kind: input, shape index: {}]
  %s10 = inlined_call_operand.vmem [shape: f32[32,1], index: 10, kind: input, shape index: {}]
  %s11 = inlined_call_operand.vmem [shape: f32[32,288], index: 11, kind: input, shape index: {}]
  %s12 = inlined_call_operand.vmem [shape: f32[32,1], index: 12, kind: input, shape index: {}]
  %s13 = inlined_call_operand.vmem [shape: f32[2,256], index: 13, kind: input, shape index: {}]
  %s14 = inlined_call_operand.vmem [shape: f32[2,64], index: 14, kind: input, shape index: {}]
  %s15 = inlined_call_operand.vmem [shape: f32[2,16], index: 15, kind: input, shape index: {}]
  %s16 = inlined_call_operand.vmem [shape: f32[256,64], index: 16, kind: input, shape index: {}]
  %s17 = inlined_call_operand.vmem [shape: f32[64,16], index: 17, kind: input, shape index: {}]
  %s18 = inlined_call_operand.vmem [shape: f32[2,8,256], index: 18, kind: output, shape index: {0}]
  %s19 = inlined_call_operand.vmem [shape: f32[2,16,64], index: 19, kind: output, shape index: {1}]
  %s20 = inlined_call_operand.vmem [shape: f32[2,32,16], index: 20, kind: output, shape index: {2}]
  %21 = xla_tuple %s18, %s19, %s20
  %s22 = sld [smem:[#allocation0]]
  $region121: #{encoder_ms_forward.1} parent=0
    _
  %s24 = ssub.s32 1, %s22
  %s25 = scalar_select 0, %s24, %s22
  loop: start=0, step=1, limit=4
  $region2: #{encoder_ms_forward.1} parent=0 // loop_pre_header
    _
  $region3: #{encoder_ms_forward.1} parent=0 // loop_header
    %s27 = sphi 0, %s31
    %p28 = scmp.ge.s32.totalorder %s27, 4
    %s37 = sphi 0, %s39
    %s40 = sphi 0, %s37
    %s41 = sphi 0, %s40
    %s57 = sphi 0, %s41
    %s61 = sphi 0, %s61
    %s63 = sphi 0, %s61
    %s64 = sphi 0, %s63
    %s78 = sphi 0, %s64
    %s82 = sphi 0, %s82
    %s84 = sphi 0, %s82
    %s85 = sphi 0, %s84
    %s99 = sphi 0, %s85
    %s103 = sphi 0, %s103
    %s105 = sphi 0, %s103
    %s106 = sphi 0, %s105
    %s120 = sphi 0, %s106
    %s124 = sphi 0, %s124
    %s126 = sphi 0, %s124
    %s127 = sphi 0, %s126
    %s141 = sphi 0, %s127
    %s145 = sphi 0, %s145
    %s147 = sphi 0, %s145
    %s148 = sphi 0, %s147
    %s162 = sphi 0, %s148
    %s166 = sphi 0, %s166
    %s168 = sphi 0, %s166
    %s169 = sphi 0, %s168
    %s183 = sphi 0, %s169
    %s187 = sphi 0, %s187
    %s189 = sphi 0, %s187
    %s190 = sphi 0, %s189
    %s204 = sphi 0, %s190
    %s208 = sphi 0, %s208
    %s210 = sphi 0, %s208
    %s211 = sphi 0, %s210
    %s225 = sphi 0, %s211
    %s229 = sphi 0, %s229
    %s231 = sphi 0, %s229
    %s232 = sphi 0, %s231
    %s246 = sphi 0, %s232
    %s250 = sphi 0, %s250
    %s252 = sphi 0, %s250
    %s253 = sphi 0, %s252
    %s267 = sphi 0, %s253
    %s271 = sphi 0, %s271
    %s273 = sphi 0, %s271
    %s274 = sphi 0, %s273
    %s288 = sphi 0, %s274
    %s292 = sphi 0, %s292
    %s294 = sphi 0, %s292
    %s295 = sphi 0, %s294
    %s309 = sphi 0, %s295
    %s313 = sphi 0, %s313
    %s315 = sphi 0, %s313
    %s316 = sphi 0, %s315
    %s330 = sphi 0, %s316
    %s334 = sphi 0, %s334
    %s336 = sphi 0, %s334
    %s337 = sphi 0, %s336
    %s351 = sphi 0, %s337
    %s355 = sphi 0, %s355
    %s357 = sphi 0, %s355
    %s358 = sphi 0, %s357
    %s372 = sphi 0, %s358
    %s376 = sphi 0, %s376
    %s378 = sphi 0, %s376
    %s379 = sphi 0, %s378
    %s393 = sphi 0, %s379
    %s397 = sphi 0, %s397
    %s399 = sphi 0, %s397
    %s400 = sphi 0, %s399
    %s414 = sphi 0, %s400
    %s420 = sphi 0, %s422
    %s423 = sphi 0, %s420
    %s424 = sphi 0, %s423
    %s440 = sphi 0, %s424
    %s446 = sphi 0, %s448
    %s449 = sphi 0, %s446
    %s450 = sphi 0, %s449
    %s466 = sphi 0, %s450
    %s472 = sphi 0, %s474
    %s475 = sphi 0, %s472
    %s476 = sphi 0, %s475
    %s492 = sphi 0, %s476
  $region4: #{encoder_ms_forward.1} parent=0 // loop_header_branch
    %30 = sbr.rel (%p28) target = $region8
  $region5: #{encoder_ms_forward.1} parent=0 // loop_body
    %s32 = ssub.s32 %s27, 1
    %s33 = ssub.s32 %s27, 2
    %s34 = sadd.s32 %s27, 1
    %s35 = ssub.s32 %s27, %s34
    %p36 = scmp.eq.s32.totalorder %s35, 0
    %s38 = sadd.s32 %s37, 1
    %s39 = scalar_select %p36, %s37, %s38
    %p42 = pneg %p36
    %p43 = scmp.eq.s32.totalorder %s27, 1
    %p44 = por %p42, %p43
    %p45 = scmp.ne.s32.totalorder %s37, %s40
    %p46 = scmp.eq.s32.totalorder %s27, 0
    %p47 = por %p45, %p46
    %p48 = scmp.ne.s32.totalorder %s37, %s40
    %p49 = scmp.eq.s32.totalorder %s32, 1
    %p50 = por %p48, %p49
    %p51 = scmp.ne.s32.totalorder %s40, %s41
    %p52 = scmp.eq.s32.totalorder %s32, 0
    %p53 = por %p51, %p52
    %p54 = scmp.ne.s32.totalorder %s40, %s41
    %p55 = scmp.eq.s32.totalorder %s33, 1
    %p56 = por %p54, %p55
    %p58 = scmp.ne.s32.totalorder %s41, %s57
    %p59 = scmp.eq.s32.totalorder %s33, 0
    %p60 = por %p58, %p59
    %s62 = sadd.s32 %s61, 1
    %p65 = scmp.eq.s32.totalorder %s27, 1
    %p66 = scmp.ne.s32.totalorder %s61, %s63
    %p67 = scmp.eq.s32.totalorder %s27, 0
    %p68 = por %p66, %p67
    %p69 = scmp.ne.s32.totalorder %s61, %s63
    %p70 = scmp.eq.s32.totalorder %s32, 1
    %p71 = por %p69, %p70
    %p72 = scmp.ne.s32.totalorder %s63, %s64
    %p73 = scmp.eq.s32.totalorder %s32, 0
    %p74 = por %p72, %p73
    %p75 = scmp.ne.s32.totalorder %s63, %s64
    %p76 = scmp.eq.s32.totalorder %s33, 1
    %p77 = por %p75, %p76
    %p79 = scmp.ne.s32.totalorder %s64, %s78
    %p80 = scmp.eq.s32.totalorder %s33, 0
    %p81 = por %p79, %p80
    %s83 = sadd.s32 %s82, 1
    %p86 = scmp.eq.s32.totalorder %s27, 1
    %p87 = scmp.ne.s32.totalorder %s82, %s84
    %p88 = scmp.eq.s32.totalorder %s27, 0
    %p89 = por %p87, %p88
    %p90 = scmp.ne.s32.totalorder %s82, %s84
    %p91 = scmp.eq.s32.totalorder %s32, 1
    %p92 = por %p90, %p91
    %p93 = scmp.ne.s32.totalorder %s84, %s85
    %p94 = scmp.eq.s32.totalorder %s32, 0
    %p95 = por %p93, %p94
    %p96 = scmp.ne.s32.totalorder %s84, %s85
    %p97 = scmp.eq.s32.totalorder %s33, 1
    %p98 = por %p96, %p97
    %p100 = scmp.ne.s32.totalorder %s85, %s99
    %p101 = scmp.eq.s32.totalorder %s33, 0
    %p102 = por %p100, %p101
    %s104 = sadd.s32 %s103, 1
    %p107 = scmp.eq.s32.totalorder %s27, 1
    %p108 = scmp.ne.s32.totalorder %s103, %s105
    %p109 = scmp.eq.s32.totalorder %s27, 0
    %p110 = por %p108, %p109
    %p111 = scmp.ne.s32.totalorder %s103, %s105
    %p112 = scmp.eq.s32.totalorder %s32, 1
    %p113 = por %p111, %p112
    %p114 = scmp.ne.s32.totalorder %s105, %s106
    %p115 = scmp.eq.s32.totalorder %s32, 0
    %p116 = por %p114, %p115
    %p117 = scmp.ne.s32.totalorder %s105, %s106
    %p118 = scmp.eq.s32.totalorder %s33, 1
    %p119 = por %p117, %p118
    %p121 = scmp.ne.s32.totalorder %s106, %s120
    %p122 = scmp.eq.s32.totalorder %s33, 0
    %p123 = por %p121, %p122
    %s125 = sadd.s32 %s124, 1
    %p128 = scmp.eq.s32.totalorder %s27, 1
    %p129 = scmp.ne.s32.totalorder %s124, %s126
    %p130 = scmp.eq.s32.totalorder %s27, 0
    %p131 = por %p129, %p130
    %p132 = scmp.ne.s32.totalorder %s124, %s126
    %p133 = scmp.eq.s32.totalorder %s32, 1
    %p134 = por %p132, %p133
    %p135 = scmp.ne.s32.totalorder %s126, %s127
    %p136 = scmp.eq.s32.totalorder %s32, 0
    %p137 = por %p135, %p136
    %p138 = scmp.ne.s32.totalorder %s126, %s127
    %p139 = scmp.eq.s32.totalorder %s33, 1
    %p140 = por %p138, %p139
    %p142 = scmp.ne.s32.totalorder %s127, %s141
    %p143 = scmp.eq.s32.totalorder %s33, 0
    %p144 = por %p142, %p143
    %s146 = sadd.s32 %s145, 1
    %p149 = scmp.eq.s32.totalorder %s27, 1
    %p150 = scmp.ne.s32.totalorder %s145, %s147
    %p151 = scmp.eq.s32.totalorder %s27, 0
    %p152 = por %p150, %p151
    %p153 = scmp.ne.s32.totalorder %s145, %s147
    %p154 = scmp.eq.s32.totalorder %s32, 1
    %p155 = por %p153, %p154
    %p156 = scmp.ne.s32.totalorder %s147, %s148
    %p157 = scmp.eq.s32.totalorder %s32, 0
    %p158 = por %p156, %p157
    %p159 = scmp.ne.s32.totalorder %s147, %s148
    %p160 = scmp.eq.s32.totalorder %s33, 1
    %p161 = por %p159, %p160
    %p163 = scmp.ne.s32.totalorder %s148, %s162
    %p164 = scmp.eq.s32.totalorder %s33, 0
    %p165 = por %p163, %p164
    %s167 = sadd.s32 %s166, 1
    %p170 = scmp.eq.s32.totalorder %s27, 1
    %p171 = scmp.ne.s32.totalorder %s166, %s168
    %p172 = scmp.eq.s32.totalorder %s27, 0
    %p173 = por %p171, %p172
    %p174 = scmp.ne.s32.totalorder %s166, %s168
    %p175 = scmp.eq.s32.totalorder %s32, 1
    %p176 = por %p174, %p175
    %p177 = scmp.ne.s32.totalorder %s168, %s169
    %p178 = scmp.eq.s32.totalorder %s32, 0
    %p179 = por %p177, %p178
    %p180 = scmp.ne.s32.totalorder %s168, %s169
    %p181 = scmp.eq.s32.totalorder %s33, 1
    %p182 = por %p180, %p181
    %p184 = scmp.ne.s32.totalorder %s169, %s183
    %p185 = scmp.eq.s32.totalorder %s33, 0
    %p186 = por %p184, %p185
    %s188 = sadd.s32 %s187, 1
    %p191 = scmp.eq.s32.totalorder %s27, 1
    %p192 = scmp.ne.s32.totalorder %s187, %s189
    %p193 = scmp.eq.s32.totalorder %s27, 0
    %p194 = por %p192, %p193
    %p195 = scmp.ne.s32.totalorder %s187, %s189
    %p196 = scmp.eq.s32.totalorder %s32, 1
    %p197 = por %p195, %p196
    %p198 = scmp.ne.s32.totalorder %s189, %s190
    %p199 = scmp.eq.s32.totalorder %s32, 0
    %p200 = por %p198, %p199
    %p201 = scmp.ne.s32.totalorder %s189, %s190
    %p202 = scmp.eq.s32.totalorder %s33, 1
    %p203 = por %p201, %p202
    %p205 = scmp.ne.s32.totalorder %s190, %s204
    %p206 = scmp.eq.s32.totalorder %s33, 0
    %p207 = por %p205, %p206
    %s209 = sadd.s32 %s208, 1
    %p212 = scmp.eq.s32.totalorder %s27, 1
    %p213 = scmp.ne.s32.totalorder %s208, %s210
    %p214 = scmp.eq.s32.totalorder %s27, 0
    %p215 = por %p213, %p214
    %p216 = scmp.ne.s32.totalorder %s208, %s210
    %p217 = scmp.eq.s32.totalorder %s32, 1
    %p218 = por %p216, %p217
    %p219 = scmp.ne.s32.totalorder %s210, %s211
    %p220 = scmp.eq.s32.totalorder %s32, 0
    %p221 = por %p219, %p220
    %p222 = scmp.ne.s32.totalorder %s210, %s211
    %p223 = scmp.eq.s32.totalorder %s33, 1
    %p224 = por %p222, %p223
    %p226 = scmp.ne.s32.totalorder %s211, %s225
    %p227 = scmp.eq.s32.totalorder %s33, 0
    %p228 = por %p226, %p227
    %s230 = sadd.s32 %s229, 1
    %p233 = scmp.eq.s32.totalorder %s27, 1
    %p234 = scmp.ne.s32.totalorder %s229, %s231
    %p235 = scmp.eq.s32.totalorder %s27, 0
    %p236 = por %p234, %p235
    %p237 = scmp.ne.s32.totalorder %s229, %s231
    %p238 = scmp.eq.s32.totalorder %s32, 1
    %p239 = por %p237, %p238
    %p240 = scmp.ne.s32.totalorder %s231, %s232
    %p241 = scmp.eq.s32.totalorder %s32, 0
    %p242 = por %p240, %p241
    %p243 = scmp.ne.s32.totalorder %s231, %s232
    %p244 = scmp.eq.s32.totalorder %s33, 1
    %p245 = por %p243, %p244
    %p247 = scmp.ne.s32.totalorder %s232, %s246
    %p248 = scmp.eq.s32.totalorder %s33, 0
    %p249 = por %p247, %p248
    %s251 = sadd.s32 %s250, 1
    %p254 = scmp.eq.s32.totalorder %s27, 1
    %p255 = scmp.ne.s32.totalorder %s250, %s252
    %p256 = scmp.eq.s32.totalorder %s27, 0
    %p257 = por %p255, %p256
    %p258 = scmp.ne.s32.totalorder %s250, %s252
    %p259 = scmp.eq.s32.totalorder %s32, 1
    %p260 = por %p258, %p259
    %p261 = scmp.ne.s32.totalorder %s252, %s253
    %p262 = scmp.eq.s32.totalorder %s32, 0
    %p263 = por %p261, %p262
    %p264 = scmp.ne.s32.totalorder %s252, %s253
    %p265 = scmp.eq.s32.totalorder %s33, 1
    %p266 = por %p264, %p265
    %p268 = scmp.ne.s32.totalorder %s253, %s267
    %p269 = scmp.eq.s32.totalorder %s33, 0
    %p270 = por %p268, %p269
    %s272 = sadd.s32 %s271, 1
    %p275 = scmp.eq.s32.totalorder %s27, 1
    %p276 = scmp.ne.s32.totalorder %s271, %s273
    %p277 = scmp.eq.s32.totalorder %s27, 0
    %p278 = por %p276, %p277
    %p279 = scmp.ne.s32.totalorder %s271, %s273
    %p280 = scmp.eq.s32.totalorder %s32, 1
    %p281 = por %p279, %p280
    %p282 = scmp.ne.s32.totalorder %s273, %s274
    %p283 = scmp.eq.s32.totalorder %s32, 0
    %p284 = por %p282, %p283
    %p285 = scmp.ne.s32.totalorder %s273, %s274
    %p286 = scmp.eq.s32.totalorder %s33, 1
    %p287 = por %p285, %p286
    %p289 = scmp.ne.s32.totalorder %s274, %s288
    %p290 = scmp.eq.s32.totalorder %s33, 0
    %p291 = por %p289, %p290
    %s293 = sadd.s32 %s292, 1
    %p296 = scmp.eq.s32.totalorder %s27, 1
    %p297 = scmp.ne.s32.totalorder %s292, %s294
    %p298 = scmp.eq.s32.totalorder %s27, 0
    %p299 = por %p297, %p298
    %p300 = scmp.ne.s32.totalorder %s292, %s294
    %p301 = scmp.eq.s32.totalorder %s32, 1
    %p302 = por %p300, %p301
    %p303 = scmp.ne.s32.totalorder %s294, %s295
    %p304 = scmp.eq.s32.totalorder %s32, 0
    %p305 = por %p303, %p304
    %p306 = scmp.ne.s32.totalorder %s294, %s295
    %p307 = scmp.eq.s32.totalorder %s33, 1
    %p308 = por %p306, %p307
    %p310 = scmp.ne.s32.totalorder %s295, %s309
    %p311 = scmp.eq.s32.totalorder %s33, 0
    %p312 = por %p310, %p311
    %s314 = sadd.s32 %s313, 1
    %p317 = scmp.eq.s32.totalorder %s27, 1
    %p318 = scmp.ne.s32.totalorder %s313, %s315
    %p319 = scmp.eq.s32.totalorder %s27, 0
    %p320 = por %p318, %p319
    %p321 = scmp.ne.s32.totalorder %s313, %s315
    %p322 = scmp.eq.s32.totalorder %s32, 1
    %p323 = por %p321, %p322
    %p324 = scmp.ne.s32.totalorder %s315, %s316
    %p325 = scmp.eq.s32.totalorder %s32, 0
    %p326 = por %p324, %p325
    %p327 = scmp.ne.s32.totalorder %s315, %s316
    %p328 = scmp.eq.s32.totalorder %s33, 1
    %p329 = por %p327, %p328
    %p331 = scmp.ne.s32.totalorder %s316, %s330
    %p332 = scmp.eq.s32.totalorder %s33, 0
    %p333 = por %p331, %p332
    %s335 = sadd.s32 %s334, 1
    %p338 = scmp.eq.s32.totalorder %s27, 1
    %p339 = scmp.ne.s32.totalorder %s334, %s336
    %p340 = scmp.eq.s32.totalorder %s27, 0
    %p341 = por %p339, %p340
    %p342 = scmp.ne.s32.totalorder %s334, %s336
    %p343 = scmp.eq.s32.totalorder %s32, 1
    %p344 = por %p342, %p343
    %p345 = scmp.ne.s32.totalorder %s336, %s337
    %p346 = scmp.eq.s32.totalorder %s32, 0
    %p347 = por %p345, %p346
    %p348 = scmp.ne.s32.totalorder %s336, %s337
    %p349 = scmp.eq.s32.totalorder %s33, 1
    %p350 = por %p348, %p349
    %p352 = scmp.ne.s32.totalorder %s337, %s351
    %p353 = scmp.eq.s32.totalorder %s33, 0
    %p354 = por %p352, %p353
    %s356 = sadd.s32 %s355, 1
    %p359 = scmp.eq.s32.totalorder %s27, 1
    %p360 = scmp.ne.s32.totalorder %s355, %s357
    %p361 = scmp.eq.s32.totalorder %s27, 0
    %p362 = por %p360, %p361
    %p363 = scmp.ne.s32.totalorder %s355, %s357
    %p364 = scmp.eq.s32.totalorder %s32, 1
    %p365 = por %p363, %p364
    %p366 = scmp.ne.s32.totalorder %s357, %s358
    %p367 = scmp.eq.s32.totalorder %s32, 0
    %p368 = por %p366, %p367
    %p369 = scmp.ne.s32.totalorder %s357, %s358
    %p370 = scmp.eq.s32.totalorder %s33, 1
    %p371 = por %p369, %p370
    %p373 = scmp.ne.s32.totalorder %s358, %s372
    %p374 = scmp.eq.s32.totalorder %s33, 0
    %p375 = por %p373, %p374
    %s377 = sadd.s32 %s376, 1
    %p380 = scmp.eq.s32.totalorder %s27, 1
    %p381 = scmp.ne.s32.totalorder %s376, %s378
    %p382 = scmp.eq.s32.totalorder %s27, 0
    %p383 = por %p381, %p382
    %p384 = scmp.ne.s32.totalorder %s376, %s378
    %p385 = scmp.eq.s32.totalorder %s32, 1
    %p386 = por %p384, %p385
    %p387 = scmp.ne.s32.totalorder %s378, %s379
    %p388 = scmp.eq.s32.totalorder %s32, 0
    %p389 = por %p387, %p388
    %p390 = scmp.ne.s32.totalorder %s378, %s379
    %p391 = scmp.eq.s32.totalorder %s33, 1
    %p392 = por %p390, %p391
    %p394 = scmp.ne.s32.totalorder %s379, %s393
    %p395 = scmp.eq.s32.totalorder %s33, 0
    %p396 = por %p394, %p395
    %s398 = sadd.s32 %s397, 1
    %p401 = scmp.eq.s32.totalorder %s27, 1
    %p402 = scmp.ne.s32.totalorder %s397, %s399
    %p403 = scmp.eq.s32.totalorder %s27, 0
    %p404 = por %p402, %p403
    %p405 = scmp.ne.s32.totalorder %s397, %s399
    %p406 = scmp.eq.s32.totalorder %s32, 1
    %p407 = por %p405, %p406
    %p408 = scmp.ne.s32.totalorder %s399, %s400
    %p409 = scmp.eq.s32.totalorder %s32, 0
    %p410 = por %p408, %p409
    %p411 = scmp.ne.s32.totalorder %s399, %s400
    %p412 = scmp.eq.s32.totalorder %s33, 1
    %p413 = por %p411, %p412
    %p415 = scmp.ne.s32.totalorder %s400, %s414
    %p416 = scmp.eq.s32.totalorder %s33, 0
    %p417 = por %p415, %p416
    %s418 = ssub.s32 %s27, %s34
    %p419 = scmp.eq.s32.totalorder %s418, 0
    %s421 = sadd.s32 %s420, 1
    %s422 = scalar_select %p419, %s420, %s421
    %p425 = pneg %p419
    %p426 = scmp.eq.s32.totalorder %s27, 1
    %p427 = por %p425, %p426
    %p428 = scmp.ne.s32.totalorder %s420, %s423
    %p429 = scmp.eq.s32.totalorder %s27, 0
    %p430 = por %p428, %p429
    %p431 = scmp.ne.s32.totalorder %s420, %s423
    %p432 = scmp.eq.s32.totalorder %s32, 1
    %p433 = por %p431, %p432
    %p434 = scmp.ne.s32.totalorder %s423, %s424
    %p435 = scmp.eq.s32.totalorder %s32, 0
    %p436 = por %p434, %p435
    %p437 = scmp.ne.s32.totalorder %s423, %s424
    %p438 = scmp.eq.s32.totalorder %s33, 1
    %p439 = por %p437, %p438
    %p441 = scmp.ne.s32.totalorder %s424, %s440
    %p442 = scmp.eq.s32.totalorder %s33, 0
    %p443 = por %p441, %p442
    %s444 = ssub.s32 %s27, %s34
    %p445 = scmp.eq.s32.totalorder %s444, 0
    %s447 = sadd.s32 %s446, 1
    %s448 = scalar_select %p445, %s446, %s447
    %p451 = pneg %p445
    %p452 = scmp.eq.s32.totalorder %s27, 1
    %p453 = por %p451, %p452
    %p454 = scmp.ne.s32.totalorder %s446, %s449
    %p455 = scmp.eq.s32.totalorder %s27, 0
    %p456 = por %p454, %p455
    %p457 = scmp.ne.s32.totalorder %s446, %s449
    %p458 = scmp.eq.s32.totalorder %s32, 1
    %p459 = por %p457, %p458
    %p460 = scmp.ne.s32.totalorder %s449, %s450
    %p461 = scmp.eq.s32.totalorder %s32, 0
    %p462 = por %p460, %p461
    %p463 = scmp.ne.s32.totalorder %s449, %s450
    %p464 = scmp.eq.s32.totalorder %s33, 1
    %p465 = por %p463, %p464
    %p467 = scmp.ne.s32.totalorder %s450, %s466
    %p468 = scmp.eq.s32.totalorder %s33, 0
    %p469 = por %p467, %p468
    %s470 = ssub.s32 %s27, %s34
    %p471 = scmp.eq.s32.totalorder %s470, 0
    %s473 = sadd.s32 %s472, 1
    %s474 = scalar_select %p471, %s472, %s473
    %p477 = pneg %p471
    %p478 = scmp.eq.s32.totalorder %s27, 1
    %p479 = por %p477, %p478
    %p480 = scmp.ne.s32.totalorder %s472, %s475
    %p481 = scmp.eq.s32.totalorder %s27, 0
    %p482 = por %p480, %p481
    %p483 = scmp.ne.s32.totalorder %s472, %s475
    %p484 = scmp.eq.s32.totalorder %s32, 1
    %p485 = por %p483, %p484
    %p486 = scmp.ne.s32.totalorder %s475, %s476
    %p487 = scmp.eq.s32.totalorder %s32, 0
    %p488 = por %p486, %p487
    %p489 = scmp.ne.s32.totalorder %s475, %s476
    %p490 = scmp.eq.s32.totalorder %s33, 1
    %p491 = por %p489, %p490
    %p493 = scmp.ne.s32.totalorder %s476, %s492
    %p494 = scmp.eq.s32.totalorder %s33, 0
    %p495 = por %p493, %p494
    %p496 = scmp.le.s32.totalorder 1, %s27
    %p497 = scmp.lt.s32.totalorder %s27, 3
    %p498 = pnand %p496, %p497
    %p499 = pneg %p498
    // Predicated region
    $region9: #{encoder_ms_forward.1} parent=5 // pred_check
      _
    $region10: #{encoder_ms_forward.1} parent=5 // pred_check_branch
      %501 = sbr.rel (%p498) target = $region12
    $region11: #{encoder_ms_forward.1} parent=5 // pred_region
      %s502 = ssub.s32 %s27, 1
      // Predicated region
      $region13: #{encoder_ms_forward.1} parent=11 // pred_check
        %p503 = pneg %p74
      $region14: #{encoder_ms_forward.1} parent=11 // pred_check_branch
        %505 = sbr.rel (%p503) target = $region16
      $region15: #{encoder_ms_forward.1} parent=11 // pred_region
        _
      $region16: #{encoder_ms_forward.1} parent=11 // pred_fallthru
        _
      // Predicated region
      $region17: #{encoder_ms_forward.1} parent=11 // pred_check
        %p506 = pneg %p95
      $region18: #{encoder_ms_forward.1} parent=11 // pred_check_branch
        %508 = sbr.rel (%p506) target = $region20
      $region19: #{encoder_ms_forward.1} parent=11 // pred_region
        _
      $region20: #{encoder_ms_forward.1} parent=11 // pred_fallthru
        _
      // Predicated region
      $region21: #{encoder_ms_forward.1} parent=11 // pred_check
        %p509 = pneg %p116
      $region22: #{encoder_ms_forward.1} parent=11 // pred_check_branch
        %511 = sbr.rel (%p509) target = $region24
      $region23: #{encoder_ms_forward.1} parent=11 // pred_region
        _
      $region24: #{encoder_ms_forward.1} parent=11 // pred_fallthru
        _
      // Predicated region
      $region25: #{encoder_ms_forward.1} parent=11 // pred_check
        %p512 = pneg %p137
      $region26: #{encoder_ms_forward.1} parent=11 // pred_check_branch
        %514 = sbr.rel (%p512) target = $region28
      $region27: #{encoder_ms_forward.1} parent=11 // pred_region
        _
      $region28: #{encoder_ms_forward.1} parent=11 // pred_fallthru
        _
      // Predicated region
      $region29: #{encoder_ms_forward.1} parent=11 // pred_check
        %p515 = pneg %p158
      $region30: #{encoder_ms_forward.1} parent=11 // pred_check_branch
        %517 = sbr.rel (%p515) target = $region32
      $region31: #{encoder_ms_forward.1} parent=11 // pred_region
        _
      $region32: #{encoder_ms_forward.1} parent=11 // pred_fallthru
        _
      // Predicated region
      $region33: #{encoder_ms_forward.1} parent=11 // pred_check
        %p518 = pneg %p179
      $region34: #{encoder_ms_forward.1} parent=11 // pred_check_branch
        %520 = sbr.rel (%p518) target = $region36
      $region35: #{encoder_ms_forward.1} parent=11 // pred_region
        _
      $region36: #{encoder_ms_forward.1} parent=11 // pred_fallthru
        _
      // Predicated region
      $region37: #{encoder_ms_forward.1} parent=11 // pred_check
        %p521 = pneg %p200
      $region38: #{encoder_ms_forward.1} parent=11 // pred_check_branch
        %523 = sbr.rel (%p521) target = $region40
      $region39: #{encoder_ms_forward.1} parent=11 // pred_region
        _
      $region40: #{encoder_ms_forward.1} parent=11 // pred_fallthru
        _
      // Predicated region
      $region41: #{encoder_ms_forward.1} parent=11 // pred_check
        %p524 = pneg %p221
      $region42: #{encoder_ms_forward.1} parent=11 // pred_check_branch
        %526 = sbr.rel (%p524) target = $region44
      $region43: #{encoder_ms_forward.1} parent=11 // pred_region
        _
      $region44: #{encoder_ms_forward.1} parent=11 // pred_fallthru
        _
      // Predicated region
      $region45: #{encoder_ms_forward.1} parent=11 // pred_check
        %p527 = pneg %p242
      $region46: #{encoder_ms_forward.1} parent=11 // pred_check_branch
        %529 = sbr.rel (%p527) target = $region48
      $region47: #{encoder_ms_forward.1} parent=11 // pred_region
        _
      $region48: #{encoder_ms_forward.1} parent=11 // pred_fallthru
        _
      // Predicated region
      $region49: #{encoder_ms_forward.1} parent=11 // pred_check
        %p530 = pneg %p263
      $region50: #{encoder_ms_forward.1} parent=11 // pred_check_branch
        %532 = sbr.rel (%p530) target = $region52
      $region51: #{encoder_ms_forward.1} parent=11 // pred_region
        _
      $region52: #{encoder_ms_forward.1} parent=11 // pred_fallthru
        _
      // Predicated region
      $region53: #{encoder_ms_forward.1} parent=11 // pred_check
        %p533 = pneg %p284
      $region54: #{encoder_ms_forward.1} parent=11 // pred_check_branch
        %535 = sbr.rel (%p533) target = $region56
      $region55: #{encoder_ms_forward.1} parent=11 // pred_region
        _
      $region56: #{encoder_ms_forward.1} parent=11 // pred_fallthru
        _
      // Predicated region
      $region57: #{encoder_ms_forward.1} parent=11 // pred_check
        %p536 = pneg %p305
      $region58: #{encoder_ms_forward.1} parent=11 // pred_check_branch
        %538 = sbr.rel (%p536) target = $region60
      $region59: #{encoder_ms_forward.1} parent=11 // pred_region
        _
      $region60: #{encoder_ms_forward.1} parent=11 // pred_fallthru
        _
      // Predicated region
      $region61: #{encoder_ms_forward.1} parent=11 // pred_check
        %p539 = pneg %p326
      $region62: #{encoder_ms_forward.1} parent=11 // pred_check_branch
        %541 = sbr.rel (%p539) target = $region64
      $region63: #{encoder_ms_forward.1} parent=11 // pred_region
        _
      $region64: #{encoder_ms_forward.1} parent=11 // pred_fallthru
        _
      // Predicated region
      $region65: #{encoder_ms_forward.1} parent=11 // pred_check
        %p542 = pneg %p347
      $region66: #{encoder_ms_forward.1} parent=11 // pred_check_branch
        %544 = sbr.rel (%p542) target = $region68
      $region67: #{encoder_ms_forward.1} parent=11 // pred_region
        _
      $region68: #{encoder_ms_forward.1} parent=11 // pred_fallthru
        _
      // Predicated region
      $region69: #{encoder_ms_forward.1} parent=11 // pred_check
        %p545 = pneg %p368
      $region70: #{encoder_ms_forward.1} parent=11 // pred_check_branch
        %547 = sbr.rel (%p545) target = $region72
      $region71: #{encoder_ms_forward.1} parent=11 // pred_region
        _
      $region72: #{encoder_ms_forward.1} parent=11 // pred_fallthru
        _
      // Predicated region
      $region73: #{encoder_ms_forward.1} parent=11 // pred_check
        %p548 = pneg %p389
      $region74: #{encoder_ms_forward.1} parent=11 // pred_check_branch
        %550 = sbr.rel (%p548) target = $region76
      $region75: #{encoder_ms_forward.1} parent=11 // pred_region
        _
      $region76: #{encoder_ms_forward.1} parent=11 // pred_fallthru
        _
      // Predicated region
      $region77: #{encoder_ms_forward.1} parent=11 // pred_check
        %p551 = pneg %p410
      $region78: #{encoder_ms_forward.1} parent=11 // pred_check_branch
        %553 = sbr.rel (%p551) target = $region80
      $region79: #{encoder_ms_forward.1} parent=11 // pred_region
        _
      $region80: #{encoder_ms_forward.1} parent=11 // pred_fallthru
        _
    $region12: #{encoder_ms_forward.1} parent=5 // pred_fallthru
      _
    %p554 = scmp.lt.s32.totalorder %s27, 2
    // Predicated region
    $region81: #{encoder_ms_forward.1} parent=5 // pred_check
      %p555 = pneg %p554
    $region82: #{encoder_ms_forward.1} parent=5 // pred_check_branch
      %557 = sbr.rel (%p555) target = $region84
    $region83: #{encoder_ms_forward.1} parent=5 // pred_region
      // Predicated region
      $region85: #{encoder_ms_forward.1} parent=83 // pred_check
        %p558 = pneg %p47
      $region86: #{encoder_ms_forward.1} parent=83 // pred_check_branch
        %560 = sbr.rel (%p558) target = $region88
      $region87: #{encoder_ms_forward.1} parent=83 // pred_region
        %p561 = scmp.lt.s32.totalorder %s27, 1
        %s562 = scalar_select %p561, %s27, 1
        %s563 = smul.addr %s562, 2
        %s564 = smul.addr %s563, 4
        %s565 = scalar_lea.vmem %s0, %s564
      $region88: #{encoder_ms_forward.1} parent=83 // pred_fallthru
        _
    $region84: #{encoder_ms_forward.1} parent=5 // pred_fallthru
      _
    %p566 = scmp.le.s32.totalorder 1, %s27
    %p567 = scmp.lt.s32.totalorder %s27, 3
    %p568 = pnand %p566, %p567
    %p569 = pneg %p568
    // Predicated region
    $region89: #{encoder_ms_forward.1} parent=5 // pred_check
      _
    $region90: #{encoder_ms_forward.1} parent=5 // pred_check_branch
      %571 = sbr.rel (%p568) target = $region92
    $region91: #{encoder_ms_forward.1} parent=5 // pred_region
      %s572 = ssub.s32 %s27, 1
      %p573 = scmp.lt.s32.totalorder %s32, 1
      %s574 = scalar_select %p573, %s32, 1
      %s575 = smul.addr %s574, 2
      %s576 = smul.addr %s575, 4
      %s577 = scalar_lea.vmem %s0, %s576
      %p578 = pneg %p53
      %p579 = pneg %p50
      %p580 = pneg %p74
      %p581 = pneg %p71
      %p582 = pneg %p95
      %p583 = pneg %p92
      %p584 = pneg %p116
      %p585 = pneg %p113
      %p586 = pneg %p137
      %p587 = pneg %p134
      %p588 = pneg %p158
      %p589 = pneg %p155
      %p590 = pneg %p179
      %p591 = pneg %p176
      %p592 = pneg %p200
      %p593 = pneg %p197
      %p594 = pneg %p221
      %p595 = pneg %p218
      %p596 = pneg %p242
      %p597 = pneg %p239
      %p598 = pneg %p263
      %p599 = pneg %p260
      %p600 = pneg %p284
      %p601 = pneg %p281
      %p602 = pneg %p305
      %p603 = pneg %p302
      %p604 = pneg %p326
      %p605 = pneg %p323
      %p606 = pneg %p347
      %p607 = pneg %p344
      %p608 = pneg %p368
      %p609 = pneg %p365
      %p610 = pneg %p389
      %p611 = pneg %p386
      %p612 = pneg %p410
      %p613 = pneg %p407
      %p614 = pneg %p436
      %p615 = pneg %p433
      %p616 = scmp.lt.s32.totalorder %s32, 1
      %s617 = scalar_select %p616, %s32, 1
      %s618 = smul.addr %s617, 2
      %s619 = smul.addr %s618, 8
      %s620 = scalar_lea.vmem %s18, %s619
      %p621 = pneg %p462
      %p622 = pneg %p459
      %p623 = scmp.lt.s32.totalorder %s32, 1
      %s624 = scalar_select %p623, %s32, 1
      %s625 = smul.addr %s624, 2
      %s626 = smul.addr %s625, 8
      %s627 = scalar_lea.vmem %s19, %s626
      %p628 = pneg %p488
      %p629 = pneg %p485
      %p630 = scmp.lt.s32.totalorder %s32, 1
      %s631 = scalar_select %p630, %s32, 1
      %s632 = smul.addr %s631, 4
      %s633 = smul.addr %s632, 8
      %s634 = scalar_lea.vmem %s20, %s633
      %p635 = scmp.lt.s32.totalorder %s32, 1
      %s636 = scalar_select %p635, %s32, 1
      %s637 = smul.addr %s636, 2
      %s638 = smul.addr %s637, 4
      %s639 = scalar_lea.vmem %s0, %s638
      %p640 = scmp.lt.s32.totalorder %s32, 1
      %s641 = scalar_select %p640, %s32, 1
      %s642 = smul.addr %s641, 2
      %s643 = smul.addr %s642, 8
      %s644 = scalar_lea.vmem %s18, %s643
      %p645 = scmp.lt.s32.totalorder %s32, 1
      %s646 = scalar_select %p645, %s32, 1
      %s647 = smul.addr %s646, 2
      %s648 = smul.addr %s647, 8
      %s649 = scalar_lea.vmem %s19, %s648
      %p650 = scmp.lt.s32.totalorder %s32, 1
      %s651 = scalar_select %p650, %s32, 1
      %s652 = smul.addr %s651, 4
      %s653 = smul.addr %s652, 8
      %s654 = scalar_lea.vmem %s20, %s653
      %v655 = vld [vmem:[%s639] sm:$0xff]
      %v656 = vld [vmem:[%s1] sm:$0xff]
      %v657 = vld [vmem:[%s2] sm:$0xff]
      %v658 = vld [vmem:[%s13] sm:$0xf]
      %vm659 = vcmask 134144
      %660 = vst.msk [vmem:[#allocation2] sm:$0xf] %vm659, 0.0
      %vm661 = vcmask 273544
      %662 = vst.msk [vmem:[#allocation2 + $0x10] sm:$0xf] %vm661, 0.0
      %v664 = vcombine.high %v655, %v655
      %665 = vrot.lane.b32.xlu0 %v655, 17
      %v666 = vpop.permute.xlu0 %665
      %667 = vrot.lane.b32.xlu0 %v664, 17
      %v668 = vpop.permute.xlu0 %667
      %vm669 = vcmask 138240
      %v670 = vsel %vm669, %v666, %v668
      %vm674 = vcmask 1043592
      %675 = vst.msk [vmem:[#allocation2] sm:$0xf] %vm674, %v666
      %676 = vst [vmem:[#allocation2 + $0x8] sm:$0xf] %v670
      %677 = vst.msk [vmem:[#allocation2 + $0x10] sm:$0xf] %vm659, %v668
      %v678 = vld [vmem:[#allocation2] sm:$0xf]
      %v679 = vld [vmem:[#allocation2 + $0x8] sm:$0xf]
      %v681 = vlaneseq
      %v682 = vshrl.u32 %v681, 7
      %v683 = vsub.s32 0, %v682
      %v684 = vrot.slane %v658, %v683
      %v685 = vlaneseq
      %v686 = vshrl.u32 %v685, 7
      %v687 = vsub.s32 2, %v686
      %v688 = vrot.slane %v658, %v687
      %v691 = vlaneseq
      %v692 = vshrl.u32 %v691, 7
      %v693 = vsub.s32 0, %v692
      %v694 = vrot.slane %v684, %v693
      %v695 = vlaneseq
      %v696 = vshrl.u32 %v695, 7
      %v697 = vsub.s32 0, %v696
      %v698 = vrot.slane %v688, %v697
      %v699 = vmul.f32 %v678, %v694
      %v700 = vmul.f32 %v679, %v698
      %701 = vst [vmem:[#allocation3] sm:$0xf] %v699
      %702 = vst [vmem:[#allocation3 + $0x8] sm:$0xf] %v700
      %v703 = vld [vmem:[#allocation2] sm:$0xf]
      %v704 = vld [vmem:[#allocation2 + $0x8] sm:$0xf]
      %v705 = vld [vmem:[#allocation2 + $0x10] sm:$0xf]
      %v709 = vrot.slane %v703, 4
      %v710 = vrot.slane %v704, 4
      %v711 = vrot.slane %v705, 4
      %712 = vrot.lane.b32.xlu0 %v709, 127
      %v713 = vpop.permute.xlu0 %712
      %714 = vrot.lane.b32.xlu0 %v710, 127
      %v715 = vpop.permute.xlu0 %714
      %716 = vrot.lane.b32.xlu0 %v711, 127
      %v717 = vpop.permute.xlu0 %716
      %vm718 = vcmask 1039360
      %v719 = vsel %vm718, %v713, %v715
      %v720 = vsel %vm718, %v715, %v717
      %723 = vst [vmem:[#allocation3] sm:$0xf0] %v719
      %724 = vst [vmem:[#allocation3 + $0x8] sm:$0xf0] %v720
      %v725 = vld [vmem:[#allocation2] sm:$0xf]
      %v726 = vld [vmem:[#allocation2 + $0x8] sm:$0xf]
      %v727 = vld [vmem:[#allocation2 + $0x10] sm:$0xf]
      %v728 = vlaneseq
      %v729 = vshrl.u32 %v728, 7
      %v730 = vsub.s32 1, %v729
      %v731 = vrot.slane %v658, %v730
      %v732 = vlaneseq
      %v733 = vshrl.u32 %v732, 7
      %v734 = vsub.s32 3, %v733
      %v735 = vrot.slane %v658, %v734
      %v738 = vlaneseq
      %v739 = vshrl.u32 %v738, 7
      %v740 = vsub.s32 1, %v739
      %v741 = vrot.slane %v731, %v740
      %v742 = vlaneseq
      %v743 = vshrl.u32 %v742, 7
      %v744 = vsub.s32 1, %v743
      %v745 = vrot.slane %v735, %v744
      %748 = vrot.lane.b32.xlu0 %v741, 2
      %v749 = vpop.permute.xlu0 %748
      %750 = vrot.lane.b32.xlu0 %v745, 2
      %v751 = vpop.permute.xlu0 %750
      %vm752 = vcmask 15360
      %v753 = vsel %vm752, %v749, %v751
      %v757 = vmul.f32 %v725, %v749
      %v758 = vmul.f32 %v726, %v753
      %v759 = vmul.f32 %v727, %v751
      %763 = vrot.lane.b32.xlu0 %v757, 126
      %v764 = vpop.permute.xlu0 %763
      %765 = vrot.lane.b32.xlu0 %v758, 126
      %v766 = vpop.permute.xlu0 %765
      %767 = vrot.lane.b32.xlu0 %v759, 126
      %v768 = vpop.permute.xlu0 %767
      %vm769 = vcmask 1031168
      %v770 = vsel %vm769, %v764, %v766
      %v771 = vsel %vm769, %v766, %v768
      %774 = vst [vmem:[#allocation3 + $0x10] sm:$0xf] %v770
      %775 = vst [vmem:[#allocation3 + $0x18] sm:$0xf] %v771
      %v776 = vld [vmem:[#allocation2] sm:$0xf]
      %v777 = vld [vmem:[#allocation2 + $0x8] sm:$0xf]
      %v778 = vld [vmem:[#allocation2 + $0x10] sm:$0xf]
      %781 = vrot.lane.b32.xlu0 %v694, 16
      %v782 = vpop.permute.xlu0 %781
      %783 = vrot.lane.b32.xlu0 %v698, 16
      %v784 = vpop.permute.xlu0 %783
      %vm785 = vcmask 130048
      %v786 = vsel %vm785, %v782, %v784
      %v790 = vmul.f32 %v776, %v782
      %v791 = vmul.f32 %v777, %v786
      %v792 = vmul.f32 %v778, %v784
      %v796 = vrot.slane %v790, 4
      %v797 = vrot.slane %v791, 4
      %v798 = vrot.slane %v792, 4
      %799 = vrot.lane.b32.xlu0 %v796, 112
      %v800 = vpop.permute.xlu0 %799
      %801 = vrot.lane.b32.xlu0 %v797, 112
      %v802 = vpop.permute.xlu0 %801
      %803 = vrot.lane.b32.xlu0 %v798, 112
      %v804 = vpop.permute.xlu0 %803
      %vm805 = vcmask 916480
      %v806 = vsel %vm805, %v800, %v802
      %v807 = vsel %vm805, %v802, %v804
      %810 = vst [vmem:[#allocation3 + $0x10] sm:$0xf0] %v806
      %811 = vst [vmem:[#allocation3 + $0x18] sm:$0xf0] %v807
      %v812 = vld [vmem:[#allocation2] sm:$0xf]
      %v813 = vld [vmem:[#allocation2 + $0x8] sm:$0xf]
      %v814 = vld [vmem:[#allocation2 + $0x10] sm:$0xf]
      %818 = vrot.lane.b32.xlu0 %v812, 111
      %v819 = vpop.permute.xlu0 %818
      %820 = vrot.lane.b32.xlu0 %v813, 111
      %v821 = vpop.permute.xlu0 %820
      %822 = vrot.lane.b32.xlu0 %v814, 111
      %v823 = vpop.permute.xlu0 %822
      %vm824 = vcmask 908288
      %v825 = vsel %vm824, %v819, %v821
      %v826 = vsel %vm824, %v821, %v823
      %829 = vst [vmem:[#allocation3 + $0x20] sm:$0xf] %v825
      %830 = vst [vmem:[#allocation3 + $0x28] sm:$0xf] %v826
      %v831 = vld [vmem:[#allocation2] sm:$0xf]
      %v832 = vld [vmem:[#allocation2 + $0x8] sm:$0xf]
      %v833 = vld [vmem:[#allocation2 + $0x10] sm:$0xf]
      %834 = vrot.lane.b32.xlu0 %v741, 18
      %v835 = vpop.permute.xlu0 %834
      %836 = vrot.lane.b32.xlu0 %v745, 18
      %v837 = vpop.permute.xlu0 %836
      %vm838 = vcmask 146432
      %v839 = vsel %vm838, %v835, %v837
      %v843 = vmul.f32 %v831, %v835
      %v844 = vmul.f32 %v832, %v839
      %v845 = vmul.f32 %v833, %v837
      %v849 = vrot.slane %v843, 4
      %v850 = vrot.slane %v844, 4
      %v851 = vrot.slane %v845, 4
      %852 = vrot.lane.b32.xlu0 %v849, 110
      %v853 = vpop.permute.xlu0 %852
      %854 = vrot.lane.b32.xlu0 %v850, 110
      %v855 = vpop.permute.xlu0 %854
      %856 = vrot.lane.b32.xlu0 %v851, 110
      %v857 = vpop.permute.xlu0 %856
      %vm858 = vcmask 900096
      %v859 = vsel %vm858, %v853, %v855
      %v860 = vsel %vm858, %v855, %v857
      %863 = vst [vmem:[#allocation3 + $0x20] sm:$0xf0] %v859
      %864 = vst [vmem:[#allocation3 + $0x28] sm:$0xf0] %v860
      %v865 = vld [vmem:[#allocation2] sm:$0xf]
      %v866 = vld [vmem:[#allocation2 + $0x8] sm:$0xf]
      %v867 = vld [vmem:[#allocation2 + $0x10] sm:$0xf]
      %868 = vrot.lane.b32.xlu0 %v694, 32
      %v869 = vpop.permute.xlu0 %868
      %870 = vrot.lane.b32.xlu0 %v698, 32
      %v871 = vpop.permute.xlu0 %870
      %vm872 = vcmask 261120
      %v873 = vsel %vm872, %v869, %v871
      %v877 = vmul.f32 %v865, %v869
      %v878 = vmul.f32 %v866, %v873
      %v879 = vmul.f32 %v867, %v871
      %883 = vrot.lane.b32.xlu0 %v877, 96
      %v884 = vpop.permute.xlu0 %883
      %885 = vrot.lane.b32.xlu0 %v878, 96
      %v886 = vpop.permute.xlu0 %885
      %887 = vrot.lane.b32.xlu0 %v879, 96
      %v888 = vpop.permute.xlu0 %887
      %vm889 = vcmask 785408
      %v890 = vsel %vm889, %v884, %v886
      %v891 = vsel %vm889, %v886, %v888
      %894 = vst [vmem:[#allocation3 + $0x30] sm:$0xf] %v890
      %895 = vst [vmem:[#allocation3 + $0x38] sm:$0xf] %v891
      %v896 = vld [vmem:[#allocation2] sm:$0xf]
      %v897 = vld [vmem:[#allocation2 + $0x8] sm:$0xf]
      %v898 = vld [vmem:[#allocation2 + $0x10] sm:$0xf]
      %v902 = vrot.slane %v896, 4
      %v903 = vrot.slane %v897, 4
      %v904 = vrot.slane %v898, 4
      %905 = vrot.lane.b32.xlu0 %v902, 95
      %v906 = vpop.permute.xlu0 %905
      %907 = vrot.lane.b32.xlu0 %v903, 95
      %v908 = vpop.permute.xlu0 %907
      %909 = vrot.lane.b32.xlu0 %v904, 95
      %v910 = vpop.permute.xlu0 %909
      %vm911 = vcmask 777216
      %v912 = vsel %vm911, %v906, %v908
      %v913 = vsel %vm911, %v908, %v910
      %916 = vst [vmem:[#allocation3 + $0x30] sm:$0xf0] %v912
      %917 = vst [vmem:[#allocation3 + $0x38] sm:$0xf0] %v913
      %v918 = vld [vmem:[#allocation2] sm:$0xf]
      %v919 = vld [vmem:[#allocation2 + $0x8] sm:$0xf]
      %v920 = vld [vmem:[#allocation2 + $0x10] sm:$0xf]
      %921 = vrot.lane.b32.xlu0 %v741, 34
      %v922 = vpop.permute.xlu0 %921
      %923 = vrot.lane.b32.xlu0 %v745, 34
      %v924 = vpop.permute.xlu0 %923
      %vm925 = vcmask 277504
      %v926 = vsel %vm925, %v922, %v924
      %v930 = vmul.f32 %v918, %v922
      %v931 = vmul.f32 %v919, %v926
      %v932 = vmul.f32 %v920, %v924
      %936 = vrot.lane.b32.xlu0 %v930, 94
      %v937 = vpop.permute.xlu0 %936
      %938 = vrot.lane.b32.xlu0 %v931, 94
      %v939 = vpop.permute.xlu0 %938
      %940 = vrot.lane.b32.xlu0 %v932, 94
      %v941 = vpop.permute.xlu0 %940
      %vm942 = vcmask 769024
      %v943 = vsel %vm942, %v937, %v939
      %v944 = vsel %vm942, %v939, %v941
      %947 = vst [vmem:[#allocation3 + $0x40] sm:$0xf] %v943
      %948 = vst [vmem:[#allocation3 + $0x48] sm:$0xf] %v944
      %v949 = vld [vmem:[#allocation3] sm:$0xff]
      %v950 = vld [vmem:[#allocation3 + $0x8] sm:$0xff]
      %v951 = vld [vmem:[#allocation3 + $0x10] sm:$0xff]
      %v952 = vld [vmem:[#allocation3 + $0x18] sm:$0xff]
      %v953 = vld [vmem:[#allocation3 + $0x20] sm:$0xff]
      %v954 = vld [vmem:[#allocation3 + $0x28] sm:$0xff]
      %v955 = vld [vmem:[#allocation3 + $0x30] sm:$0xff]
      %v956 = vld [vmem:[#allocation3 + $0x38] sm:$0xff]
      %v957 = vld [vmem:[#allocation3 + $0x40] sm:$0xf]
      %v958 = vld [vmem:[#allocation3 + $0x48] sm:$0xf]
      %960 = vset.pattern.permute.xlu0 0
      %961 = vperm.xlu0 %960, %v657
      %v962 = vpop.permute.xlu0 %961
      %vm964 = vcmask 293888
      %v966 = vsel %vm964, %v656, 0
      %vm968 = vcmask 1043456
      %v970 = vsel %vm968, %v957, 0
      %v973 = vsel %vm968, %v958, 0
      %975 = vmatprep.subr.mxu0 0.0
      %976 = vmatpush1.msra.mxu0 0.0
      %977 = vmatprep.subr.mxu0 0.0
      %978 = vmatpush1.msra.mxu0 0.0
      %979 = vmatprep.subr.mxu0 0.0
      %980 = vmatpush1.msra.mxu0 0.0
      %981 = vmatprep.subr.mxu0 0.0
      %982 = vmatpush1.msra.mxu0 0.0
      %983 = vmatprep.subr.mxu0 0.0
      %984 = vmatpush1.msra.mxu0 0.0
      %985 = vmatprep.subr.mxu0 0.0
      %986 = vmatpush1.msra.mxu0 0.0
      %987 = vmatprep.subr.mxu0 0.0
      %988 = vmatpush1.msra.mxu0 0.0
      %989 = vmatprep.subr.mxu0 0.0
      %990 = vmatpush1.msra.mxu0 0.0
      %991 = vmatprep.subr.mxu0 0.0
      %992 = vmatpush1.msra.mxu0 0.0
      %993 = vmatprep.subr.mxu0 0.0
      %994 = vmatpush1.msra.mxu0 0.0
      %995 = vmatprep.subr.mxu0 0.0
      %996 = vmatpush1.msra.mxu0 0.0
      %997 = vmatprep.subr.mxu0 %v973
      %998 = vmatpush1.msra.mxu0 %v970
      %999 = vmatprep.subr.mxu0 %v956
      %1000 = vmatpush1.msra.mxu0 %v955
      %1001 = vmatprep.subr.mxu0 %v954
      %1002 = vmatpush1.msra.mxu0 %v953
      %1003 = vmatprep.subr.mxu0 %v952
      %1004 = vmatpush1.msra.mxu0 %v951
      %1005 = vmatprep.subr.mxu0 %v950
      %1006 = vmatpush1.msra.mxu0 %v949
      %1007 = vmatprep.subr.mxu0 0.0
      %1008 = vmatpush2.msra.mxu0 0.0
      %1009 = vmatprep.subr.mxu0 0.0
      %1010 = vmatpush2.msra.mxu0 0.0
      %1011 = vmatprep.subr.mxu0 0.0
      %1012 = vmatpush2.msra.mxu0 0.0
      %1013 = vmatprep.subr.mxu0 0.0
      %1014 = vmatpush2.msra.mxu0 0.0
      %1015 = vmatprep.subr.mxu0 0.0
      %1016 = vmatpush2.msra.mxu0 0.0
      %1017 = vmatprep.subr.mxu0 0.0
      %1018 = vmatpush2.msra.mxu0 0.0
      %1019 = vmatprep.subr.mxu0 0.0
      %1020 = vmatpush2.msra.mxu0 0.0
      %1021 = vmatprep.subr.mxu0 0.0
      %1022 = vmatpush2.msra.mxu0 0.0
      %1023 = vmatprep.subr.mxu0 0.0
      %1024 = vmatpush2.msra.mxu0 0.0
      %1025 = vmatprep.subr.mxu0 0.0
      %1026 = vmatpush2.msra.mxu0 0.0
      %1027 = vmatprep.subr.mxu0 0.0
      %1028 = vmatpush2.msra.mxu0 0.0
      %1029 = vmatprep.subr.mxu0 0.0
      %1030 = vmatpush2.msra.mxu0 0.0
      %1031 = vmatprep.subr.mxu0 0.0
      %1032 = vmatpush2.msra.mxu0 0.0
      %1033 = vmatprep.subr.mxu0 0.0
      %1034 = vmatpush2.msra.mxu0 0.0
      %1035 = vmatprep.subr.mxu0 0.0
      %1036 = vmatpush2.msra.mxu0 0.0
      %1037 = vmatprep.subr.mxu0 0.0
      %1038 = vmatpush2.msra.mxu0 0.0
      %1039 = vmatprep.mubr.f32.mxu0 0.0
      %1040 = vmatmul.mubr.f32.gmra.mxu0 %v966
      %v1041 = vpop.f32.mrf.mxu0
      %v1042 = vadd.f32 %v962, %v1041
      %v1043 = vpop.f32.mrf.mxu0
      %v1044 = vadd.f32 %v962, %v1043
      %1045 = vdwg.mxu0
      %v1046 = vmul.f32 %v1042, 0.01
      %v1047 = vmul.f32 %v1044, 0.01
      %v1048 = vmax.f32 %v1042, %v1046
      %v1049 = vmax.f32 %v1044, %v1047
      %v1050 = vld [vmem:[%s3] sm:$0xff]
      %v1051 = vld [vmem:[%s4] sm:$0xff]
      %v1052 = vld [vmem:[%s13] sm:$0xf]
      %1053 = vst.msk [vmem:[#allocation2] sm:$0xff] %vm669, 0.0
      %vm1054 = vcmask 277640
      %1055 = vst.msk [vmem:[#allocation2 + $0x10] sm:$0xff] %vm1054, 0.0
      %1058 = vrot.lane.b32.xlu0 %v1048, 17
      %v1059 = vpop.permute.xlu0 %1058
      %1060 = vrot.lane.b32.xlu0 %v1049, 17
      %v1061 = vpop.permute.xlu0 %1060
      %v1062 = vsel %vm669, %v1059, %v1061
      %vm1066 = vcmask 1047688
      %1067 = vst.msk [vmem:[#allocation2] sm:$0xff] %vm1066, %v1059
      %1068 = vst [vmem:[#allocation2 + $0x8] sm:$0xff] %v1062
      %1069 = vst.msk [vmem:[#allocation2 + $0x10] sm:$0xff] %vm669, %v1061
      %v1070 = vld [vmem:[#allocation2] sm:$0xff]
      %v1071 = vld [vmem:[#allocation2 + $0x8] sm:$0xff]
      %v1073 = vlaneseq
      %v1074 = vshrl.u32 %v1073, 7
      %v1075 = vsub.s32 0, %v1074
      %v1076 = vrot.slane %v1052, %v1075
      %v1077 = vlaneseq
      %v1078 = vshrl.u32 %v1077, 7
      %v1079 = vsub.s32 2, %v1078
      %v1080 = vrot.slane %v1052, %v1079
      %v1083 = vlaneseq
      %v1084 = vshrl.u32 %v1083, 7
      %v1085 = vsub.s32 0, %v1084
      %v1086 = vrot.slane %v1076, %v1085
      %v1087 = vlaneseq
      %v1088 = vshrl.u32 %v1087, 7
      %v1089 = vsub.s32 0, %v1088
      %v1090 = vrot.slane %v1080, %v1089
      %v1091 = vmul.f32 %v1070, %v1086
      %v1092 = vmul.f32 %v1071, %v1090
      %1093 = vst [vmem:[#allocation3] sm:$0xff] %v1091
      %1094 = vst [vmem:[#allocation3 + $0x8] sm:$0xff] %v1092
      %v1095 = vld [vmem:[#allocation2] sm:$0xff]
      %v1096 = vld [vmem:[#allocation2 + $0x8] sm:$0xff]
      %v1097 = vld [vmem:[#allocation2 + $0x10] sm:$0xff]
      %1101 = vrot.lane.b32.xlu0 %v1095, 127
      %v1102 = vpop.permute.xlu0 %1101
      %1103 = vrot.lane.b32.xlu0 %v1096, 127
      %v1104 = vpop.permute.xlu0 %1103
      %1105 = vrot.lane.b32.xlu0 %v1097, 127
      %v1106 = vpop.permute.xlu0 %1105
      %v1107 = vsel %vm718, %v1102, %v1104
      %v1108 = vsel %vm718, %v1104, %v1106
      %1111 = vst [vmem:[#allocation3 + $0x10] sm:$0xff] %v1107
      %1112 = vst [vmem:[#allocation3 + $0x18] sm:$0xff] %v1108
      %v1113 = vld [vmem:[#allocation2] sm:$0xff]
      %v1114 = vld [vmem:[#allocation2 + $0x8] sm:$0xff]
      %v1115 = vld [vmem:[#allocation2 + $0x10] sm:$0xff]
      %v1116 = vlaneseq
      %v1117 = vshrl.u32 %v1116, 7
      %v1118 = vsub.s32 1, %v1117
      %v1119 = vrot.slane %v1052, %v1118
      %v1120 = vlaneseq
      %v1121 = vshrl.u32 %v1120, 7
      %v1122 = vsub.s32 3, %v1121
      %v1123 = vrot.slane %v1052, %v1122
      %v1126 = vlaneseq
      %v1127 = vshrl.u32 %v1126, 7
      %v1128 = vsub.s32 1, %v1127
      %v1129 = vrot.slane %v1119, %v1128
      %v1130 = vlaneseq
      %v1131 = vshrl.u32 %v1130, 7
      %v1132 = vsub.s32 1, %v1131
      %v1133 = vrot.slane %v1123, %v1132
      %1136 = vrot.lane.b32.xlu0 %v1129, 2
      %v1137 = vpop.permute.xlu0 %1136
      %1138 = vrot.lane.b32.xlu0 %v1133, 2
      %v1139 = vpop.permute.xlu0 %1138
      %v1140 = vsel %vm752, %v1137, %v1139
      %v1144 = vmul.f32 %v1113, %v1137
      %v1145 = vmul.f32 %v1114, %v1140
      %v1146 = vmul.f32 %v1115, %v1139
      %1150 = vrot.lane.b32.xlu0 %v1144, 126
      %v1151 = vpop.permute.xlu0 %1150
      %1152 = vrot.lane.b32.xlu0 %v1145, 126
      %v1153 = vpop.permute.xlu0 %1152
      %1154 = vrot.lane.b32.xlu0 %v1146, 126
      %v1155 = vpop.permute.xlu0 %1154
      %v1156 = vsel %vm769, %v1151, %v1153
      %v1157 = vsel %vm769, %v1153, %v1155
      %1160 = vst [vmem:[#allocation3 + $0x20] sm:$0xff] %v1156
      %1161 = vst [vmem:[#allocation3 + $0x28] sm:$0xff] %v1157
      %v1162 = vld [vmem:[#allocation2] sm:$0xff]
      %v1163 = vld [vmem:[#allocation2 + $0x8] sm:$0xff]
      %v1164 = vld [vmem:[#allocation2 + $0x10] sm:$0xff]
      %1167 = vrot.lane.b32.xlu0 %v1086, 16
      %v1168 = vpop.permute.xlu0 %1167
      %1169 = vrot.lane.b32.xlu0 %v1090, 16
      %v1170 = vpop.permute.xlu0 %1169
      %v1171 = vsel %vm785, %v1168, %v1170
      %v1175 = vmul.f32 %v1162, %v1168
      %v1176 = vmul.f32 %v1163, %v1171
      %v1177 = vmul.f32 %v1164, %v1170
      %1181 = vrot.lane.b32.xlu0 %v1175, 112
      %v1182 = vpop.permute.xlu0 %1181
      %1183 = vrot.lane.b32.xlu0 %v1176, 112
      %v1184 = vpop.permute.xlu0 %1183
      %1185 = vrot.lane.b32.xlu0 %v1177, 112
      %v1186 = vpop.permute.xlu0 %1185
      %v1187 = vsel %vm805, %v1182, %v1184
      %v1188 = vsel %vm805, %v1184, %v1186
      %1191 = vst [vmem:[#allocation3 + $0x30] sm:$0xff] %v1187
      %1192 = vst [vmem:[#allocation3 + $0x38] sm:$0xff] %v1188
      %v1193 = vld [vmem:[#allocation2] sm:$0xff]
      %v1194 = vld [vmem:[#allocation2 + $0x8] sm:$0xff]
      %v1195 = vld [vmem:[#allocation2 + $0x10] sm:$0xff]
      %1199 = vrot.lane.b32.xlu0 %v1193, 111
      %v1200 = vpop.permute.xlu0 %1199
      %1201 = vrot.lane.b32.xlu0 %v1194, 111
      %v1202 = vpop.permute.xlu0 %1201
      %1203 = vrot.lane.b32.xlu0 %v1195, 111
      %v1204 = vpop.permute.xlu0 %1203
      %v1205 = vsel %vm824, %v1200, %v1202
      %v1206 = vsel %vm824, %v1202, %v1204
      %1209 = vst [vmem:[#allocation3 + $0x40] sm:$0xff] %v1205
      %1210 = vst [vmem:[#allocation3 + $0x48] sm:$0xff] %v1206
      %v1211 = vld [vmem:[#allocation2] sm:$0xff]
      %v1212 = vld [vmem:[#allocation2 + $0x8] sm:$0xff]
      %v1213 = vld [vmem:[#allocation2 + $0x10] sm:$0xff]
      %1214 = vrot.lane.b32.xlu0 %v1129, 18
      %v1215 = vpop.permute.xlu0 %1214
      %1216 = vrot.lane.b32.xlu0 %v1133, 18
      %v1217 = vpop.permute.xlu0 %1216
      %v1218 = vsel %vm838, %v1215, %v1217
      %v1222 = vmul.f32 %v1211, %v1215
      %v1223 = vmul.f32 %v1212, %v1218
      %v1224 = vmul.f32 %v1213, %v1217
      %1228 = vrot.lane.b32.xlu0 %v1222, 110
      %v1229 = vpop.permute.xlu0 %1228
      %1230 = vrot.lane.b32.xlu0 %v1223, 110
      %v1231 = vpop.permute.xlu0 %1230
      %1232 = vrot.lane.b32.xlu0 %v1224, 110
      %v1233 = vpop.permute.xlu0 %1232
      %v1234 = vsel %vm858, %v1229, %v1231
      %v1235 = vsel %vm858, %v1231, %v1233
      %1238 = vst [vmem:[#allocation3 + $0x50] sm:$0xff] %v1234
      %1239 = vst [vmem:[#allocation3 + $0x58] sm:$0xff] %v1235
      %v1240 = vld [vmem:[#allocation2] sm:$0xff]
      %v1241 = vld [vmem:[#allocation2 + $0x8] sm:$0xff]
      %v1242 = vld [vmem:[#allocation2 + $0x10] sm:$0xff]
      %1243 = vrot.lane.b32.xlu0 %v1086, 32
      %v1244 = vpop.permute.xlu0 %1243
      %1245 = vrot.lane.b32.xlu0 %v1090, 32
      %v1246 = vpop.permute.xlu0 %1245
      %v1247 = vsel %vm872, %v1244, %v1246
      %v1251 = vmul.f32 %v1240, %v1244
      %v1252 = vmul.f32 %v1241, %v1247
      %v1253 = vmul.f32 %v1242, %v1246
      %1257 = vrot.lane.b32.xlu0 %v1251, 96
      %v1258 = vpop.permute.xlu0 %1257
      %1259 = vrot.lane.b32.xlu0 %v1252, 96
      %v1260 = vpop.permute.xlu0 %1259
      %1261 = vrot.lane.b32.xlu0 %v1253, 96
      %v1262 = vpop.permute.xlu0 %1261
      %v1263 = vsel %vm889, %v1258, %v1260
      %v1264 = vsel %vm889, %v1260, %v1262
      %1267 = vst [vmem:[#allocation3 + $0x60] sm:$0xff] %v1263
      %1268 = vst [vmem:[#allocation3 + $0x68] sm:$0xff] %v1264
      %v1269 = vld [vmem:[#allocation2] sm:$0xff]
      %v1270 = vld [vmem:[#allocation2 + $0x8] sm:$0xff]
      %v1271 = vld [vmem:[#allocation2 + $0x10] sm:$0xff]
      %1275 = vrot.lane.b32.xlu0 %v1269, 95
      %v1276 = vpop.permute.xlu0 %1275
      %1277 = vrot.lane.b32.xlu0 %v1270, 95
      %v1278 = vpop.permute.xlu0 %1277
      %1279 = vrot.lane.b32.xlu0 %v1271, 95
      %v1280 = vpop.permute.xlu0 %1279
      %v1281 = vsel %vm911, %v1276, %v1278
      %v1282 = vsel %vm911, %v1278, %v1280
      %1285 = vst [vmem:[#allocation3 + $0x70] sm:$0xff] %v1281
      %1286 = vst [vmem:[#allocation3 + $0x78] sm:$0xff] %v1282
      %v1287 = vld [vmem:[#allocation2] sm:$0xff]
      %v1288 = vld [vmem:[#allocation2 + $0x8] sm:$0xff]
      %v1289 = vld [vmem:[#allocation2 + $0x10] sm:$0xff]
      %1290 = vrot.lane.b32.xlu0 %v1129, 34
      %v1291 = vpop.permute.xlu0 %1290
      %1292 = vrot.lane.b32.xlu0 %v1133, 34
      %v1293 = vpop.permute.xlu0 %1292
      %v1294 = vsel %vm925, %v1291, %v1293
      %v1298 = vmul.f32 %v1287, %v1291
      %v1299 = vmul.f32 %v1288, %v1294
      %v1300 = vmul.f32 %v1289, %v1293
      %1304 = vrot.lane.b32.xlu0 %v1298, 94
      %v1305 = vpop.permute.xlu0 %1304
      %1306 = vrot.lane.b32.xlu0 %v1299, 94
      %v1307 = vpop.permute.xlu0 %1306
      %1308 = vrot.lane.b32.xlu0 %v1300, 94
      %v1309 = vpop.permute.xlu0 %1308
      %v1310 = vsel %vm942, %v1305, %v1307
      %v1311 = vsel %vm942, %v1307, %v1309
      %1314 = vst [vmem:[#allocation3 + $0x80] sm:$0xff] %v1310
      %1315 = vst [vmem:[#allocation3 + $0x88] sm:$0xff] %v1311
      %v1316 = vld [vmem:[#allocation3] sm:$0xff]
      %v1317 = vld [vmem:[#allocation3 + $0x8] sm:$0xff]
      %v1318 = vld [vmem:[#allocation3 + $0x10] sm:$0xff]
      %v1319 = vld [vmem:[#allocation3 + $0x18] sm:$0xff]
      %v1320 = vld [vmem:[#allocation3 + $0x20] sm:$0xff]
      %v1321 = vld [vmem:[#allocation3 + $0x28] sm:$0xff]
      %v1322 = vld [vmem:[#allocation3 + $0x30] sm:$0xff]
      %v1323 = vld [vmem:[#allocation3 + $0x38] sm:$0xff]
      %v1324 = vld [vmem:[#allocation3 + $0x40] sm:$0xff]
      %v1325 = vld [vmem:[#allocation3 + $0x48] sm:$0xff]
      %v1326 = vld [vmem:[#allocation3 + $0x50] sm:$0xff]
      %v1327 = vld [vmem:[#allocation3 + $0x58] sm:$0xff]
      %v1328 = vld [vmem:[#allocation3 + $0x60] sm:$0xff]
      %v1329 = vld [vmem:[#allocation3 + $0x68] sm:$0xff]
      %v1330 = vld [vmem:[#allocation3 + $0x70] sm:$0xff]
      %v1331 = vld [vmem:[#allocation3 + $0x78] sm:$0xff]
      %v1332 = vld [vmem:[#allocation3 + $0x80] sm:$0xff]
      %v1333 = vld [vmem:[#allocation3 + $0x88] sm:$0xff]
      %1335 = vset.pattern.permute.xlu0 0
      %1336 = vperm.xlu0 %1335, %v1051
      %v1337 = vpop.permute.xlu0 %1336
      %vm1339 = vcmask 588800
      %v1341 = vsel %vm1339, %v1050, 0
      %1343 = vmatprep.subr.mxu0 0.0
      %1344 = vmatpush1.msra.mxu0 0.0
      %1345 = vmatprep.subr.mxu0 0.0
      %1346 = vmatpush1.msra.mxu0 0.0
      %1347 = vmatprep.subr.mxu0 0.0
      %1348 = vmatpush1.msra.mxu0 0.0
      %1349 = vmatprep.subr.mxu0 0.0
      %1350 = vmatpush1.msra.mxu0 0.0
      %1351 = vmatprep.subr.mxu0 0.0
      %1352 = vmatpush1.msra.mxu0 0.0
      %1353 = vmatprep.subr.mxu0 0.0
      %1354 = vmatpush1.msra.mxu0 0.0
      %1355 = vmatprep.subr.mxu0 0.0
      %1356 = vmatpush1.msra.mxu0 0.0
      %1357 = vmatprep.subr.mxu0 %v1333
      %1358 = vmatpush1.msra.mxu0 %v1332
      %1359 = vmatprep.subr.mxu0 %v1331
      %1360 = vmatpush1.msra.mxu0 %v1330
      %1361 = vmatprep.subr.mxu0 %v1329
      %1362 = vmatpush1.msra.mxu0 %v1328
      %1363 = vmatprep.subr.mxu0 %v1327
      %1364 = vmatpush1.msra.mxu0 %v1326
      %1365 = vmatprep.subr.mxu0 %v1325
      %1366 = vmatpush1.msra.mxu0 %v1324
      %1367 = vmatprep.subr.mxu0 %v1323
      %1368 = vmatpush1.msra.mxu0 %v1322
      %1369 = vmatprep.subr.mxu0 %v1321
      %1370 = vmatpush1.msra.mxu0 %v1320
      %1371 = vmatprep.subr.mxu0 %v1319
      %1372 = vmatpush1.msra.mxu0 %v1318
      %1373 = vmatprep.subr.mxu0 %v1317
      %1374 = vmatpush1.msra.mxu0 %v1316
      %1375 = vmatprep.subr.mxu0 0.0
      %1376 = vmatpush2.msra.mxu0 0.0
      %1377 = vmatprep.subr.mxu0 0.0
      %1378 = vmatpush2.msra.mxu0 0.0
      %1379 = vmatprep.subr.mxu0 0.0
      %1380 = vmatpush2.msra.mxu0 0.0
      %1381 = vmatprep.subr.mxu0 0.0
      %1382 = vmatpush2.msra.mxu0 0.0
      %1383 = vmatprep.subr.mxu0 0.0
      %1384 = vmatpush2.msra.mxu0 0.0
      %1385 = vmatprep.subr.mxu0 0.0
      %1386 = vmatpush2.msra.mxu0 0.0
      %1387 = vmatprep.subr.mxu0 0.0
      %1388 = vmatpush2.msra.mxu0 0.0
      %1389 = vmatprep.subr.mxu0 0.0
      %1390 = vmatpush2.msra.mxu0 0.0
      %1391 = vmatprep.subr.mxu0 0.0
      %1392 = vmatpush2.msra.mxu0 0.0
      %1393 = vmatprep.subr.mxu0 0.0
      %1394 = vmatpush2.msra.mxu0 0.0
      %1395 = vmatprep.subr.mxu0 0.0
      %1396 = vmatpush2.msra.mxu0 0.0
      %1397 = vmatprep.subr.mxu0 0.0
      %1398 = vmatpush2.msra.mxu0 0.0
      %1399 = vmatprep.subr.mxu0 0.0
      %1400 = vmatpush2.msra.mxu0 0.0
      %1401 = vmatprep.subr.mxu0 0.0
      %1402 = vmatpush2.msra.mxu0 0.0
      %1403 = vmatprep.subr.mxu0 0.0
      %1404 = vmatpush2.msra.mxu0 0.0
      %1405 = vmatprep.subr.mxu0 0.0
      %1406 = vmatpush2.msra.mxu0 0.0
      %1407 = vmatprep.mubr.f32.mxu0 0.0
      %1408 = vmatmul.mubr.f32.gmra.mxu0 %v1341
      %v1409 = vpop.f32.mrf.mxu0
      %v1410 = vadd.f32 %v1337, %v1409
      %v1411 = vpop.f32.mrf.mxu0
      %v1412 = vadd.f32 %v1337, %v1411
      %1413 = vdwg.mxu0
      %v1414 = vmul.f32 %v1410, 0.01
      %v1415 = vmul.f32 %v1412, 0.01
      %v1416 = vmax.f32 %v1410, %v1414
      %v1417 = vmax.f32 %v1412, %v1415
      %1418 = vst [vmem:[%s644] sm:$0xff] %v1416
      %1419 = vst [vmem:[%s644 + $0x8] sm:$0xff] %v1417
      %v1420 = vld [vmem:[%s16] sm:$0xff]
      %v1421 = vld [vmem:[%s16 + $0x8] sm:$0xff]
      %v1422 = vld [vmem:[%s16 + $0x10] sm:$0xff]
      %v1423 = vld [vmem:[%s16 + $0x18] sm:$0xff]
      %v1424 = vld [vmem:[%s16 + $0x20] sm:$0xff]
      %v1425 = vld [vmem:[%s16 + $0x28] sm:$0xff]
      %v1426 = vld [vmem:[%s16 + $0x30] sm:$0xff]
      %v1427 = vld [vmem:[%s16 + $0x38] sm:$0xff]
      %v1428 = vld [vmem:[%s16 + $0x40] sm:$0xff]
      %v1429 = vld [vmem:[%s16 + $0x48] sm:$0xff]
      %v1430 = vld [vmem:[%s16 + $0x50] sm:$0xff]
      %v1431 = vld [vmem:[%s16 + $0x58] sm:$0xff]
      %v1432 = vld [vmem:[%s16 + $0x60] sm:$0xff]
      %v1433 = vld [vmem:[%s16 + $0x68] sm:$0xff]
      %v1434 = vld [vmem:[%s16 + $0x70] sm:$0xff]
      %v1435 = vld [vmem:[%s16 + $0x78] sm:$0xff]
      %v1436 = vld [vmem:[%s16 + $0x80] sm:$0xff]
      %v1437 = vld [vmem:[%s16 + $0x88] sm:$0xff]
      %v1438 = vld [vmem:[%s16 + $0x90] sm:$0xff]
      %v1439 = vld [vmem:[%s16 + $0x98] sm:$0xff]
      %v1440 = vld [vmem:[%s16 + $0xa0] sm:$0xff]
      %v1441 = vld [vmem:[%s16 + $0xa8] sm:$0xff]
      %v1442 = vld [vmem:[%s16 + $0xb0] sm:$0xff]
      %v1443 = vld [vmem:[%s16 + $0xb8] sm:$0xff]
      %v1444 = vld [vmem:[%s16 + $0xc0] sm:$0xff]
      %v1445 = vld [vmem:[%s16 + $0xc8] sm:$0xff]
      %v1446 = vld [vmem:[%s16 + $0xd0] sm:$0xff]
      %v1447 = vld [vmem:[%s16 + $0xd8] sm:$0xff]
      %v1448 = vld [vmem:[%s16 + $0xe0] sm:$0xff]
      %v1449 = vld [vmem:[%s16 + $0xe8] sm:$0xff]
      %v1450 = vld [vmem:[%s16 + $0xf0] sm:$0xff]
      %v1451 = vld [vmem:[%s16 + $0xf8] sm:$0xff]
      %1452 = vst [vmem:[#allocation2] sm:$0xff] %v1416
      %1453 = vst [vmem:[#allocation2 + $0x8] sm:$0xff] %v1417
      %1454 = vst.msk [vmem:[#allocation2 + $0x10] sm:$0xff] %vm838, 0.0
      %v1455 = vld [vmem:[#allocation2] sm:$0xff]
      %v1456 = vld [vmem:[#allocation2 + $0x8] sm:$0xff]
      %v1457 = vld [vmem:[#allocation2 + $0x10] sm:$0xff]
      %1461 = vrot.lane.b32.xlu0 %v1455, 127
      %v1462 = vpop.permute.xlu0 %1461
      %1463 = vrot.lane.b32.xlu0 %v1456, 127
      %v1464 = vpop.permute.xlu0 %1463
      %1465 = vrot.lane.b32.xlu0 %v1457, 127
      %v1466 = vpop.permute.xlu0 %1465
      %v1467 = vsel %vm718, %v1462, %v1464
      %v1468 = vsel %vm718, %v1464, %v1466
      %v1471 = vmax.f32 %v1416, %v1467
      %v1472 = vmax.f32 %v1417, %v1468
      %v1474 = vmax.f32 %v1455, %v1467
      %v1475 = vmax.f32 %v1456, %v1468
      %v1476 = vmax.f32 %v1457, %v1466
      %1480 = vrot.lane.b32.xlu0 %v1474, 112
      %v1481 = vpop.permute.xlu0 %1480
      %1482 = vrot.lane.b32.xlu0 %v1475, 112
      %v1483 = vpop.permute.xlu0 %1482
      %1484 = vrot.lane.b32.xlu0 %v1476, 112
      %v1485 = vpop.permute.xlu0 %1484
      %v1486 = vsel %vm805, %v1481, %v1483
      %v1487 = vsel %vm805, %v1483, %v1485
      %v1490 = vmax.f32 %v1471, %v1486
      %v1491 = vmax.f32 %v1472, %v1487
      %1492 = vmatprep.subr.mxu0 0.0
      %1493 = vmatpush1.msra.mxu0 %v1435
      %1494 = vmatprep.subr.mxu0 0.0
      %1495 = vmatpush1.msra.mxu0 %v1434
      %1496 = vmatprep.subr.mxu0 0.0
      %1497 = vmatpush1.msra.mxu0 %v1433
      %1498 = vmatprep.subr.mxu0 0.0
      %1499 = vmatpush1.msra.mxu0 %v1432
      %1500 = vmatprep.subr.mxu0 0.0
      %1501 = vmatpush1.msra.mxu0 %v1431
      %1502 = vmatprep.subr.mxu0 0.0
      %1503 = vmatpush1.msra.mxu0 %v1430
      %1504 = vmatprep.subr.mxu0 0.0
      %1505 = vmatpush1.msra.mxu0 %v1429
      %1506 = vmatprep.subr.mxu0 0.0
      %1507 = vmatpush1.msra.mxu0 %v1428
      %1508 = vmatprep.subr.mxu0 0.0
      %1509 = vmatpush1.msra.mxu0 %v1427
      %1510 = vmatprep.subr.mxu0 0.0
      %1511 = vmatpush1.msra.mxu0 %v1426
      %1512 = vmatprep.subr.mxu0 0.0
      %1513 = vmatpush1.msra.mxu0 %v1425
      %1514 = vmatprep.subr.mxu0 0.0
      %1515 = vmatpush1.msra.mxu0 %v1424
      %1516 = vmatprep.subr.mxu0 0.0
      %1517 = vmatpush1.msra.mxu0 %v1423
      %1518 = vmatprep.subr.mxu0 0.0
      %1519 = vmatpush1.msra.mxu0 %v1422
      %1520 = vmatprep.subr.mxu0 0.0
      %1521 = vmatpush1.msra.mxu0 %v1421
      %1522 = vmatprep.subr.mxu0 0.0
      %1523 = vmatpush1.msra.mxu0 %v1420
      %1524 = vmatprep.subr.mxu0 0.0
      %1525 = vmatpush2.msra.mxu0 %v1451
      %1526 = vmatprep.subr.mxu0 0.0
      %1527 = vmatpush2.msra.mxu0 %v1450
      %1528 = vmatprep.subr.mxu0 0.0
      %1529 = vmatpush2.msra.mxu0 %v1449
      %1530 = vmatprep.subr.mxu0 0.0
      %1531 = vmatpush2.msra.mxu0 %v1448
      %1532 = vmatprep.subr.mxu0 0.0
      %1533 = vmatpush2.msra.mxu0 %v1447
      %1534 = vmatprep.subr.mxu0 0.0
      %1535 = vmatpush2.msra.mxu0 %v1446
      %1536 = vmatprep.subr.mxu0 0.0
      %1537 = vmatpush2.msra.mxu0 %v1445
      %1538 = vmatprep.subr.mxu0 0.0
      %1539 = vmatpush2.msra.mxu0 %v1444
      %1540 = vmatprep.subr.mxu0 0.0
      %1541 = vmatpush2.msra.mxu0 %v1443
      %1542 = vmatprep.subr.mxu0 0.0
      %1543 = vmatpush2.msra.mxu0 %v1442
      %1544 = vmatprep.subr.mxu0 0.0
      %1545 = vmatpush2.msra.mxu0 %v1441
      %1546 = vmatprep.subr.mxu0 0.0
      %1547 = vmatpush2.msra.mxu0 %v1440
      %1548 = vmatprep.subr.mxu0 0.0
      %1549 = vmatpush2.msra.mxu0 %v1439
      %1550 = vmatprep.subr.mxu0 0.0
      %1551 = vmatpush2.msra.mxu0 %v1438
      %1552 = vmatprep.subr.mxu0 0.0
      %1553 = vmatpush2.msra.mxu0 %v1437
      %1554 = vmatprep.subr.mxu0 0.0
      %1555 = vmatpush2.msra.mxu0 %v1436
      %1556 = vmatprep.mubr.f32.mxu0 %v1491
      %1557 = vmatmul.mubr.f32.gmra.mxu0 %v1490
      %v1558 = vpop.f32.mrf.mxu0
      %v1559 = vadd.f32 0.0, %v1558
      %v1560 = vpop.f32.mrf.mxu0
      %1561 = vdwg.mxu0
      %v1562 = vld [vmem:[%s5] sm:$0xff]
      %v1563 = vld [vmem:[%s5 + $0x8] sm:$0xff]
      %v1564 = vld [vmem:[%s6] sm:$0xff]
      %v1565 = vld [vmem:[%s6 + $0x8] sm:$0xff]
      %v1566 = vld [vmem:[%s14] sm:$0x3]
      %vm1567 = vcmask 72704
      %1568 = vst.msk [vmem:[#allocation2] sm:$0xff] %vm1567, 0.0
      %vm1569 = vcmask 671304
      %1570 = vst.msk [vmem:[#allocation2] sm:$0xff] %vm1569, 0.0
      %1572 = vrot.lane.b32.xlu0 %v1559, 9
      %v1573 = vpop.permute.xlu0 %1572
      %vm1575 = vcmask 597064
      %1576 = vst.msk [vmem:[#allocation2] sm:$0xff] %vm1575, %v1573
      %v1577 = vld [vmem:[#allocation2] sm:$0xff]
      %v1578 = vlaneseq
      %v1579 = vshrl.u32 %v1578, 7
      %v1580 = vsub.s32 0, %v1579
      %v1581 = vrot.slane %v1566, %v1580
      %v1582 = vmul.f32 %v1577, %v1581
      %vm1583 = vcmask 523264
      %1584 = vst.msk [vmem:[#allocation3] sm:$0xff] %vm1583, %v1582
      %v1585 = vld [vmem:[#allocation2] sm:$0xff]
      %1587 = vrot.lane.b32.xlu0 %v1585, 127
      %v1588 = vpop.permute.xlu0 %1587
      %1590 = vst.msk [vmem:[#allocation3 + $0x10] sm:$0xff] %vm1583, %v1588
      %v1591 = vld [vmem:[#allocation2] sm:$0xff]
      %v1592 = vlaneseq
      %v1593 = vshrl.u32 %v1592, 7
      %v1594 = vsub.s32 1, %v1593
      %v1595 = vrot.slane %v1566, %v1594
      %1597 = vrot.lane.b32.xlu0 %v1595, 2
      %v1598 = vpop.permute.xlu0 %1597
      %v1600 = vmul.f32 %v1591, %v1598
      %1602 = vrot.lane.b32.xlu0 %v1600, 126
      %v1603 = vpop.permute.xlu0 %1602
      %1605 = vst.msk [vmem:[#allocation3 + $0x20] sm:$0xff] %vm1583, %v1603
      %v1606 = vld [vmem:[#allocation2] sm:$0xff]
      %1608 = vrot.lane.b32.xlu0 %v1581, 8
      %v1609 = vpop.permute.xlu0 %1608
      %v1611 = vmul.f32 %v1606, %v1609
      %1613 = vrot.lane.b32.xlu0 %v1611, 120
      %v1614 = vpop.permute.xlu0 %1613
      %1616 = vst.msk [vmem:[#allocation3 + $0x30] sm:$0xff] %vm1583, %v1614
      %v1617 = vld [vmem:[#allocation2] sm:$0xff]
      %1619 = vrot.lane.b32.xlu0 %v1617, 119
      %v1620 = vpop.permute.xlu0 %1619
      %1622 = vst.msk [vmem:[#allocation3 + $0x40] sm:$0xff] %vm1583, %v1620
      %v1623 = vld [vmem:[#allocation2] sm:$0xff]
      %1624 = vrot.lane.b32.xlu0 %v1595, 10
      %v1625 = vpop.permute.xlu0 %1624
      %v1627 = vmul.f32 %v1623, %v1625
      %1629 = vrot.lane.b32.xlu0 %v1627, 118
      %v1630 = vpop.permute.xlu0 %1629
      %1632 = vst.msk [vmem:[#allocation3 + $0x50] sm:$0xff] %vm1583, %v1630
      %v1633 = vld [vmem:[#allocation2] sm:$0xff]
      %1634 = vrot.lane.b32.xlu0 %v1581, 16
      %v1635 = vpop.permute.xlu0 %1634
      %v1637 = vmul.f32 %v1633, %v1635
      %1639 = vrot.lane.b32.xlu0 %v1637, 112
      %v1640 = vpop.permute.xlu0 %1639
      %1642 = vst.msk [vmem:[#allocation3 + $0x60] sm:$0xff] %vm1583, %v1640
      %v1643 = vld [vmem:[#allocation2] sm:$0xff]
      %1645 = vrot.lane.b32.xlu0 %v1643, 111
      %v1646 = vpop.permute.xlu0 %1645
      %1648 = vst.msk [vmem:[#allocation3 + $0x70] sm:$0xff] %vm1583, %v1646
      %v1649 = vld [vmem:[#allocation2] sm:$0xff]
      %1650 = vrot.lane.b32.xlu0 %v1595, 18
      %v1651 = vpop.permute.xlu0 %1650
      %v1653 = vmul.f32 %v1649, %v1651
      %1655 = vrot.lane.b32.xlu0 %v1653, 110
      %v1656 = vpop.permute.xlu0 %1655
      %1658 = vst.msk [vmem:[#allocation3 + $0x80] sm:$0xff] %vm1583, %v1656
      %v1659 = vld [vmem:[#allocation3] sm:$0xff]
      %v1660 = vld [vmem:[#allocation3 + $0x10] sm:$0xff]
      %v1661 = vld [vmem:[#allocation3 + $0x20] sm:$0xff]
      %v1662 = vld [vmem:[#allocation3 + $0x30] sm:$0xff]
      %v1663 = vld [vmem:[#allocation3 + $0x40] sm:$0xff]
      %v1664 = vld [vmem:[#allocation3 + $0x50] sm:$0xff]
      %v1665 = vld [vmem:[#allocation3 + $0x60] sm:$0xff]
      %v1666 = vld [vmem:[#allocation3 + $0x70] sm:$0xff]
      %v1667 = vld [vmem:[#allocation3 + $0x80] sm:$0xff]
      %1669 = vset.pattern.permute.xlu0 0
      %1670 = vperm.xlu0 %1669, %v1564
      %v1671 = vpop.permute.xlu0 %1670
      %1674 = vset.pattern.permute.xlu0 0
      %1675 = vperm.xlu0 %1674, %v1565
      %v1676 = vpop.permute.xlu0 %1675
      %v1679 = vsel %vm1339, %v1562, 0
      %v1682 = vsel %vm1339, %v1563, 0
      %1684 = vmatprep.subr.mxu0 0.0
      %1685 = vmatpush1.msra.mxu0 0.0
      %1686 = vmatprep.subr.mxu0 0.0
      %1687 = vmatpush1.msra.mxu0 0.0
      %1688 = vmatprep.subr.mxu0 0.0
      %1689 = vmatpush1.msra.mxu0 0.0
      %1690 = vmatprep.subr.mxu0 0.0
      %1691 = vmatpush1.msra.mxu0 0.0
      %1692 = vmatprep.subr.mxu0 0.0
      %1693 = vmatpush1.msra.mxu0 0.0
      %1694 = vmatprep.subr.mxu0 0.0
      %1695 = vmatpush1.msra.mxu0 0.0
      %1696 = vmatprep.subr.mxu0 0.0
      %1697 = vmatpush1.msra.mxu0 0.0
      %1698 = vmatprep.subr.mxu0 0.0
      %1699 = vmatpush1.msra.mxu0 %v1667
      %1700 = vmatprep.subr.mxu0 0.0
      %1701 = vmatpush1.msra.mxu0 %v1666
      %1702 = vmatprep.subr.mxu0 0.0
      %1703 = vmatpush1.msra.mxu0 %v1665
      %1704 = vmatprep.subr.mxu0 0.0
      %1705 = vmatpush1.msra.mxu0 %v1664
      %1706 = vmatprep.subr.mxu0 0.0
      %1707 = vmatpush1.msra.mxu0 %v1663
      %1708 = vmatprep.subr.mxu0 0.0
      %1709 = vmatpush1.msra.mxu0 %v1662
      %1710 = vmatprep.subr.mxu0 0.0
      %1711 = vmatpush1.msra.mxu0 %v1661
      %1712 = vmatprep.subr.mxu0 0.0
      %1713 = vmatpush1.msra.mxu0 %v1660
      %1714 = vmatprep.subr.mxu0 0.0
      %1715 = vmatpush1.msra.mxu0 %v1659
      %1716 = vmatprep.subr.mxu0 0.0
      %1717 = vmatpush2.msra.mxu0 0.0
      %1718 = vmatprep.subr.mxu0 0.0
      %1719 = vmatpush2.msra.mxu0 0.0
      %1720 = vmatprep.subr.mxu0 0.0
      %1721 = vmatpush2.msra.mxu0 0.0
      %1722 = vmatprep.subr.mxu0 0.0
      %1723 = vmatpush2.msra.mxu0 0.0
      %1724 = vmatprep.subr.mxu0 0.0
      %1725 = vmatpush2.msra.mxu0 0.0
      %1726 = vmatprep.subr.mxu0 0.0
      %1727 = vmatpush2.msra.mxu0 0.0
      %1728 = vmatprep.subr.mxu0 0.0
      %1729 = vmatpush2.msra.mxu0 0.0
      %1730 = vmatprep.subr.mxu0 0.0
      %1731 = vmatpush2.msra.mxu0 0.0
      %1732 = vmatprep.subr.mxu0 0.0
      %1733 = vmatpush2.msra.mxu0 0.0
      %1734 = vmatprep.subr.mxu0 0.0
      %1735 = vmatpush2.msra.mxu0 0.0
      %1736 = vmatprep.subr.mxu0 0.0
      %1737 = vmatpush2.msra.mxu0 0.0
      %1738 = vmatprep.subr.mxu0 0.0
      %1739 = vmatpush2.msra.mxu0 0.0
      %1740 = vmatprep.subr.mxu0 0.0
      %1741 = vmatpush2.msra.mxu0 0.0
      %1742 = vmatprep.subr.mxu0 0.0
      %1743 = vmatpush2.msra.mxu0 0.0
      %1744 = vmatprep.subr.mxu0 0.0
      %1745 = vmatpush2.msra.mxu0 0.0
      %1746 = vmatprep.subr.mxu0 0.0
      %1747 = vmatpush2.msra.mxu0 0.0
      %1748 = vmatprep.mubr.f32.mxu0 0.0
      %1749 = vmatmul.mubr.f32.gmra.mxu0 %v1679
      %v1750 = vpop.f32.mrf.mxu0
      %v1751 = vadd.f32 %v1671, %v1750
      %v1752 = vpop.f32.mrf.mxu0
      %1753 = vmatprep.mubr.f32.mxu0 0.0
      %1754 = vmatmul.mubr.f32.gmra.mxu0 %v1682
      %v1755 = vpop.f32.mrf.mxu0
      %v1756 = vadd.f32 %v1676, %v1755
      %v1757 = vpop.f32.mrf.mxu0
      %1758 = vdwg.mxu0
      %v1759 = vmul.f32 %v1751, 0.01
      %v1760 = vmul.f32 %v1756, 0.01
      %v1761 = vmax.f32 %v1751, %v1759
      %v1762 = vmax.f32 %v1756, %v1760
      %v1763 = vld [vmem:[%s7] sm:$0xff]
      %v1764 = vld [vmem:[%s7 + $0x8] sm:$0xff]
      %v1765 = vld [vmem:[%s7 + $0x10] sm:$0xff]
      %v1766 = vld [vmem:[%s7 + $0x18] sm:$0xff]
      %v1767 = vld [vmem:[%s8] sm:$0xff]
      %v1768 = vld [vmem:[%s8 + $0x8] sm:$0xff]
      %v1769 = vld [vmem:[%s14] sm:$0x3]
      %1770 = vst.msk [vmem:[#allocation2] sm:$0xff] %vm1567, 0.0
      %1771 = vst.msk [vmem:[#allocation2 + $0x18] sm:$0xff] %vm1567, 0.0
      %1772 = vst.msk [vmem:[#allocation2] sm:$0xff] %vm1569, 0.0
      %1773 = vst.msk [vmem:[#allocation2 + $0x18] sm:$0xff] %vm1569, 0.0
      %1776 = vrot.lane.b32.xlu0 %v1761, 9
      %v1777 = vpop.permute.xlu0 %1776
      %1778 = vrot.lane.b32.xlu0 %v1762, 9
      %v1779 = vpop.permute.xlu0 %1778
      %1782 = vst.msk [vmem:[#allocation2] sm:$0xff] %vm1575, %v1777
      %1783 = vst.msk [vmem:[#allocation2 + $0x18] sm:$0xff] %vm1575, %v1779
      %v1784 = vld [vmem:[#allocation2] sm:$0xff]
      %v1785 = vld [vmem:[#allocation2 + $0x18] sm:$0xff]
      %v1786 = vlaneseq
      %v1787 = vshrl.u32 %v1786, 7
      %v1788 = vsub.s32 0, %v1787
      %v1789 = vrot.slane %v1769, %v1788
      %v1790 = vmul.f32 %v1784, %v1789
      %v1791 = vmul.f32 %v1785, %v1789
      %1792 = vst.msk [vmem:[#allocation3] sm:$0xff] %vm1583, %v1790
      %1793 = vst.msk [vmem:[#allocation3 + $0x10] sm:$0xff] %vm1583, %v1791
      %v1794 = vld [vmem:[#allocation2] sm:$0xff]
      %v1795 = vld [vmem:[#allocation2 + $0x18] sm:$0xff]
      %1798 = vrot.lane.b32.xlu0 %v1794, 127
      %v1799 = vpop.permute.xlu0 %1798
      %1800 = vrot.lane.b32.xlu0 %v1795, 127
      %v1801 = vpop.permute.xlu0 %1800
      %1804 = vst.msk [vmem:[#allocation3 + $0x20] sm:$0xff] %vm1583, %v1799
      %1805 = vst.msk [vmem:[#allocation3 + $0x30] sm:$0xff] %vm1583, %v1801
      %v1806 = vld [vmem:[#allocation2] sm:$0xff]
      %v1807 = vld [vmem:[#allocation2 + $0x18] sm:$0xff]
      %v1808 = vlaneseq
      %v1809 = vshrl.u32 %v1808, 7
      %v1810 = vsub.s32 1, %v1809
      %v1811 = vrot.slane %v1769, %v1810
      %1813 = vrot.lane.b32.xlu0 %v1811, 2
      %v1814 = vpop.permute.xlu0 %1813
      %v1816 = vmul.f32 %v1806, %v1814
      %v1817 = vmul.f32 %v1807, %v1814
      %1820 = vrot.lane.b32.xlu0 %v1816, 126
      %v1821 = vpop.permute.xlu0 %1820
      %1822 = vrot.lane.b32.xlu0 %v1817, 126
      %v1823 = vpop.permute.xlu0 %1822
      %1826 = vst.msk [vmem:[#allocation3 + $0x40] sm:$0xff] %vm1583, %v1821
      %1827 = vst.msk [vmem:[#allocation3 + $0x50] sm:$0xff] %vm1583, %v1823
      %v1828 = vld [vmem:[#allocation2] sm:$0xff]
      %v1829 = vld [vmem:[#allocation2 + $0x18] sm:$0xff]
      %1831 = vrot.lane.b32.xlu0 %v1789, 8
      %v1832 = vpop.permute.xlu0 %1831
      %v1834 = vmul.f32 %v1828, %v1832
      %v1835 = vmul.f32 %v1829, %v1832
      %1838 = vrot.lane.b32.xlu0 %v1834, 120
      %v1839 = vpop.permute.xlu0 %1838
      %1840 = vrot.lane.b32.xlu0 %v1835, 120
      %v1841 = vpop.permute.xlu0 %1840
      %1844 = vst.msk [vmem:[#allocation3 + $0x60] sm:$0xff] %vm1583, %v1839
      %1845 = vst.msk [vmem:[#allocation3 + $0x70] sm:$0xff] %vm1583, %v1841
      %v1846 = vld [vmem:[#allocation2] sm:$0xff]
      %v1847 = vld [vmem:[#allocation2 + $0x18] sm:$0xff]
      %1850 = vrot.lane.b32.xlu0 %v1846, 119
      %v1851 = vpop.permute.xlu0 %1850
      %1852 = vrot.lane.b32.xlu0 %v1847, 119
      %v1853 = vpop.permute.xlu0 %1852
      %1856 = vst.msk [vmem:[#allocation3 + $0x80] sm:$0xff] %vm1583, %v1851
      %1857 = vst.msk [vmem:[#allocation3 + $0x90] sm:$0xff] %vm1583, %v1853
      %v1858 = vld [vmem:[#allocation2] sm:$0xff]
      %v1859 = vld [vmem:[#allocation2 + $0x18] sm:$0xff]
      %1860 = vrot.lane.b32.xlu0 %v1811, 10
      %v1861 = vpop.permute.xlu0 %1860
      %v1863 = vmul.f32 %v1858, %v1861
      %v1864 = vmul.f32 %v1859, %v1861
      %1867 = vrot.lane.b32.xlu0 %v1863, 118
      %v1868 = vpop.permute.xlu0 %1867
      %1869 = vrot.lane.b32.xlu0 %v1864, 118
      %v1870 = vpop.permute.xlu0 %1869
      %1873 = vst.msk [vmem:[#allocation3 + $0xa0] sm:$0xff] %vm1583, %v1868
      %1874 = vst.msk [vmem:[#allocation3 + $0xb0] sm:$0xff] %vm1583, %v1870
      %v1875 = vld [vmem:[#allocation2] sm:$0xff]
      %v1876 = vld [vmem:[#allocation2 + $0x18] sm:$0xff]
      %1877 = vrot.lane.b32.xlu0 %v1789, 16
      %v1878 = vpop.permute.xlu0 %1877
      %v1880 = vmul.f32 %v1875, %v1878
      %v1881 = vmul.f32 %v1876, %v1878
      %1884 = vrot.lane.b32.xlu0 %v1880, 112
      %v1885 = vpop.permute.xlu0 %1884
      %1886 = vrot.lane.b32.xlu0 %v1881, 112
      %v1887 = vpop.permute.xlu0 %1886
      %1890 = vst.msk [vmem:[#allocation3 + $0xc0] sm:$0xff] %vm1583, %v1885
      %1891 = vst.msk [vmem:[#allocation3 + $0xd0] sm:$0xff] %vm1583, %v1887
      %v1892 = vld [vmem:[#allocation2] sm:$0xff]
      %v1893 = vld [vmem:[#allocation2 + $0x18] sm:$0xff]
      %1896 = vrot.lane.b32.xlu0 %v1892, 111
      %v1897 = vpop.permute.xlu0 %1896
      %1898 = vrot.lane.b32.xlu0 %v1893, 111
      %v1899 = vpop.permute.xlu0 %1898
      %1902 = vst.msk [vmem:[#allocation3 + $0xe0] sm:$0xff] %vm1583, %v1897
      %1903 = vst.msk [vmem:[#allocation3 + $0xf0] sm:$0xff] %vm1583, %v1899
      %v1904 = vld [vmem:[#allocation2] sm:$0xff]
      %v1905 = vld [vmem:[#allocation2 + $0x18] sm:$0xff]
      %1906 = vrot.lane.b32.xlu0 %v1811, 18
      %v1907 = vpop.permute.xlu0 %1906
      %v1909 = vmul.f32 %v1904, %v1907
      %v1910 = vmul.f32 %v1905, %v1907
      %1913 = vrot.lane.b32.xlu0 %v1909, 110
      %v1914 = vpop.permute.xlu0 %1913
      %1915 = vrot.lane.b32.xlu0 %v1910, 110
      %v1916 = vpop.permute.xlu0 %1915
      %1919 = vst.msk [vmem:[#allocation3 + $0x100] sm:$0xff] %vm1583, %v1914
      %1920 = vst.msk [vmem:[#allocation3 + $0x110] sm:$0xff] %vm1583, %v1916
      %v1921 = vld [vmem:[#allocation3] sm:$0xff]
      %v1922 = vld [vmem:[#allocation3 + $0x10] sm:$0xff]
      %v1923 = vld [vmem:[#allocation3 + $0x20] sm:$0xff]
      %v1924 = vld [vmem:[#allocation3 + $0x30] sm:$0xff]
      %v1925 = vld [vmem:[#allocation3 + $0x40] sm:$0xff]
      %v1926 = vld [vmem:[#allocation3 + $0x50] sm:$0xff]
      %v1927 = vld [vmem:[#allocation3 + $0x60] sm:$0xff]
      %v1928 = vld [vmem:[#allocation3 + $0x70] sm:$0xff]
      %v1929 = vld [vmem:[#allocation3 + $0x80] sm:$0xff]
      %v1930 = vld [vmem:[#allocation3 + $0x90] sm:$0xff]
      %v1931 = vld [vmem:[#allocation3 + $0xa0] sm:$0xff]
      %v1932 = vld [vmem:[#allocation3 + $0xb0] sm:$0xff]
      %v1933 = vld [vmem:[#allocation3 + $0xc0] sm:$0xff]
      %v1934 = vld [vmem:[#allocation3 + $0xd0] sm:$0xff]
      %v1935 = vld [vmem:[#allocation3 + $0xe0] sm:$0xff]
      %v1936 = vld [vmem:[#allocation3 + $0xf0] sm:$0xff]
      %v1937 = vld [vmem:[#allocation3 + $0x100] sm:$0xff]
      %v1938 = vld [vmem:[#allocation3 + $0x110] sm:$0xff]
      %1940 = vset.pattern.permute.xlu0 0
      %1941 = vperm.xlu0 %1940, %v1767
      %v1942 = vpop.permute.xlu0 %1941
      %1945 = vset.pattern.permute.xlu0 0
      %1946 = vperm.xlu0 %1945, %v1768
      %v1947 = vpop.permute.xlu0 %1946
      %v1950 = vsel %vm785, %v1764, 0
      %v1953 = vsel %vm785, %v1766, 0
      %1955 = vmatprep.subr.mxu0 0.0
      %1956 = vmatpush1.msra.mxu0 %v1936
      %1957 = vmatprep.subr.mxu0 0.0
      %1958 = vmatpush1.msra.mxu0 %v1935
      %1959 = vmatprep.subr.mxu0 0.0
      %1960 = vmatpush1.msra.mxu0 %v1934
      %1961 = vmatprep.subr.mxu0 0.0
      %1962 = vmatpush1.msra.mxu0 %v1933
      %1963 = vmatprep.subr.mxu0 0.0
      %1964 = vmatpush1.msra.mxu0 %v1932
      %1965 = vmatprep.subr.mxu0 0.0
      %1966 = vmatpush1.msra.mxu0 %v1931
      %1967 = vmatprep.subr.mxu0 0.0
      %1968 = vmatpush1.msra.mxu0 %v1930
      %1969 = vmatprep.subr.mxu0 0.0
      %1970 = vmatpush1.msra.mxu0 %v1929
      %1971 = vmatprep.subr.mxu0 0.0
      %1972 = vmatpush1.msra.mxu0 %v1928
      %1973 = vmatprep.subr.mxu0 0.0
      %1974 = vmatpush1.msra.mxu0 %v1927
      %1975 = vmatprep.subr.mxu0 0.0
      %1976 = vmatpush1.msra.mxu0 %v1926
      %1977 = vmatprep.subr.mxu0 0.0
      %1978 = vmatpush1.msra.mxu0 %v1925
      %1979 = vmatprep.subr.mxu0 0.0
      %1980 = vmatpush1.msra.mxu0 %v1924
      %1981 = vmatprep.subr.mxu0 0.0
      %1982 = vmatpush1.msra.mxu0 %v1923
      %1983 = vmatprep.subr.mxu0 0.0
      %1984 = vmatpush1.msra.mxu0 %v1922
      %1985 = vmatprep.subr.mxu0 0.0
      %1986 = vmatpush1.msra.mxu0 %v1921
      %1987 = vmatprep.subr.mxu0 0.0
      %1988 = vmatpush2.msra.mxu0 0.0
      %1989 = vmatprep.subr.mxu0 0.0
      %1990 = vmatpush2.msra.mxu0 0.0
      %1991 = vmatprep.subr.mxu0 0.0
      %1992 = vmatpush2.msra.mxu0 0.0
      %1993 = vmatprep.subr.mxu0 0.0
      %1994 = vmatpush2.msra.mxu0 0.0
      %1995 = vmatprep.subr.mxu0 0.0
      %1996 = vmatpush2.msra.mxu0 0.0
      %1997 = vmatprep.subr.mxu0 0.0
      %1998 = vmatpush2.msra.mxu0 0.0
      %1999 = vmatprep.subr.mxu0 0.0
      %2000 = vmatpush2.msra.mxu0 0.0
      %2001 = vmatprep.subr.mxu0 0.0
      %2002 = vmatpush2.msra.mxu0 0.0
      %2003 = vmatprep.subr.mxu0 0.0
      %2004 = vmatpush2.msra.mxu0 0.0
      %2005 = vmatprep.subr.mxu0 0.0
      %2006 = vmatpush2.msra.mxu0 0.0
      %2007 = vmatprep.subr.mxu0 0.0
      %2008 = vmatpush2.msra.mxu0 0.0
      %2009 = vmatprep.subr.mxu0 0.0
      %2010 = vmatpush2.msra.mxu0 0.0
      %2011 = vmatprep.subr.mxu0 0.0
      %2012 = vmatpush2.msra.mxu0 0.0
      %2013 = vmatprep.subr.mxu0 0.0
      %2014 = vmatpush2.msra.mxu0 0.0
      %2015 = vmatprep.subr.mxu0 0.0
      %2016 = vmatpush2.msra.mxu0 %v1938
      %2017 = vmatprep.subr.mxu0 0.0
      %2018 = vmatpush2.msra.mxu0 %v1937
      %2019 = vmatprep.mubr.f32.mxu0 %v1950
      %2020 = vmatmul.mubr.f32.gmra.mxu0 %v1763
      %v2021 = vpop.f32.mrf.mxu0
      %v2022 = vadd.f32 %v1942, %v2021
      %v2023 = vpop.f32.mrf.mxu0
      %2024 = vmatprep.mubr.f32.mxu0 %v1953
      %2025 = vmatmul.mubr.f32.gmra.mxu0 %v1765
      %v2026 = vpop.f32.mrf.mxu0
      %v2027 = vadd.f32 %v1947, %v2026
      %v2028 = vpop.f32.mrf.mxu0
      %2029 = vdwg.mxu0
      %v2030 = vmul.f32 %v2022, 0.01
      %v2031 = vmul.f32 %v2027, 0.01
      %v2032 = vmax.f32 %v2022, %v2030
      %v2033 = vmax.f32 %v2027, %v2031
      %2034 = vst.msk [vmem:[%s649] sm:$0xff] %vm1583, %v2032
      %2035 = vst.msk [vmem:[%s649 + $0x8] sm:$0xff] %vm1583, %v2033
      %v2036 = vld [vmem:[%s17] sm:$0xff]
      %v2037 = vld [vmem:[%s17 + $0x8] sm:$0xff]
      %v2038 = vld [vmem:[%s17 + $0x10] sm:$0xff]
      %v2039 = vld [vmem:[%s17 + $0x18] sm:$0xff]
      %v2040 = vld [vmem:[%s17 + $0x20] sm:$0xff]
      %v2041 = vld [vmem:[%s17 + $0x28] sm:$0xff]
      %v2042 = vld [vmem:[%s17 + $0x30] sm:$0xff]
      %v2043 = vld [vmem:[%s17 + $0x38] sm:$0xff]
      %2044 = vst.msk [vmem:[#allocation2] sm:$0xff] %vm1583, %v2032
      %2045 = vst.msk [vmem:[#allocation2 + $0x18] sm:$0xff] %vm1583, %v2033
      %vm2046 = vcmask 605696
      %2047 = vst.msk [vmem:[#allocation2] sm:$0xff] %vm2046, 0.0
      %2048 = vst.msk [vmem:[#allocation2 + $0x18] sm:$0xff] %vm2046, 0.0
      %v2049 = vld [vmem:[#allocation2] sm:$0xff]
      %v2050 = vld [vmem:[#allocation2 + $0x18] sm:$0xff]
      %2053 = vrot.lane.b32.xlu0 %v2049, 127
      %v2054 = vpop.permute.xlu0 %2053
      %2055 = vrot.lane.b32.xlu0 %v2050, 127
      %v2056 = vpop.permute.xlu0 %2055
      %v2059 = vmax.f32 %v2032, %v2054
      %v2060 = vmax.f32 %v2033, %v2056
      %v2061 = vmax.f32 %v2049, %v2054
      %v2062 = vmax.f32 %v2050, %v2056
      %2065 = vrot.lane.b32.xlu0 %v2061, 120
      %v2066 = vpop.permute.xlu0 %2065
      %2067 = vrot.lane.b32.xlu0 %v2062, 120
      %v2068 = vpop.permute.xlu0 %2067
      %v2071 = vmax.f32 %v2059, %v2066
      %v2072 = vmax.f32 %v2060, %v2068
      %v2074 = vsel %vm1583, %v2071, 0
      %v2077 = vsel %vm1583, %v2072, 0
      %2079 = vmatprep.subr.mxu0 0.0
      %2080 = vmatpush1.msra.mxu0 0.0
      %2081 = vmatprep.subr.mxu0 0.0
      %2082 = vmatpush1.msra.mxu0 0.0
      %2083 = vmatprep.subr.mxu0 0.0
      %2084 = vmatpush1.msra.mxu0 0.0
      %2085 = vmatprep.subr.mxu0 0.0
      %2086 = vmatpush1.msra.mxu0 0.0
      %2087 = vmatprep.subr.mxu0 0.0
      %2088 = vmatpush1.msra.mxu0 0.0
      %2089 = vmatprep.subr.mxu0 0.0
      %2090 = vmatpush1.msra.mxu0 0.0
      %2091 = vmatprep.subr.mxu0 0.0
      %2092 = vmatpush1.msra.mxu0 0.0
      %2093 = vmatprep.subr.mxu0 0.0
      %2094 = vmatpush1.msra.mxu0 0.0
      %2095 = vmatprep.subr.mxu0 0.0
      %2096 = vmatpush1.msra.mxu0 %v2043
      %2097 = vmatprep.subr.mxu0 0.0
      %2098 = vmatpush1.msra.mxu0 %v2042
      %2099 = vmatprep.subr.mxu0 0.0
      %2100 = vmatpush1.msra.mxu0 %v2041
      %2101 = vmatprep.subr.mxu0 0.0
      %2102 = vmatpush1.msra.mxu0 %v2040
      %2103 = vmatprep.subr.mxu0 0.0
      %2104 = vmatpush1.msra.mxu0 %v2039
      %2105 = vmatprep.subr.mxu0 0.0
      %2106 = vmatpush1.msra.mxu0 %v2038
      %2107 = vmatprep.subr.mxu0 0.0
      %2108 = vmatpush1.msra.mxu0 %v2037
      %2109 = vmatprep.subr.mxu0 0.0
      %2110 = vmatpush1.msra.mxu0 %v2036
      %2111 = vmatprep.subr.mxu0 0.0
      %2112 = vmatpush2.msra.mxu0 0.0
      %2113 = vmatprep.subr.mxu0 0.0
      %2114 = vmatpush2.msra.mxu0 0.0
      %2115 = vmatprep.subr.mxu0 0.0
      %2116 = vmatpush2.msra.mxu0 0.0
      %2117 = vmatprep.subr.mxu0 0.0
      %2118 = vmatpush2.msra.mxu0 0.0
      %2119 = vmatprep.subr.mxu0 0.0
      %2120 = vmatpush2.msra.mxu0 0.0
      %2121 = vmatprep.subr.mxu0 0.0
      %2122 = vmatpush2.msra.mxu0 0.0
      %2123 = vmatprep.subr.mxu0 0.0
      %2124 = vmatpush2.msra.mxu0 0.0
      %2125 = vmatprep.subr.mxu0 0.0
      %2126 = vmatpush2.msra.mxu0 0.0
      %2127 = vmatprep.subr.mxu0 0.0
      %2128 = vmatpush2.msra.mxu0 0.0
      %2129 = vmatprep.subr.mxu0 0.0
      %2130 = vmatpush2.msra.mxu0 0.0
      %2131 = vmatprep.subr.mxu0 0.0
      %2132 = vmatpush2.msra.mxu0 0.0
      %2133 = vmatprep.subr.mxu0 0.0
      %2134 = vmatpush2.msra.mxu0 0.0
      %2135 = vmatprep.subr.mxu0 0.0
      %2136 = vmatpush2.msra.mxu0 0.0
      %2137 = vmatprep.subr.mxu0 0.0
      %2138 = vmatpush2.msra.mxu0 0.0
      %2139 = vmatprep.subr.mxu0 0.0
      %2140 = vmatpush2.msra.mxu0 0.0
      %2141 = vmatprep.subr.mxu0 0.0
      %2142 = vmatpush2.msra.mxu0 0.0
      %2143 = vmatprep.mubr.f32.mxu0 0.0
      %2144 = vmatmul.mubr.f32.gmra.mxu0 %v2074
      %v2145 = vpop.f32.mrf.mxu0
      %v2146 = vadd.f32 0.0, %v2145
      %v2147 = vpop.f32.mrf.mxu0
      %2148 = vmatprep.mubr.f32.mxu0 0.0
      %2149 = vmatmul.mubr.f32.gmra.mxu0 %v2077
      %v2150 = vpop.f32.mrf.mxu0
      %v2151 = vadd.f32 0.0, %v2150
      %v2152 = vpop.f32.mrf.mxu0
      %2153 = vdwg.mxu0
      %v2154 = vld [vmem:[%s9] sm:$0xff]
      %v2155 = vld [vmem:[%s9 + $0x8] sm:$0xff]
      %v2156 = vld [vmem:[%s9 + $0x10] sm:$0xff]
      %v2157 = vld [vmem:[%s9 + $0x18] sm:$0xff]
      %v2158 = vld [vmem:[%s9 + $0x20] sm:$0xff]
      %v2159 = vld [vmem:[%s9 + $0x28] sm:$0xff]
      %v2160 = vld [vmem:[%s9 + $0x30] sm:$0xff]
      %v2161 = vld [vmem:[%s9 + $0x38] sm:$0xff]
      %v2162 = vld [vmem:[%s10] sm:$0xff]
      %v2163 = vld [vmem:[%s10 + $0x8] sm:$0xff]
      %v2164 = vld [vmem:[%s10 + $0x10] sm:$0xff]
      %v2165 = vld [vmem:[%s10 + $0x18] sm:$0xff]
      %v2166 = vld [vmem:[%s15] sm:$0x3]
      %vm2167 = vcmask 39936
      %2168 = vst.msk [vmem:[#allocation2] sm:$0xff] %vm2167, 0.0
      %2169 = vst.msk [vmem:[#allocation2 + $0x18] sm:$0xff] %vm2167, 0.0
      %vm2170 = vcmask 212136
      %2171 = vst.msk [vmem:[#allocation2] sm:$0xff] %vm2170, 0.0
      %2172 = vst.msk [vmem:[#allocation2 + $0x18] sm:$0xff] %vm2170, 0.0
      %2175 = vrot.lane.b32.xlu0 %v2146, 5
      %v2176 = vpop.permute.xlu0 %2175
      %2177 = vrot.lane.b32.xlu0 %v2151, 5
      %v2178 = vpop.permute.xlu0 %2177
      %vm2181 = vcmask 171048
      %2182 = vst.msk [vmem:[#allocation2] sm:$0xff] %vm2181, %v2176
      %2183 = vst.msk [vmem:[#allocation2 + $0x18] sm:$0xff] %vm2181, %v2178
      %v2184 = vld [vmem:[#allocation2] sm:$0xff]
      %v2185 = vld [vmem:[#allocation2 + $0x18] sm:$0xff]
      %v2186 = vlaneseq
      %v2187 = vshrl.u32 %v2186, 7
      %v2188 = vsub.s32 0, %v2187
      %v2189 = vrot.slane %v2166, %v2188
      %v2190 = vmul.f32 %v2184, %v2189
      %v2191 = vmul.f32 %v2185, %v2189
      %2192 = vst.msk [vmem:[#allocation3] sm:$0xff] %vm785, %v2190
      %2193 = vst.msk [vmem:[#allocation3 + $0x10] sm:$0xff] %vm785, %v2191
      %v2194 = vld [vmem:[#allocation2] sm:$0xff]
      %v2195 = vld [vmem:[#allocation2 + $0x18] sm:$0xff]
      %2198 = vrot.lane.b32.xlu0 %v2194, 127
      %v2199 = vpop.permute.xlu0 %2198
      %2200 = vrot.lane.b32.xlu0 %v2195, 127
      %v2201 = vpop.permute.xlu0 %2200
      %2204 = vst.msk [vmem:[#allocation3 + $0x20] sm:$0xff] %vm785, %v2199
      %2205 = vst.msk [vmem:[#allocation3 + $0x30] sm:$0xff] %vm785, %v2201
      %v2206 = vld [vmem:[#allocation2] sm:$0xff]
      %v2207 = vld [vmem:[#allocation2 + $0x18] sm:$0xff]
      %v2208 = vlaneseq
      %v2209 = vshrl.u32 %v2208, 7
      %v2210 = vsub.s32 1, %v2209
      %v2211 = vrot.slane %v2166, %v2210
      %2213 = vrot.lane.b32.xlu0 %v2211, 2
      %v2214 = vpop.permute.xlu0 %2213
      %v2216 = vmul.f32 %v2206, %v2214
      %v2217 = vmul.f32 %v2207, %v2214
      %2220 = vrot.lane.b32.xlu0 %v2216, 126
      %v2221 = vpop.permute.xlu0 %2220
      %2222 = vrot.lane.b32.xlu0 %v2217, 126
      %v2223 = vpop.permute.xlu0 %2222
      %2226 = vst.msk [vmem:[#allocation3 + $0x40] sm:$0xff] %vm785, %v2221
      %2227 = vst.msk [vmem:[#allocation3 + $0x50] sm:$0xff] %vm785, %v2223
      %v2228 = vld [vmem:[#allocation2] sm:$0xff]
      %v2229 = vld [vmem:[#allocation2 + $0x18] sm:$0xff]
      %2231 = vrot.lane.b32.xlu0 %v2189, 4
      %v2232 = vpop.permute.xlu0 %2231
      %v2234 = vmul.f32 %v2228, %v2232
      %v2235 = vmul.f32 %v2229, %v2232
      %2238 = vrot.lane.b32.xlu0 %v2234, 124
      %v2239 = vpop.permute.xlu0 %2238
      %2240 = vrot.lane.b32.xlu0 %v2235, 124
      %v2241 = vpop.permute.xlu0 %2240
      %2244 = vst.msk [vmem:[#allocation3 + $0x60] sm:$0xff] %vm785, %v2239
      %2245 = vst.msk [vmem:[#allocation3 + $0x70] sm:$0xff] %vm785, %v2241
      %v2246 = vld [vmem:[#allocation2] sm:$0xff]
      %v2247 = vld [vmem:[#allocation2 + $0x18] sm:$0xff]
      %2250 = vrot.lane.b32.xlu0 %v2246, 123
      %v2251 = vpop.permute.xlu0 %2250
      %2252 = vrot.lane.b32.xlu0 %v2247, 123
      %v2253 = vpop.permute.xlu0 %2252
      %2256 = vst.msk [vmem:[#allocation3 + $0x80] sm:$0xff] %vm785, %v2251
      %2257 = vst.msk [vmem:[#allocation3 + $0x90] sm:$0xff] %vm785, %v2253
      %v2258 = vld [vmem:[#allocation2] sm:$0xff]
      %v2259 = vld [vmem:[#allocation2 + $0x18] sm:$0xff]
      %2260 = vrot.lane.b32.xlu0 %v2211, 6
      %v2261 = vpop.permute.xlu0 %2260
      %v2263 = vmul.f32 %v2258, %v2261
      %v2264 = vmul.f32 %v2259, %v2261
      %2267 = vrot.lane.b32.xlu0 %v2263, 122
      %v2268 = vpop.permute.xlu0 %2267
      %2269 = vrot.lane.b32.xlu0 %v2264, 122
      %v2270 = vpop.permute.xlu0 %2269
      %2273 = vst.msk [vmem:[#allocation3 + $0xa0] sm:$0xff] %vm785, %v2268
      %2274 = vst.msk [vmem:[#allocation3 + $0xb0] sm:$0xff] %vm785, %v2270
      %v2275 = vld [vmem:[#allocation2] sm:$0xff]
      %v2276 = vld [vmem:[#allocation2 + $0x18] sm:$0xff]
      %2277 = vrot.lane.b32.xlu0 %v2189, 8
      %v2278 = vpop.permute.xlu0 %2277
      %v2280 = vmul.f32 %v2275, %v2278
      %v2281 = vmul.f32 %v2276, %v2278
      %2284 = vrot.lane.b32.xlu0 %v2280, 120
      %v2285 = vpop.permute.xlu0 %2284
      %2286 = vrot.lane.b32.xlu0 %v2281, 120
      %v2287 = vpop.permute.xlu0 %2286
      %2290 = vst.msk [vmem:[#allocation3 + $0xc0] sm:$0xff] %vm785, %v2285
      %2291 = vst.msk [vmem:[#allocation3 + $0xd0] sm:$0xff] %vm785, %v2287
      %v2292 = vld [vmem:[#allocation2] sm:$0xff]
      %v2293 = vld [vmem:[#allocation2 + $0x18] sm:$0xff]
      %2296 = vrot.lane.b32.xlu0 %v2292, 119
      %v2297 = vpop.permute.xlu0 %2296
      %2298 = vrot.lane.b32.xlu0 %v2293, 119
      %v2299 = vpop.permute.xlu0 %2298
      %2302 = vst.msk [vmem:[#allocation3 + $0xe0] sm:$0xff] %vm785, %v2297
      %2303 = vst.msk [vmem:[#allocation3 + $0xf0] sm:$0xff] %vm785, %v2299
      %v2304 = vld [vmem:[#allocation2] sm:$0xff]
      %v2305 = vld [vmem:[#allocation2 + $0x18] sm:$0xff]
      %2306 = vrot.lane.b32.xlu0 %v2211, 10
      %v2307 = vpop.permute.xlu0 %2306
      %v2309 = vmul.f32 %v2304, %v2307
      %v2310 = vmul.f32 %v2305, %v2307
      %2313 = vrot.lane.b32.xlu0 %v2309, 118
      %v2314 = vpop.permute.xlu0 %2313
      %2315 = vrot.lane.b32.xlu0 %v2310, 118
      %v2316 = vpop.permute.xlu0 %2315
      %2319 = vst.msk [vmem:[#allocation3 + $0x100] sm:$0xff] %vm785, %v2314
      %2320 = vst.msk [vmem:[#allocation3 + $0x110] sm:$0xff] %vm785, %v2316
      %v2321 = vld [vmem:[#allocation3] sm:$0xff]
      %v2322 = vld [vmem:[#allocation3 + $0x10] sm:$0xff]
      %v2323 = vld [vmem:[#allocation3 + $0x20] sm:$0xff]
      %v2324 = vld [vmem:[#allocation3 + $0x30] sm:$0xff]
      %v2325 = vld [vmem:[#allocation3 + $0x40] sm:$0xff]
      %v2326 = vld [vmem:[#allocation3 + $0x50] sm:$0xff]
      %v2327 = vld [vmem:[#allocation3 + $0x60] sm:$0xff]
      %v2328 = vld [vmem:[#allocation3 + $0x70] sm:$0xff]
      %v2329 = vld [vmem:[#allocation3 + $0x80] sm:$0xff]
      %v2330 = vld [vmem:[#allocation3 + $0x90] sm:$0xff]
      %v2331 = vld [vmem:[#allocation3 + $0xa0] sm:$0xff]
      %v2332 = vld [vmem:[#allocation3 + $0xb0] sm:$0xff]
      %v2333 = vld [vmem:[#allocation3 + $0xc0] sm:$0xff]
      %v2334 = vld [vmem:[#allocation3 + $0xd0] sm:$0xff]
      %v2335 = vld [vmem:[#allocation3 + $0xe0] sm:$0xff]
      %v2336 = vld [vmem:[#allocation3 + $0xf0] sm:$0xff]
      %v2337 = vld [vmem:[#allocation3 + $0x100] sm:$0xff]
      %v2338 = vld [vmem:[#allocation3 + $0x110] sm:$0xff]
      %2340 = vset.pattern.permute.xlu0 0
      %2341 = vperm.xlu0 %2340, %v2162
      %v2342 = vpop.permute.xlu0 %2341
      %2345 = vset.pattern.permute.xlu0 0
      %2346 = vperm.xlu0 %2345, %v2163
      %v2347 = vpop.permute.xlu0 %2346
      %2350 = vset.pattern.permute.xlu0 0
      %2351 = vperm.xlu0 %2350, %v2164
      %v2352 = vpop.permute.xlu0 %2351
      %2355 = vset.pattern.permute.xlu0 0
      %2356 = vperm.xlu0 %2355, %v2165
      %v2357 = vpop.permute.xlu0 %2356
      %v2360 = vsel %vm785, %v2155, 0
      %v2363 = vsel %vm785, %v2157, 0
      %v2366 = vsel %vm785, %v2159, 0
      %v2369 = vsel %vm785, %v2161, 0
      %2371 = vmatprep.subr.mxu0 0.0
      %2372 = vmatpush1.msra.mxu0 %v2336
      %2373 = vmatprep.subr.mxu0 0.0
      %2374 = vmatpush1.msra.mxu0 %v2335
      %2375 = vmatprep.subr.mxu0 0.0
      %2376 = vmatpush1.msra.mxu0 %v2334
      %2377 = vmatprep.subr.mxu0 0.0
      %2378 = vmatpush1.msra.mxu0 %v2333
      %2379 = vmatprep.subr.mxu0 0.0
      %2380 = vmatpush1.msra.mxu0 %v2332
      %2381 = vmatprep.subr.mxu0 0.0
      %2382 = vmatpush1.msra.mxu0 %v2331
      %2383 = vmatprep.subr.mxu0 0.0
      %2384 = vmatpush1.msra.mxu0 %v2330
      %2385 = vmatprep.subr.mxu0 0.0
      %2386 = vmatpush1.msra.mxu0 %v2329
      %2387 = vmatprep.subr.mxu0 0.0
      %2388 = vmatpush1.msra.mxu0 %v2328
      %2389 = vmatprep.subr.mxu0 0.0
      %2390 = vmatpush1.msra.mxu0 %v2327
      %2391 = vmatprep.subr.mxu0 0.0
      %2392 = vmatpush1.msra.mxu0 %v2326
      %2393 = vmatprep.subr.mxu0 0.0
      %2394 = vmatpush1.msra.mxu0 %v2325
      %2395 = vmatprep.subr.mxu0 0.0
      %2396 = vmatpush1.msra.mxu0 %v2324
      %2397 = vmatprep.subr.mxu0 0.0
      %2398 = vmatpush1.msra.mxu0 %v2323
      %2399 = vmatprep.subr.mxu0 0.0
      %2400 = vmatpush1.msra.mxu0 %v2322
      %2401 = vmatprep.subr.mxu0 0.0
      %2402 = vmatpush1.msra.mxu0 %v2321
      %2403 = vmatprep.subr.mxu0 0.0
      %2404 = vmatpush2.msra.mxu0 0.0
      %2405 = vmatprep.subr.mxu0 0.0
      %2406 = vmatpush2.msra.mxu0 0.0
      %2407 = vmatprep.subr.mxu0 0.0
      %2408 = vmatpush2.msra.mxu0 0.0
      %2409 = vmatprep.subr.mxu0 0.0
      %2410 = vmatpush2.msra.mxu0 0.0
      %2411 = vmatprep.subr.mxu0 0.0
      %2412 = vmatpush2.msra.mxu0 0.0
      %2413 = vmatprep.subr.mxu0 0.0
      %2414 = vmatpush2.msra.mxu0 0.0
      %2415 = vmatprep.subr.mxu0 0.0
      %2416 = vmatpush2.msra.mxu0 0.0
      %2417 = vmatprep.subr.mxu0 0.0
      %2418 = vmatpush2.msra.mxu0 0.0
      %2419 = vmatprep.subr.mxu0 0.0
      %2420 = vmatpush2.msra.mxu0 0.0
      %2421 = vmatprep.subr.mxu0 0.0
      %2422 = vmatpush2.msra.mxu0 0.0
      %2423 = vmatprep.subr.mxu0 0.0
      %2424 = vmatpush2.msra.mxu0 0.0
      %2425 = vmatprep.subr.mxu0 0.0
      %2426 = vmatpush2.msra.mxu0 0.0
      %2427 = vmatprep.subr.mxu0 0.0
      %2428 = vmatpush2.msra.mxu0 0.0
      %2429 = vmatprep.subr.mxu0 0.0
      %2430 = vmatpush2.msra.mxu0 0.0
      %2431 = vmatprep.subr.mxu0 0.0
      %2432 = vmatpush2.msra.mxu0 %v2338
      %2433 = vmatprep.subr.mxu0 0.0
      %2434 = vmatpush2.msra.mxu0 %v2337
      %2435 = vmatprep.mubr.f32.mxu0 %v2360
      %2436 = vmatmul.mubr.f32.gmra.mxu0 %v2154
      %v2437 = vpop.f32.mrf.mxu0
      %v2438 = vadd.f32 %v2342, %v2437
      %v2439 = vpop.f32.mrf.mxu0
      %2440 = vmatprep.mubr.f32.mxu0 %v2363
      %2441 = vmatmul.mubr.f32.gmra.mxu0 %v2156
      %v2442 = vpop.f32.mrf.mxu0
      %v2443 = vadd.f32 %v2347, %v2442
      %v2444 = vpop.f32.mrf.mxu0
      %2445 = vmatprep.mubr.f32.mxu0 %v2366
      %2446 = vmatmul.mubr.f32.gmra.mxu0 %v2158
      %v2447 = vpop.f32.mrf.mxu0
      %v2448 = vadd.f32 %v2352, %v2447
      %v2449 = vpop.f32.mrf.mxu0
      %2450 = vmatprep.mubr.f32.mxu0 %v2369
      %2451 = vmatmul.mubr.f32.gmra.mxu0 %v2160
      %v2452 = vpop.f32.mrf.mxu0
      %v2453 = vadd.f32 %v2357, %v2452
      %v2454 = vpop.f32.mrf.mxu0
      %2455 = vdwg.mxu0
      %v2456 = vmul.f32 %v2438, 0.01
      %v2457 = vmul.f32 %v2443, 0.01
      %v2458 = vmul.f32 %v2448, 0.01
      %v2459 = vmul.f32 %v2453, 0.01
      %v2460 = vmax.f32 %v2438, %v2456
      %v2461 = vmax.f32 %v2443, %v2457
      %v2462 = vmax.f32 %v2448, %v2458
      %v2463 = vmax.f32 %v2453, %v2459
      %v2464 = vld [vmem:[%s11] sm:$0xff]
      %v2465 = vld [vmem:[%s11 + $0x8] sm:$0xff]
      %v2466 = vld [vmem:[%s11 + $0x10] sm:$0xff]
      %v2467 = vld [vmem:[%s11 + $0x18] sm:$0xff]
      %v2468 = vld [vmem:[%s11 + $0x20] sm:$0xff]
      %v2469 = vld [vmem:[%s11 + $0x28] sm:$0xff]
      %v2470 = vld [vmem:[%s11 + $0x30] sm:$0xff]
      %v2471 = vld [vmem:[%s11 + $0x38] sm:$0xff]
      %v2472 = vld [vmem:[%s11 + $0x40] sm:$0xff]
      %v2473 = vld [vmem:[%s11 + $0x48] sm:$0xff]
      %v2474 = vld [vmem:[%s11 + $0x50] sm:$0xff]
      %v2475 = vld [vmem:[%s11 + $0x58] sm:$0xff]
      %v2476 = vld [vmem:[%s12] sm:$0xff]
      %v2477 = vld [vmem:[%s12 + $0x8] sm:$0xff]
      %v2478 = vld [vmem:[%s12 + $0x10] sm:$0xff]
      %v2479 = vld [vmem:[%s12 + $0x18] sm:$0xff]
      %v2480 = vld [vmem:[%s15] sm:$0x3]
      %2481 = vst.msk [vmem:[#allocation2] sm:$0xff] %vm2167, 0.0
      %2482 = vst.msk [vmem:[#allocation2 + $0x18] sm:$0xff] %vm2167, 0.0
      %2483 = vst.msk [vmem:[#allocation2 + $0x30] sm:$0xff] %vm2167, 0.0
      %2484 = vst.msk [vmem:[#allocation2 + $0x48] sm:$0xff] %vm2167, 0.0
      %2485 = vst.msk [vmem:[#allocation2] sm:$0xff] %vm2170, 0.0
      %2486 = vst.msk [vmem:[#allocation2 + $0x18] sm:$0xff] %vm2170, 0.0
      %2487 = vst.msk [vmem:[#allocation2 + $0x30] sm:$0xff] %vm2170, 0.0
      %2488 = vst.msk [vmem:[#allocation2 + $0x48] sm:$0xff] %vm2170, 0.0
      %2493 = vrot.lane.b32.xlu0 %v2460, 5
      %v2494 = vpop.permute.xlu0 %2493
      %2495 = vrot.lane.b32.xlu0 %v2461, 5
      %v2496 = vpop.permute.xlu0 %2495
      %2497 = vrot.lane.b32.xlu0 %v2462, 5
      %v2498 = vpop.permute.xlu0 %2497
      %2499 = vrot.lane.b32.xlu0 %v2463, 5
      %v2500 = vpop.permute.xlu0 %2499
      %2505 = vst.msk [vmem:[#allocation2] sm:$0xff] %vm2181, %v2494
      %2506 = vst.msk [vmem:[#allocation2 + $0x18] sm:$0xff] %vm2181, %v2496
      %2507 = vst.msk [vmem:[#allocation2 + $0x30] sm:$0xff] %vm2181, %v2498
      %2508 = vst.msk [vmem:[#allocation2 + $0x48] sm:$0xff] %vm2181, %v2500
      %v2509 = vld [vmem:[#allocation2] sm:$0xff]
      %v2510 = vld [vmem:[#allocation2 + $0x18] sm:$0xff]
      %v2511 = vld [vmem:[#allocation2 + $0x30] sm:$0xff]
      %v2512 = vld [vmem:[#allocation2 + $0x48] sm:$0xff]
      %v2513 = vlaneseq
      %v2514 = vshrl.u32 %v2513, 7
      %v2515 = vsub.s32 0, %v2514
      %v2516 = vrot.slane %v2480, %v2515
      %v2517 = vmul.f32 %v2509, %v2516
      %v2518 = vmul.f32 %v2510, %v2516
      %v2519 = vmul.f32 %v2511, %v2516
      %v2520 = vmul.f32 %v2512, %v2516
      %2521 = vst.msk [vmem:[#allocation3] sm:$0xff] %vm785, %v2517
      %2522 = vst.msk [vmem:[#allocation3 + $0x10] sm:$0xff] %vm785, %v2518
      %2523 = vst.msk [vmem:[#allocation3 + $0x20] sm:$0xff] %vm785, %v2519
      %2524 = vst.msk [vmem:[#allocation3 + $0x30] sm:$0xff] %vm785, %v2520
      %v2525 = vld [vmem:[#allocation2] sm:$0xff]
      %v2526 = vld [vmem:[#allocation2 + $0x18] sm:$0xff]
      %v2527 = vld [vmem:[#allocation2 + $0x30] sm:$0xff]
      %v2528 = vld [vmem:[#allocation2 + $0x48] sm:$0xff]
      %2533 = vrot.lane.b32.xlu0 %v2525, 127
      %v2534 = vpop.permute.xlu0 %2533
      %2535 = vrot.lane.b32.xlu0 %v2526, 127
      %v2536 = vpop.permute.xlu0 %2535
      %2537 = vrot.lane.b32.xlu0 %v2527, 127
      %v2538 = vpop.permute.xlu0 %2537
      %2539 = vrot.lane.b32.xlu0 %v2528, 127
      %v2540 = vpop.permute.xlu0 %2539
      %2545 = vst.msk [vmem:[#allocation3 + $0x40] sm:$0xff] %vm785, %v2534
      %2546 = vst.msk [vmem:[#allocation3 + $0x50] sm:$0xff] %vm785, %v2536
      %2547 = vst.msk [vmem:[#allocation3 + $0x60] sm:$0xff] %vm785, %v2538
      %2548 = vst.msk [vmem:[#allocation3 + $0x70] sm:$0xff] %vm785, %v2540
      %v2549 = vld [vmem:[#allocation2] sm:$0xff]
      %v2550 = vld [vmem:[#allocation2 + $0x18] sm:$0xff]
      %v2551 = vld [vmem:[#allocation2 + $0x30] sm:$0xff]
      %v2552 = vld [vmem:[#allocation2 + $0x48] sm:$0xff]
      %v2553 = vlaneseq
      %v2554 = vshrl.u32 %v2553, 7
      %v2555 = vsub.s32 1, %v2554
      %v2556 = vrot.slane %v2480, %v2555
      %2558 = vrot.lane.b32.xlu0 %v2556, 2
      %v2559 = vpop.permute.xlu0 %2558
      %v2561 = vmul.f32 %v2549, %v2559
      %v2562 = vmul.f32 %v2550, %v2559
      %v2563 = vmul.f32 %v2551, %v2559
      %v2564 = vmul.f32 %v2552, %v2559
      %2569 = vrot.lane.b32.xlu0 %v2561, 126
      %v2570 = vpop.permute.xlu0 %2569
      %2571 = vrot.lane.b32.xlu0 %v2562, 126
      %v2572 = vpop.permute.xlu0 %2571
      %2573 = vrot.lane.b32.xlu0 %v2563, 126
      %v2574 = vpop.permute.xlu0 %2573
      %2575 = vrot.lane.b32.xlu0 %v2564, 126
      %v2576 = vpop.permute.xlu0 %2575
      %2581 = vst.msk [vmem:[#allocation3 + $0x80] sm:$0xff] %vm785, %v2570
      %2582 = vst.msk [vmem:[#allocation3 + $0x90] sm:$0xff] %vm785, %v2572
      %2583 = vst.msk [vmem:[#allocation3 + $0xa0] sm:$0xff] %vm785, %v2574
      %2584 = vst.msk [vmem:[#allocation3 + $0xb0] sm:$0xff] %vm785, %v2576
      %v2585 = vld [vmem:[#allocation2] sm:$0xff]
      %v2586 = vld [vmem:[#allocation2 + $0x18] sm:$0xff]
      %v2587 = vld [vmem:[#allocation2 + $0x30] sm:$0xff]
      %v2588 = vld [vmem:[#allocation2 + $0x48] sm:$0xff]
      %2590 = vrot.lane.b32.xlu0 %v2516, 4
      %v2591 = vpop.permute.xlu0 %2590
      %v2593 = vmul.f32 %v2585, %v2591
      %v2594 = vmul.f32 %v2586, %v2591
      %v2595 = vmul.f32 %v2587, %v2591
      %v2596 = vmul.f32 %v2588, %v2591
      %2601 = vrot.lane.b32.xlu0 %v2593, 124
      %v2602 = vpop.permute.xlu0 %2601
      %2603 = vrot.lane.b32.xlu0 %v2594, 124
      %v2604 = vpop.permute.xlu0 %2603
      %2605 = vrot.lane.b32.xlu0 %v2595, 124
      %v2606 = vpop.permute.xlu0 %2605
      %2607 = vrot.lane.b32.xlu0 %v2596, 124
      %v2608 = vpop.permute.xlu0 %2607
      %2613 = vst.msk [vmem:[#allocation3 + $0xc0] sm:$0xff] %vm785, %v2602
      %2614 = vst.msk [vmem:[#allocation3 + $0xd0] sm:$0xff] %vm785, %v2604
      %2615 = vst.msk [vmem:[#allocation3 + $0xe0] sm:$0xff] %vm785, %v2606
      %2616 = vst.msk [vmem:[#allocation3 + $0xf0] sm:$0xff] %vm785, %v2608
      %v2617 = vld [vmem:[#allocation2] sm:$0xff]
      %v2618 = vld [vmem:[#allocation2 + $0x18] sm:$0xff]
      %v2619 = vld [vmem:[#allocation2 + $0x30] sm:$0xff]
      %v2620 = vld [vmem:[#allocation2 + $0x48] sm:$0xff]
      %2625 = vrot.lane.b32.xlu0 %v2617, 123
      %v2626 = vpop.permute.xlu0 %2625
      %2627 = vrot.lane.b32.xlu0 %v2618, 123
      %v2628 = vpop.permute.xlu0 %2627
      %2629 = vrot.lane.b32.xlu0 %v2619, 123
      %v2630 = vpop.permute.xlu0 %2629
      %2631 = vrot.lane.b32.xlu0 %v2620, 123
      %v2632 = vpop.permute.xlu0 %2631
      %2637 = vst.msk [vmem:[#allocation3 + $0x100] sm:$0xff] %vm785, %v2626
      %2638 = vst.msk [vmem:[#allocation3 + $0x110] sm:$0xff] %vm785, %v2628
      %2639 = vst.msk [vmem:[#allocation3 + $0x120] sm:$0xff] %vm785, %v2630
      %2640 = vst.msk [vmem:[#allocation3 + $0x130] sm:$0xff] %vm785, %v2632
      %v2641 = vld [vmem:[#allocation2] sm:$0xff]
      %v2642 = vld [vmem:[#allocation2 + $0x18] sm:$0xff]
      %v2643 = vld [vmem:[#allocation2 + $0x30] sm:$0xff]
      %v2644 = vld [vmem:[#allocation2 + $0x48] sm:$0xff]
      %2645 = vrot.lane.b32.xlu0 %v2556, 6
      %v2646 = vpop.permute.xlu0 %2645
      %v2648 = vmul.f32 %v2641, %v2646
      %v2649 = vmul.f32 %v2642, %v2646
      %v2650 = vmul.f32 %v2643, %v2646
      %v2651 = vmul.f32 %v2644, %v2646
      %2656 = vrot.lane.b32.xlu0 %v2648, 122
      %v2657 = vpop.permute.xlu0 %2656
      %2658 = vrot.lane.b32.xlu0 %v2649, 122
      %v2659 = vpop.permute.xlu0 %2658
      %2660 = vrot.lane.b32.xlu0 %v2650, 122
      %v2661 = vpop.permute.xlu0 %2660
      %2662 = vrot.lane.b32.xlu0 %v2651, 122
      %v2663 = vpop.permute.xlu0 %2662
      %2668 = vst.msk [vmem:[#allocation3 + $0x140] sm:$0xff] %vm785, %v2657
      %2669 = vst.msk [vmem:[#allocation3 + $0x150] sm:$0xff] %vm785, %v2659
      %2670 = vst.msk [vmem:[#allocation3 + $0x160] sm:$0xff] %vm785, %v2661
      %2671 = vst.msk [vmem:[#allocation3 + $0x170] sm:$0xff] %vm785, %v2663
      %v2672 = vld [vmem:[#allocation2] sm:$0xff]
      %v2673 = vld [vmem:[#allocation2 + $0x18] sm:$0xff]
      %v2674 = vld [vmem:[#allocation2 + $0x30] sm:$0xff]
      %v2675 = vld [vmem:[#allocation2 + $0x48] sm:$0xff]
      %2676 = vrot.lane.b32.xlu0 %v2516, 8
      %v2677 = vpop.permute.xlu0 %2676
      %v2679 = vmul.f32 %v2672, %v2677
      %v2680 = vmul.f32 %v2673, %v2677
      %v2681 = vmul.f32 %v2674, %v2677
      %v2682 = vmul.f32 %v2675, %v2677
      %2687 = vrot.lane.b32.xlu0 %v2679, 120
      %v2688 = vpop.permute.xlu0 %2687
      %2689 = vrot.lane.b32.xlu0 %v2680, 120
      %v2690 = vpop.permute.xlu0 %2689
      %2691 = vrot.lane.b32.xlu0 %v2681, 120
      %v2692 = vpop.permute.xlu0 %2691
      %2693 = vrot.lane.b32.xlu0 %v2682, 120
      %v2694 = vpop.permute.xlu0 %2693
      %2699 = vst.msk [vmem:[#allocation3 + $0x180] sm:$0xff] %vm785, %v2688
      %2700 = vst.msk [vmem:[#allocation3 + $0x190] sm:$0xff] %vm785, %v2690
      %2701 = vst.msk [vmem:[#allocation3 + $0x1a0] sm:$0xff] %vm785, %v2692
      %2702 = vst.msk [vmem:[#allocation3 + $0x1b0] sm:$0xff] %vm785, %v2694
      %v2703 = vld [vmem:[#allocation2] sm:$0xff]
      %v2704 = vld [vmem:[#allocation2 + $0x18] sm:$0xff]
      %v2705 = vld [vmem:[#allocation2 + $0x30] sm:$0xff]
      %v2706 = vld [vmem:[#allocation2 + $0x48] sm:$0xff]
      %2711 = vrot.lane.b32.xlu0 %v2703, 119
      %v2712 = vpop.permute.xlu0 %2711
      %2713 = vrot.lane.b32.xlu0 %v2704, 119
      %v2714 = vpop.permute.xlu0 %2713
      %2715 = vrot.lane.b32.xlu0 %v2705, 119
      %v2716 = vpop.permute.xlu0 %2715
      %2717 = vrot.lane.b32.xlu0 %v2706, 119
      %v2718 = vpop.permute.xlu0 %2717
      %2723 = vst.msk [vmem:[#allocation3 + $0x1c0] sm:$0xff] %vm785, %v2712
      %2724 = vst.msk [vmem:[#allocation3 + $0x1d0] sm:$0xff] %vm785, %v2714
      %2725 = vst.msk [vmem:[#allocation3 + $0x1e0] sm:$0xff] %vm785, %v2716
      %2726 = vst.msk [vmem:[#allocation3 + $0x1f0] sm:$0xff] %vm785, %v2718
      %v2727 = vld [vmem:[#allocation2] sm:$0xff]
      %v2728 = vld [vmem:[#allocation2 + $0x18] sm:$0xff]
      %v2729 = vld [vmem:[#allocation2 + $0x30] sm:$0xff]
      %v2730 = vld [vmem:[#allocation2 + $0x48] sm:$0xff]
      %2731 = vrot.lane.b32.xlu0 %v2556, 10
      %v2732 = vpop.permute.xlu0 %2731
      %v2734 = vmul.f32 %v2727, %v2732
      %v2735 = vmul.f32 %v2728, %v2732
      %v2736 = vmul.f32 %v2729, %v2732
      %v2737 = vmul.f32 %v2730, %v2732
      %2742 = vrot.lane.b32.xlu0 %v2734, 118
      %v2743 = vpop.permute.xlu0 %2742
      %2744 = vrot.lane.b32.xlu0 %v2735, 118
      %v2745 = vpop.permute.xlu0 %2744
      %2746 = vrot.lane.b32.xlu0 %v2736, 118
      %v2747 = vpop.permute.xlu0 %2746
      %2748 = vrot.lane.b32.xlu0 %v2737, 118
      %v2749 = vpop.permute.xlu0 %2748
      %2754 = vst.msk [vmem:[#allocation3 + $0x200] sm:$0xff] %vm785, %v2743
      %2755 = vst.msk [vmem:[#allocation3 + $0x210] sm:$0xff] %vm785, %v2745
      %2756 = vst.msk [vmem:[#allocation3 + $0x220] sm:$0xff] %vm785, %v2747
      %2757 = vst.msk [vmem:[#allocation3 + $0x230] sm:$0xff] %vm785, %v2749
      %v2758 = vld [vmem:[#allocation3] sm:$0xff]
      %v2759 = vld [vmem:[#allocation3 + $0x10] sm:$0xff]
      %v2760 = vld [vmem:[#allocation3 + $0x20] sm:$0xff]
      %v2761 = vld [vmem:[#allocation3 + $0x30] sm:$0xff]
      %v2762 = vld [vmem:[#allocation3 + $0x40] sm:$0xff]
      %v2763 = vld [vmem:[#allocation3 + $0x50] sm:$0xff]
      %v2764 = vld [vmem:[#allocation3 + $0x60] sm:$0xff]
      %v2765 = vld [vmem:[#allocation3 + $0x70] sm:$0xff]
      %v2766 = vld [vmem:[#allocation3 + $0x80] sm:$0xff]
      %v2767 = vld [vmem:[#allocation3 + $0x90] sm:$0xff]
      %v2768 = vld [vmem:[#allocation3 + $0xa0] sm:$0xff]
      %v2769 = vld [vmem:[#allocation3 + $0xb0] sm:$0xff]
      %v2770 = vld [vmem:[#allocation3 + $0xc0] sm:$0xff]
      %v2771 = vld [vmem:[#allocation3 + $0xd0] sm:$0xff]
      %v2772 = vld [vmem:[#allocation3 + $0xe0] sm:$0xff]
      %v2773 = vld [vmem:[#allocation3 + $0xf0] sm:$0xff]
      %v2774 = vld [vmem:[#allocation3 + $0x100] sm:$0xff]
      %v2775 = vld [vmem:[#allocation3 + $0x110] sm:$0xff]
      %v2776 = vld [vmem:[#allocation3 + $0x120] sm:$0xff]
      %v2777 = vld [vmem:[#allocation3 + $0x130] sm:$0xff]
      %v2778 = vld [vmem:[#allocation3 + $0x140] sm:$0xff]
      %v2779 = vld [vmem:[#allocation3 + $0x150] sm:$0xff]
      %v2780 = vld [vmem:[#allocation3 + $0x160] sm:$0xff]
      %v2781 = vld [vmem:[#allocation3 + $0x170] sm:$0xff]
      %v2782 = vld [vmem:[#allocation3 + $0x180] sm:$0xff]
      %v2783 = vld [vmem:[#allocation3 + $0x190] sm:$0xff]
      %v2784 = vld [vmem:[#allocation3 + $0x1a0] sm:$0xff]
      %v2785 = vld [vmem:[#allocation3 + $0x1b0] sm:$0xff]
      %v2786 = vld [vmem:[#allocation3 + $0x1c0] sm:$0xff]
      %v2787 = vld [vmem:[#allocation3 + $0x1d0] sm:$0xff]
      %v2788 = vld [vmem:[#allocation3 + $0x1e0] sm:$0xff]
      %v2789 = vld [vmem:[#allocation3 + $0x1f0] sm:$0xff]
      %v2790 = vld [vmem:[#allocation3 + $0x200] sm:$0xff]
      %v2791 = vld [vmem:[#allocation3 + $0x210] sm:$0xff]
      %v2792 = vld [vmem:[#allocation3 + $0x220] sm:$0xff]
      %v2793 = vld [vmem:[#allocation3 + $0x230] sm:$0xff]
      %2795 = vset.pattern.permute.xlu0 0
      %2796 = vperm.xlu0 %2795, %v2476
      %v2797 = vpop.permute.xlu0 %2796
      %2800 = vset.pattern.permute.xlu0 0
      %2801 = vperm.xlu0 %2800, %v2477
      %v2802 = vpop.permute.xlu0 %2801
      %2805 = vset.pattern.permute.xlu0 0
      %2806 = vperm.xlu0 %2805, %v2478
      %v2807 = vpop.permute.xlu0 %2806
      %2810 = vset.pattern.permute.xlu0 0
      %2811 = vperm.xlu0 %2810, %v2479
      %v2812 = vpop.permute.xlu0 %2811
      %v2815 = vsel %vm872, %v2466, 0
      %v2818 = vsel %vm872, %v2469, 0
      %v2821 = vsel %vm872, %v2472, 0
      %v2824 = vsel %vm872, %v2475, 0
      %2826 = vmatprep.subr.mxu0 0.0
      %2827 = vmatpush1.msra.mxu0 %v2773
      %2828 = vmatprep.subr.mxu0 0.0
      %2829 = vmatpush1.msra.mxu0 %v2772
      %2830 = vmatprep.subr.mxu0 0.0
      %2831 = vmatpush1.msra.mxu0 %v2771
      %2832 = vmatprep.subr.mxu0 0.0
      %2833 = vmatpush1.msra.mxu0 %v2770
      %2834 = vmatprep.subr.mxu0 0.0
      %2835 = vmatpush1.msra.mxu0 %v2769
      %2836 = vmatprep.subr.mxu0 0.0
      %2837 = vmatpush1.msra.mxu0 %v2768
      %2838 = vmatprep.subr.mxu0 0.0
      %2839 = vmatpush1.msra.mxu0 %v2767
      %2840 = vmatprep.subr.mxu0 0.0
      %2841 = vmatpush1.msra.mxu0 %v2766
      %2842 = vmatprep.subr.mxu0 0.0
      %2843 = vmatpush1.msra.mxu0 %v2765
      %2844 = vmatprep.subr.mxu0 0.0
      %2845 = vmatpush1.msra.mxu0 %v2764
      %2846 = vmatprep.subr.mxu0 0.0
      %2847 = vmatpush1.msra.mxu0 %v2763
      %2848 = vmatprep.subr.mxu0 0.0
      %2849 = vmatpush1.msra.mxu0 %v2762
      %2850 = vmatprep.subr.mxu0 0.0
      %2851 = vmatpush1.msra.mxu0 %v2761
      %2852 = vmatprep.subr.mxu0 0.0
      %2853 = vmatpush1.msra.mxu0 %v2760
      %2854 = vmatprep.subr.mxu0 0.0
      %2855 = vmatpush1.msra.mxu0 %v2759
      %2856 = vmatprep.subr.mxu0 0.0
      %2857 = vmatpush1.msra.mxu0 %v2758
      %2858 = vmatprep.subr.mxu0 0.0
      %2859 = vmatpush2.msra.mxu0 %v2789
      %2860 = vmatprep.subr.mxu0 0.0
      %2861 = vmatpush2.msra.mxu0 %v2788
      %2862 = vmatprep.subr.mxu0 0.0
      %2863 = vmatpush2.msra.mxu0 %v2787
      %2864 = vmatprep.subr.mxu0 0.0
      %2865 = vmatpush2.msra.mxu0 %v2786
      %2866 = vmatprep.subr.mxu0 0.0
      %2867 = vmatpush2.msra.mxu0 %v2785
      %2868 = vmatprep.subr.mxu0 0.0
      %2869 = vmatpush2.msra.mxu0 %v2784
      %2870 = vmatprep.subr.mxu0 0.0
      %2871 = vmatpush2.msra.mxu0 %v2783
      %2872 = vmatprep.subr.mxu0 0.0
      %2873 = vmatpush2.msra.mxu0 %v2782
      %2874 = vmatprep.subr.mxu0 0.0
      %2875 = vmatpush2.msra.mxu0 %v2781
      %2876 = vmatprep.subr.mxu0 0.0
      %2877 = vmatpush2.msra.mxu0 %v2780
      %2878 = vmatprep.subr.mxu0 0.0
      %2879 = vmatpush2.msra.mxu0 %v2779
      %2880 = vmatprep.subr.mxu0 0.0
      %2881 = vmatpush2.msra.mxu0 %v2778
      %2882 = vmatprep.subr.mxu0 0.0
      %2883 = vmatpush2.msra.mxu0 %v2777
      %2884 = vmatprep.subr.mxu0 0.0
      %2885 = vmatpush2.msra.mxu0 %v2776
      %2886 = vmatprep.subr.mxu0 0.0
      %2887 = vmatpush2.msra.mxu0 %v2775
      %2888 = vmatprep.subr.mxu0 0.0
      %2889 = vmatpush2.msra.mxu0 %v2774
      %2890 = vmatprep.mubr.f32.mxu0 %v2465
      %2891 = vmatmul.mubr.f32.gmra.mxu0 %v2464
      %v2892 = vpop.f32.mrf.mxu0
      %v2893 = vadd.f32 %v2797, %v2892
      %v2894 = vpop.f32.mrf.mxu0
      %2895 = vmatprep.mubr.f32.mxu0 %v2468
      %2896 = vmatmul.mubr.f32.gmra.mxu0 %v2467
      %v2897 = vpop.f32.mrf.mxu0
      %v2898 = vadd.f32 %v2802, %v2897
      %v2899 = vpop.f32.mrf.mxu0
      %2900 = vmatprep.mubr.f32.mxu0 %v2471
      %2901 = vmatmul.mubr.f32.gmra.mxu0 %v2470
      %v2902 = vpop.f32.mrf.mxu0
      %v2903 = vadd.f32 %v2807, %v2902
      %v2904 = vpop.f32.mrf.mxu0
      %2905 = vmatprep.mubr.f32.mxu0 %v2474
      %2906 = vmatmul.mubr.f32.gmra.mxu0 %v2473
      %v2907 = vpop.f32.mrf.mxu0
      %v2908 = vadd.f32 %v2812, %v2907
      %v2909 = vpop.f32.mrf.mxu0
      %2910 = vdwg.mxu0
      %2911 = vmatprep.subr.mxu0 0.0
      %2912 = vmatpush1.msra.mxu0 0.0
      %2913 = vmatprep.subr.mxu0 0.0
      %2914 = vmatpush1.msra.mxu0 0.0
      %2915 = vmatprep.subr.mxu0 0.0
      %2916 = vmatpush1.msra.mxu0 0.0
      %2917 = vmatprep.subr.mxu0 0.0
      %2918 = vmatpush1.msra.mxu0 0.0
      %2919 = vmatprep.subr.mxu0 0.0
      %2920 = vmatpush1.msra.mxu0 0.0
      %2921 = vmatprep.subr.mxu0 0.0
      %2922 = vmatpush1.msra.mxu0 0.0
      %2923 = vmatprep.subr.mxu0 0.0
      %2924 = vmatpush1.msra.mxu0 0.0
      %2925 = vmatprep.subr.mxu0 0.0
      %2926 = vmatpush1.msra.mxu0 0.0
      %2927 = vmatprep.subr.mxu0 0.0
      %2928 = vmatpush1.msra.mxu0 0.0
      %2929 = vmatprep.subr.mxu0 0.0
      %2930 = vmatpush1.msra.mxu0 0.0
      %2931 = vmatprep.subr.mxu0 0.0
      %2932 = vmatpush1.msra.mxu0 0.0
      %2933 = vmatprep.subr.mxu0 0.0
      %2934 = vmatpush1.msra.mxu0 0.0
      %2935 = vmatprep.subr.mxu0 0.0
      %2936 = vmatpush1.msra.mxu0 %v2793
      %2937 = vmatprep.subr.mxu0 0.0
      %2938 = vmatpush1.msra.mxu0 %v2792
      %2939 = vmatprep.subr.mxu0 0.0
      %2940 = vmatpush1.msra.mxu0 %v2791
      %2941 = vmatprep.subr.mxu0 0.0
      %2942 = vmatpush1.msra.mxu0 %v2790
      %2943 = vmatprep.subr.mxu0 0.0
      %2944 = vmatpush2.msra.mxu0 0.0
      %2945 = vmatprep.subr.mxu0 0.0
      %2946 = vmatpush2.msra.mxu0 0.0
      %2947 = vmatprep.subr.mxu0 0.0
      %2948 = vmatpush2.msra.mxu0 0.0
      %2949 = vmatprep.subr.mxu0 0.0
      %2950 = vmatpush2.msra.mxu0 0.0
      %2951 = vmatprep.subr.mxu0 0.0
      %2952 = vmatpush2.msra.mxu0 0.0
      %2953 = vmatprep.subr.mxu0 0.0
      %2954 = vmatpush2.msra.mxu0 0.0
      %2955 = vmatprep.subr.mxu0 0.0
      %2956 = vmatpush2.msra.mxu0 0.0
      %2957 = vmatprep.subr.mxu0 0.0
      %2958 = vmatpush2.msra.mxu0 0.0
      %2959 = vmatprep.subr.mxu0 0.0
      %2960 = vmatpush2.msra.mxu0 0.0
      %2961 = vmatprep.subr.mxu0 0.0
      %2962 = vmatpush2.msra.mxu0 0.0
      %2963 = vmatprep.subr.mxu0 0.0
      %2964 = vmatpush2.msra.mxu0 0.0
      %2965 = vmatprep.subr.mxu0 0.0
      %2966 = vmatpush2.msra.mxu0 0.0
      %2967 = vmatprep.subr.mxu0 0.0
      %2968 = vmatpush2.msra.mxu0 0.0
      %2969 = vmatprep.subr.mxu0 0.0
      %2970 = vmatpush2.msra.mxu0 0.0
      %2971 = vmatprep.subr.mxu0 0.0
      %2972 = vmatpush2.msra.mxu0 0.0
      %2973 = vmatprep.subr.mxu0 0.0
      %2974 = vmatpush2.msra.mxu0 0.0
      %2975 = vmatprep.mubr.f32.mxu0 0.0
      %2976 = vmatmul.mubr.f32.gmra.mxu0 %v2815
      %v2977 = vpop.f32.mrf.mxu0
      %v2978 = vadd.f32 %v2893, %v2977
      %v2979 = vpop.f32.mrf.mxu0
      %2980 = vmatprep.mubr.f32.mxu0 0.0
      %2981 = vmatmul.mubr.f32.gmra.mxu0 %v2818
      %v2982 = vpop.f32.mrf.mxu0
      %v2983 = vadd.f32 %v2898, %v2982
      %v2984 = vpop.f32.mrf.mxu0
      %2985 = vmatprep.mubr.f32.mxu0 0.0
      %2986 = vmatmul.mubr.f32.gmra.mxu0 %v2821
      %v2987 = vpop.f32.mrf.mxu0
      %v2988 = vadd.f32 %v2903, %v2987
      %v2989 = vpop.f32.mrf.mxu0
      %2990 = vmatprep.mubr.f32.mxu0 0.0
      %2991 = vmatmul.mubr.f32.gmra.mxu0 %v2824
      %v2992 = vpop.f32.mrf.mxu0
      %v2993 = vadd.f32 %v2908, %v2992
      %v2994 = vpop.f32.mrf.mxu0
      %2995 = vdwg.mxu0
      %v2996 = vmul.f32 %v2978, 0.01
      %v2997 = vmul.f32 %v2983, 0.01
      %v2998 = vmul.f32 %v2988, 0.01
      %v2999 = vmul.f32 %v2993, 0.01
      %v3000 = vmax.f32 %v2978, %v2996
      %v3001 = vmax.f32 %v2983, %v2997
      %v3002 = vmax.f32 %v2988, %v2998
      %v3003 = vmax.f32 %v2993, %v2999
      %3004 = vst.msk [vmem:[%s654] sm:$0xff] %vm785, %v3000
      %3005 = vst.msk [vmem:[%s654 + $0x8] sm:$0xff] %vm785, %v3001
      %3006 = vst.msk [vmem:[%s654 + $0x10] sm:$0xff] %vm785, %v3002
      %3007 = vst.msk [vmem:[%s654 + $0x18] sm:$0xff] %vm785, %v3003
      %p3008 = scmp.lt.s32.totalorder %s32, 1
      %s3009 = scalar_select %p3008, %s32, 1
      %s3010 = smul.addr %s3009, 2
      %s3011 = smul.addr %s3010, 8
      %s3012 = scalar_lea.vmem %s18, %s3011
      %p3013 = scmp.lt.s32.totalorder %s32, 1
      %s3014 = scalar_select %p3013, %s32, 1
      %s3015 = smul.addr %s3014, 2
      %s3016 = smul.addr %s3015, 8
      %s3017 = scalar_lea.vmem %s19, %s3016
      %p3018 = scmp.lt.s32.totalorder %s32, 1
      %s3019 = scalar_select %p3018, %s32, 1
      %s3020 = smul.addr %s3019, 4
      %s3021 = smul.addr %s3020, 8
      %s3022 = scalar_lea.vmem %s20, %s3021
      // Predicated region
      $region93: #{encoder_ms_forward.1} parent=91 // pred_check
        %p3023 = pneg %p433
      $region94: #{encoder_ms_forward.1} parent=91 // pred_check_branch
        %3025 = sbr.rel (%p3023) target = $region96
      $region95: #{encoder_ms_forward.1} parent=91 // pred_region
        _
      $region96: #{encoder_ms_forward.1} parent=91 // pred_fallthru
        _
      // Predicated region
      $region97: #{encoder_ms_forward.1} parent=91 // pred_check
        %p3026 = pneg %p459
      $region98: #{encoder_ms_forward.1} parent=91 // pred_check_branch
        %3028 = sbr.rel (%p3026) target = $region100
      $region99: #{encoder_ms_forward.1} parent=91 // pred_region
        _
      $region100: #{encoder_ms_forward.1} parent=91 // pred_fallthru
        _
      // Predicated region
      $region101: #{encoder_ms_forward.1} parent=91 // pred_check
        %p3029 = pneg %p485
      $region102: #{encoder_ms_forward.1} parent=91 // pred_check_branch
        %3031 = sbr.rel (%p3029) target = $region104
      $region103: #{encoder_ms_forward.1} parent=91 // pred_region
        _
      $region104: #{encoder_ms_forward.1} parent=91 // pred_fallthru
        _
    $region92: #{encoder_ms_forward.1} parent=5 // pred_fallthru
      _
    %p3032 = scmp.le.s32.totalorder 2, %s27
    // Predicated region
    $region105: #{encoder_ms_forward.1} parent=5 // pred_check
      %p3033 = pneg %p3032
    $region106: #{encoder_ms_forward.1} parent=5 // pred_check_branch
      %3035 = sbr.rel (%p3033) target = $region108
    $region107: #{encoder_ms_forward.1} parent=5 // pred_region
      %s3036 = ssub.s32 %s27, 2
      // Predicated region
      $region109: #{encoder_ms_forward.1} parent=107 // pred_check
        %p3037 = pneg %p439
      $region110: #{encoder_ms_forward.1} parent=107 // pred_check_branch
        %3039 = sbr.rel (%p3037) target = $region112
      $region111: #{encoder_ms_forward.1} parent=107 // pred_region
        %p3040 = scmp.lt.s32.totalorder %s33, 1
        %s3041 = scalar_select %p3040, %s33, 1
        %s3042 = smul.addr %s3041, 2
        %s3043 = smul.addr %s3042, 8
        %s3044 = scalar_lea.vmem %s18, %s3043
      $region112: #{encoder_ms_forward.1} parent=107 // pred_fallthru
        _
      // Predicated region
      $region113: #{encoder_ms_forward.1} parent=107 // pred_check
        %p3045 = pneg %p465
      $region114: #{encoder_ms_forward.1} parent=107 // pred_check_branch
        %3047 = sbr.rel (%p3045) target = $region116
      $region115: #{encoder_ms_forward.1} parent=107 // pred_region
        %p3048 = scmp.lt.s32.totalorder %s33, 1
        %s3049 = scalar_select %p3048, %s33, 1
        %s3050 = smul.addr %s3049, 2
        %s3051 = smul.addr %s3050, 8
        %s3052 = scalar_lea.vmem %s19, %s3051
      $region116: #{encoder_ms_forward.1} parent=107 // pred_fallthru
        _
      // Predicated region
      $region117: #{encoder_ms_forward.1} parent=107 // pred_check
        %p3053 = pneg %p491
      $region118: #{encoder_ms_forward.1} parent=107 // pred_check_branch
        %3055 = sbr.rel (%p3053) target = $region120
      $region119: #{encoder_ms_forward.1} parent=107 // pred_region
        %p3056 = scmp.lt.s32.totalorder %s33, 1
        %s3057 = scalar_select %p3056, %s33, 1
        %s3058 = smul.addr %s3057, 4
        %s3059 = smul.addr %s3058, 8
        %s3060 = scalar_lea.vmem %s20, %s3059
      $region120: #{encoder_ms_forward.1} parent=107 // pred_fallthru
        _
    $region108: #{encoder_ms_forward.1} parent=5 // pred_fallthru
      _
  $region6: #{encoder_ms_forward.1} parent=0 // loop_footer
    %s31 = sadd.s32 1, %s27
  $region7: #{encoder_ms_forward.1} parent=0 // loop_footer_branch
    %26 = sbr.rel target = $region3
  $region8: #{encoder_ms_forward.1} parent=0 // loop_exit
    _

</llo_original>
